<compile_context>
chip_gen: v5e
topology: v5e:2x2
jax: 0.10.0
libtpu: 0.0.40
codegen_flags: <defaults>
</compile_context>

<pallas_src>
import functools

import jax
import jax.numpy as jnp
from jax.experimental import pallas as pl
from jax.experimental.pallas import tpu as pltpu


def _round_up(x, m):
    return ((x + m - 1) // m) * m


_VMEM_LIMIT = 48 * 1024 * 1024


def _pick_tk(K, cap=2048):
    """Single K step when it fits; otherwise a 128-multiple divisor near cap."""
    Kp = _round_up(K, 128)
    if Kp <= cap:
        return Kp
    for t in range(cap, 127, -128):
        if Kp % t == 0:
            return t
    return cap


# -------------------- down GEMM: LeakyReLU(A) @ W, ReLU at finalize ----------

def _down_gemm_kernel(a_ref, w_ref, o_ref, acc_ref, *, negative_slope):
    @pl.when(pl.program_id(2) == 0)
    def _():
        acc_ref[...] = jnp.zeros_like(acc_ref)

    a = a_ref[...]                                    # bf16, no f32 round trip
    a = jnp.where(a > 0, a, a * negative_slope)       # LeakyReLU, exact on zeros
    acc_ref[...] += jnp.dot(a, w_ref[...], preferred_element_type=jnp.float32)

    @pl.when(pl.program_id(2) == pl.num_programs(2) - 1)
    def _():
        # up-path ReLU fused once in the epilogue (d is only consumed by uprelu)
        o_ref[...] = jnp.maximum(acc_ref[...], 0.0).astype(o_ref.dtype)


def down_gemm(a, w, *, negative_slope=0.2, tm=512, tn=512):
    M, K = a.shape
    K2, N = w.shape
    assert K == K2, (a.shape, w.shape)
    tm = min(tm, _round_up(M, 8))
    tn = min(tn, _round_up(N, 128))
    tk = _pick_tk(K)
    Mp, Kp, Np = _round_up(M, tm), _round_up(K, tk), _round_up(N, tn)

    a_p = jnp.pad(a, ((0, Mp - M), (0, Kp - K))).astype(jnp.bfloat16)
    w_p = jnp.pad(w, ((0, Kp - K), (0, Np - N))).astype(jnp.bfloat16)

    out = pl.pallas_call(
        functools.partial(_down_gemm_kernel, negative_slope=negative_slope),
        out_shape=jax.ShapeDtypeStruct((Mp, Np), jnp.bfloat16),
        grid_spec=pltpu.PrefetchScalarGridSpec(
            num_scalar_prefetch=0,
            grid=(Mp // tm, Np // tn, Kp // tk),
            in_specs=[pl.BlockSpec((tm, tk), lambda i, j, k: (i, k)),
                      pl.BlockSpec((tk, tn), lambda i, j, k: (k, j))],
            out_specs=pl.BlockSpec((tm, tn), lambda i, j, k: (i, j)),
            scratch_shapes=[pltpu.VMEM((tm, tn), jnp.float32)]),
        compiler_params=pltpu.CompilerParams(
            dimension_semantics=("parallel", "parallel", "arbitrary"),
            vmem_limit_bytes=_VMEM_LIMIT),
    )(a_p, w_p)
    if (Mp, Np) != (M, N):
        out = out[:M, :N]
    return out


# --------- up GEMM (sub-pixel transposed conv) with fused BN statistics ------
# Grid is (j, i, k) with j (output-column tiles) outermost so that, for a given
# j, all M tiles are contiguous and the per-column sum / sum-of-squares can be
# accumulated in a small VMEM scratch and emitted with the resident stats block.

def _up_gemm_stats_kernel(a_ref, w_ref, o_ref, stat_ref, acc_ref, stat_acc_ref):
    i = pl.program_id(1)
    k = pl.program_id(2)

    @pl.when(k == 0)
    def _():
        acc_ref[...] = jnp.zeros_like(acc_ref)

    @pl.when(jnp.logical_and(i == 0, k == 0))
    def _():
        stat_acc_ref[...] = jnp.zeros_like(stat_acc_ref)

    acc_ref[...] += jnp.dot(a_ref[...], w_ref[...],
                            preferred_element_type=jnp.float32)

    @pl.when(k == pl.num_programs(2) - 1)
    def _():
        acc = acc_ref[...]
        o_ref[...] = acc.astype(o_ref.dtype)
        stat_acc_ref[...] += jnp.concatenate(
            [jnp.sum(acc, axis=0, keepdims=True),
             jnp.sum(acc * acc, axis=0, keepdims=True)], axis=0)
        stat_ref[...] = stat_acc_ref[...]


def up_gemm_with_stats(a, w, *, tm=512, tn=512):
    M, K = a.shape
    K2, N = w.shape
    assert K == K2, (a.shape, w.shape)
    tm = min(tm, _round_up(M, 8))
    tn = min(tn, _round_up(N, 128))
    tk = _pick_tk(K)
    Mp, Kp, Np = _round_up(M, tm), _round_up(K, tk), _round_up(N, tn)

    a_p = jnp.pad(a, ((0, Mp - M), (0, Kp - K))).astype(jnp.bfloat16)
    w_p = jnp.pad(w, ((0, Kp - K), (0, Np - N))).astype(jnp.bfloat16)

    y, stats = pl.pallas_call(
        _up_gemm_stats_kernel,
        out_shape=(jax.ShapeDtypeStruct((Mp, Np), jnp.float32),
                   jax.ShapeDtypeStruct((2, Np), jnp.float32)),
        grid_spec=pltpu.PrefetchScalarGridSpec(
            num_scalar_prefetch=0,
            grid=(Np // tn, Mp // tm, Kp // tk),
            in_specs=[pl.BlockSpec((tm, tk), lambda j, i, k: (i, k)),
                      pl.BlockSpec((tk, tn), lambda j, i, k: (k, j))],
            out_specs=(pl.BlockSpec((tm, tn), lambda j, i, k: (i, j)),
                       pl.BlockSpec((2, tn), lambda j, i, k: (0, j))),
            scratch_shapes=[pltpu.VMEM((tm, tn), jnp.float32),
                            pltpu.VMEM((2, tn), jnp.float32)]),
        compiler_params=pltpu.CompilerParams(
            dimension_semantics=("parallel", "arbitrary", "arbitrary"),
            vmem_limit_bytes=_VMEM_LIMIT),
    )(a_p, w_p)
    return y, stats


# -------------------------- BN normalize (lane-dense) ------------------------

def _bn_norm_kernel(x_ref, ss_ref, o_ref):
    o_ref[...] = x_ref[...] * ss_ref[0:1, :] + ss_ref[1:2, :]


def bn_normalize(y_slab, ss_cols, *, tm=512):
    M0, Np = y_slab.shape
    tm = min(tm, _round_up(M0, 8))
    Mp = _round_up(M0, tm)
    y_p = jnp.pad(y_slab, ((0, Mp - M0), (0, 0))) if Mp != M0 else y_slab
    out = pl.pallas_call(
        _bn_norm_kernel,
        out_shape=jax.ShapeDtypeStruct((Mp, Np), jnp.float32),
        grid=(Mp // tm,),
        in_specs=[pl.BlockSpec((tm, Np), lambda i: (i, 0)),
                  pl.BlockSpec((2, Np), lambda i: (0, 0))],
        out_specs=pl.BlockSpec((tm, Np), lambda i: (i, 0)),
        compiler_params=pltpu.CompilerParams(
            dimension_semantics=("parallel",),
            vmem_limit_bytes=_VMEM_LIMIT),
    )(y_p, ss_cols)
    return out[:M0] if Mp != M0 else out


# --------------------------------- XLA glue -----------------------------------

def _im2col_stride2_pad1(x_nhwc, k=4):
    """Patches for Conv2d(kernel=4, stride=2, padding=1) on NHWC input."""
    N, H, W, C = x_nhwc.shape
    Ho, Wo = (H + 2 - k) // 2 + 1, (W + 2 - k) // 2 + 1
    xp = jnp.pad(x_nhwc, ((0, 0), (1, 1), (1, 1), (0, 0)))
    cols = [xp[:, kh:kh + 2 * Ho:2, kw:kw + 2 * Wo:2, :]
            for kh in range(k) for kw in range(k)]
    patches = jnp.concatenate(cols, axis=-1)               # (N, Ho, Wo, 16*C)
    return patches.reshape(N * Ho * Wo, k * k * C), (Ho, Wo)


def _subpixel_up_weight(w_up, inner_p, cout_p):
    """ConvTranspose2d(k4,s2,p1) weight -> (9*inner_p, 4*cout_p) sub-pixel GEMM.

    Output pixel (2*m + ph) reads d_pad row (m + dh) with transposed-conv tap kh
    (oh = 2*ih + kh - 1, d_pad row = ih + 1):
      ph=0: (dh=0,kh=3), (dh=1,kh=1)      ph=1: (dh=1,kh=2), (dh=2,kh=0)
    and the same mapping along width.  Unused (parity, tap) entries are zero.
    """
    inner_nc, outer_nc = w_up.shape[0], w_up.shape[1]
    taps = {0: ((0, 3), (1, 1)), 1: ((1, 2), (2, 0))}
    w = jnp.zeros((3, 3, inner_p, 2, 2, cout_p), w_up.dtype)
    for ph, hp in taps.items():
        for dh, kh in hp:
            for pw, wp in taps.items():
                for dw, kw in wp:
                    w = w.at[dh, dw, :inner_nc, ph, pw, :outer_nc].set(
                        w_up[:, :, kh, kw])
    return w.reshape(9 * inner_p, 4 * cout_p)


def unet_innermost_forward(x_nchw, w_down, w_up, eps=1e-5):
    """
    x_nchw : (N, input_nc, H, W)
    w_down : (inner_nc, input_nc, 4, 4)   PyTorch Conv2d weight (no bias)
    w_up   : (inner_nc, outer_nc, 4, 4)   PyTorch ConvTranspose2d weight (no bias)
    returns cat([x, upnorm(upconv(relu(downconv(leakyrelu(x)))))], channel)
    """
    kk = 4
    N, Cin, H, W = x_nchw.shape
    inner_nc = w_down.shape[0]
    outer_nc = w_up.shape[1]
    inner_p = _round_up(inner_nc, 128)     # lane-dense down output / up-K factor
    cout_p = _round_up(outer_nc, 128)      # lane-dense BN channels

    x = jnp.transpose(x_nchw, (0, 2, 3, 1))               # NHWC once

    # --- down: LeakyReLU -> Conv2d(4,s2,p1) as im2col + GEMM (uprelu fused) ---
    # TODO(synk): fold the im2col gather into the Pallas kernel via manual DMA.
    a_down, (Ho, Wo) = _im2col_stride2_pad1(x, kk)        # (M, 16*Cin)
    w_down_mat = jnp.transpose(w_down, (2, 3, 1, 0)).reshape(kk * kk * Cin, inner_nc)
    w_down_mat = jnp.pad(w_down_mat, ((0, 0), (0, inner_p - inner_nc)))
    d = down_gemm(a_down, w_down_mat)       # (M, inner_p) bf16 = relu(conv(lrelu(x)))

    # --- up: ConvTranspose2d(4,s2,p1) sub-pixel GEMM + fused BN stats ---------
    M = N * Ho * Wo
    d_sp = d.reshape(N, Ho, Wo, inner_p)
    d_pad = jnp.pad(d_sp, ((0, 0), (1, 1), (1, 1), (0, 0)))
    taps = [d_pad[:, dh:dh + Ho, dw:dw + Wo, :]
            for dh in range(3) for dw in range(3)]
    a_up = jnp.concatenate(taps, axis=-1).reshape(M, 9 * inner_p)   # bf16 patches

    w_sub = _subpixel_up_weight(w_up, inner_p, cout_p)    # (9*inner_p, 4*cout_p)
    y_slab, stats = up_gemm_with_stats(a_up, w_sub)       # (Mp, Np) f32, (2, Np)
    Np = y_slab.shape[1]

    # --- upnorm: BatchNorm2d(outer_nc), batch stats, gamma=1, beta=0 ----------
    # Columns are (parity, channel); sum the 4 parity groups per channel.
    # (Zero-padded rows / channels contribute 0 and are sliced off below.)
    cnt = jnp.float32(N * (2 * Ho) * (2 * Wo))
    s = stats[0, :4 * cout_p].reshape(4, cout_p).sum(axis=0)
    sq = stats[1, :4 * cout_p].reshape(4, cout_p).sum(axis=0)
    mean = s / cnt
    var = jnp.maximum(sq / cnt - mean * mean, 0.0)        # biased, like torch
    scale = jax.lax.rsqrt(var + eps)
    shift = -mean * scale
    ss_cols = jnp.stack([jnp.pad(jnp.tile(scale, 4), (0, Np - 4 * cout_p)),
                         jnp.pad(jnp.tile(shift, 4), (0, Np - 4 * cout_p))], axis=0)

    y_norm = bn_normalize(y_slab, ss_cols)[:M, :4 * cout_p]

    # depth-to-space: columns (ph, pw, c) -> output pixel (2*mh+ph, 2*mw+pw, c)
    y = y_norm.reshape(N, Ho, Wo, 2, 2, cout_p)
    y = y.transpose(0, 1, 3, 2, 4, 5).reshape(N, 2 * Ho, 2 * Wo, cout_p)
    y = y[..., :outer_nc]
    y_nchw = jnp.transpose(y, (0, 3, 1, 2))
    return jnp.concatenate([x_nchw, y_nchw], axis=1)      # cat([x, model(x)], 1)


# ------------------------------ pure-JAX reference -----------------------------

def _reference_forward(x, w_down, w_up, eps=1e-5):
    lrelu = jnp.where(x > 0, x, 0.2 * x)
    d = jax.lax.conv_general_dilated(
        lrelu, w_down, window_strides=(2, 2), padding=((1, 1), (1, 1)),
        dimension_numbers=("NCHW", "OIHW", "NCHW"),
        precision=jax.lax.Precision.HIGHEST)
    d = jnp.maximum(d, 0.0)
    w_t = jnp.flip(w_up, (2, 3)).transpose(1, 0, 2, 3)     # (outer, inner, kh, kw)
    y = jax.lax.conv_general_dilated(
        d, w_t, window_strides=(1, 1), padding=((2, 2), (2, 2)),
        lhs_dilation=(2, 2), dimension_numbers=("NCHW", "OIHW", "NCHW"),
        precision=jax.lax.Precision.HIGHEST)
    mean = y.mean(axis=(0, 2, 3), keepdims=True)
    var = y.var(axis=(0, 2, 3), keepdims=True)             # biased
    y = (y - mean) * jax.lax.rsqrt(var + eps)
    return jnp.concatenate([x, y], axis=1)


# ----------------------------------- main --------------------------------------

if __name__ == "__main__":
    N, input_nc, H, W = 2, 4, 16, 16
    inner_nc, outer_nc = 8, input_nc           # input_nc defaults to outer_nc

    key = jax.random.PRNGKey(0)
    kx, kd, ku = jax.random.split(key, 3)
    x = jax.random.normal(kx, (N, input_nc, H, W), jnp.float32)
    w_down = 0.05 * jax.random.normal(kd, (inner_nc, input_nc, 4, 4), jnp.float32)
    w_up = 0.05 * jax.random.normal(ku, (inner_nc, outer_nc, 4, 4), jnp.float32)

    out = jax.jit(unet_innermost_forward)(x, w_down, w_up)
    out = jax.block_until_ready(out)
    assert out.shape == (N, input_nc + outer_nc, H, W), out.shape
    assert bool(jnp.all(jnp.isfinite(out)))

    # numerical check vs a pure-JAX f32 reference (tolerance reflects bf16 MXU
    # operands in the Pallas path).
    ref = jax.block_until_ready(jax.jit(_reference_forward)(x, w_down, w_up))
    max_err = float(jnp.max(jnp.abs(out - ref)))
    assert jnp.allclose(out, ref, atol=1e-1, rtol=1e-1), max_err

    print("KERNEL_OK")
</pallas_src>

<mosaic_0001>
module attributes {stable_mosaic.version = 11 : i64} {
  func.func @_down_gemm_kernel(%arg0: i32, %arg1: i32, %arg2: i32, %arg3: memref<128x128xbf16, #tpu.memory_space<vmem>>, %arg4: memref<128x128xbf16, #tpu.memory_space<vmem>>, %arg5: memref<128x128xbf16, #tpu.memory_space<vmem>>, %arg6: memref<128x128xf32, #tpu.memory_space<vmem>>) attributes {dimension_semantics = [#tpu.dimension_semantics<parallel>, #tpu.dimension_semantics<parallel>, #tpu.dimension_semantics<arbitrary>], iteration_bounds = array<i64: 1, 1, 1>, scalar_prefetch = 0 : i64, scratch_operands = 1 : i64, tpu.core_type = #tpu.core_type<tc>, window_params = [{transform_indices = @transform_0, window_bounds = array<i64: 128, 128>}, {transform_indices = @transform_1, window_bounds = array<i64: 128, 128>}, {transform_indices = @transform_2, window_bounds = array<i64: 128, 128>}]} {
    %c0_i32 = arith.constant 0 : i32
    %0 = arith.cmpi eq, %arg2, %c0_i32 : i32
    %1 = arith.extui %0 : i1 to i32
    %c0_i32_0 = arith.constant 0 : i32
    %2 = arith.cmpi ne, %1, %c0_i32_0 : i32
    scf.if %2 {
      %cst_12 = arith.constant 0.000000e+00 : f32
      %17 = vector.broadcast %cst_12 : f32 to vector<128x128xf32>
      %c0_13 = arith.constant 0 : index
      %c0_14 = arith.constant 0 : index
      %18 = vector.load %arg6[%c0_13, %c0_14] : memref<128x128xf32, #tpu.memory_space<vmem>>, vector<128x128xf32>
      tpu.vector_store %arg6[%c0_13, %c0_14], %17 {strides = array<i32>} : memref<128x128xf32, #tpu.memory_space<vmem>>, vector<128x128xf32>,
    } else {
    }
    %c0 = arith.constant 0 : index
    %c0_1 = arith.constant 0 : index
    %3 = vector.load %arg3[%c0, %c0_1] : memref<128x128xbf16, #tpu.memory_space<vmem>>, vector<128x128xbf16>
    %cst = arith.constant 0.000000e+00 : bf16
    %4 = vector.broadcast %cst : bf16 to vector<128x128xbf16>
    %5 = arith.cmpf ogt, %3, %4 : vector<128x128xbf16>
    %cst_2 = arith.constant 2.001950e-01 : bf16
    %6 = vector.broadcast %cst_2 : bf16 to vector<128x128xbf16>
    %7 = arith.mulf %3, %6 : vector<128x128xbf16>
    %8 = arith.select %5, %3, %7 : vector<128x128xi1>, vector<128x128xbf16>
    %c0_3 = arith.constant 0 : index
    %c0_4 = arith.constant 0 : index
    %9 = vector.load %arg6[%c0_3, %c0_4] : memref<128x128xf32, #tpu.memory_space<vmem>>, vector<128x128xf32>
    %c0_5 = arith.constant 0 : index
    %c0_6 = arith.constant 0 : index
    %10 = vector.load %arg4[%c0_5, %c0_6] : memref<128x128xbf16, #tpu.memory_space<vmem>>, vector<128x128xbf16>
    %cst_7 = arith.constant dense<0.000000e+00> : vector<128x128xf32>
    %11 = tpu.matmul %8, %10, %cst_7 {dimension_numbers = #tpu.dot_dimension_numbers<[1], [0], [0], [1], [0, 0, 1, 1], [], []>} : vector<128x128xbf16>, vector<128x128xbf16>, vector<128x128xf32> -> vector<128x128xf32>
    %12 = arith.addf %9, %11 : vector<128x128xf32>
    %c0_8 = arith.constant 0 : index
    %c0_9 = arith.constant 0 : index
    %13 = vector.load %arg6[%c0_8, %c0_9] : memref<128x128xf32, #tpu.memory_space<vmem>>, vector<128x128xf32>
    tpu.vector_store %arg6[%c0_8, %c0_9], %12 {strides = array<i32>} : memref<128x128xf32, #tpu.memory_space<vmem>>, vector<128x128xf32>,
    %c0_i32_10 = arith.constant 0 : i32
    %14 = arith.cmpi eq, %arg2, %c0_i32_10 : i32
    %15 = arith.extui %14 : i1 to i32
    %c0_i32_11 = arith.constant 0 : i32
    %16 = arith.cmpi ne, %15, %c0_i32_11 : i32
    scf.if %16 {
      %c0_12 = arith.constant 0 : index
      %c0_13 = arith.constant 0 : index
      %17 = vector.load %arg6[%c0_12, %c0_13] : memref<128x128xf32, #tpu.memory_space<vmem>>, vector<128x128xf32>
      %cst_14 = arith.constant 0.000000e+00 : f32
      %18 = vector.broadcast %cst_14 : f32 to vector<128x128xf32>
      %19 = arith.maximumf %17, %18 : vector<128x128xf32>
      %20 = arith.truncf %19 : vector<128x128xf32> to vector<128x128xbf16>
      %c0_15 = arith.constant 0 : index
      %c0_16 = arith.constant 0 : index
      %21 = vector.load %arg5[%c0_15, %c0_16] : memref<128x128xbf16, #tpu.memory_space<vmem>>, vector<128x128xbf16>
      tpu.vector_store %arg5[%c0_15, %c0_16], %20 {strides = array<i32>} : memref<128x128xbf16, #tpu.memory_space<vmem>>, vector<128x128xbf16>,
    } else {
    }
    return
  }
  func.func @transform_0(%arg0: i32, %arg1: i32, %arg2: i32) -> (i32, i32) {
    %c0_i32 = arith.constant 0 : i32
    return %arg0, %arg2 : i32, i32
  }
  func.func @transform_1(%arg0: i32, %arg1: i32, %arg2: i32) -> (i32, i32) {
    %c0_i32 = arith.constant 0 : i32
    return %arg2, %arg1 : i32, i32
  }
  func.func @transform_2(%arg0: i32, %arg1: i32, %arg2: i32) -> (i32, i32) {
    %c0_i32 = arith.constant 0 : i32
    return %arg0, %arg1 : i32, i32
  }
}

module attributes {stable_mosaic.version = 11 : i64} {
  func.func @_up_gemm_stats_kernel(%arg0: i32, %arg1: i32, %arg2: i32, %arg3: memref<128x1152xbf16, #tpu.memory_space<vmem>>, %arg4: memref<1152x512xbf16, #tpu.memory_space<vmem>>, %arg5: memref<128x512xf32, #tpu.memory_space<vmem>>, %arg6: memref<2x512xf32, #tpu.memory_space<vmem>>, %arg7: memref<128x512xf32, #tpu.memory_space<vmem>>, %arg8: memref<2x512xf32, #tpu.memory_space<vmem>>) attributes {dimension_semantics = [#tpu.dimension_semantics<parallel>, #tpu.dimension_semantics<arbitrary>, #tpu.dimension_semantics<arbitrary>], iteration_bounds = array<i64: 1, 1, 1>, scalar_prefetch = 0 : i64, scratch_operands = 2 : i64, tpu.core_type = #tpu.core_type<tc>, window_params = [{transform_indices = @transform_0, window_bounds = array<i64: 128, 1152>}, {transform_indices = @transform_1, window_bounds = array<i64: 1152, 512>}, {transform_indices = @transform_2, window_bounds = array<i64: 128, 512>}, {transform_indices = @transform_3, window_bounds = array<i64: 2, 512>}]} {
    %c0_i32 = arith.constant 0 : i32
    %0 = arith.cmpi eq, %arg2, %c0_i32 : i32
    %1 = arith.extui %0 : i1 to i32
    %c0_i32_0 = arith.constant 0 : i32
    %2 = arith.cmpi ne, %1, %c0_i32_0 : i32
    scf.if %2 {
      %cst_13 = arith.constant 0.000000e+00 : f32
      %17 = vector.broadcast %cst_13 : f32 to vector<128x512xf32>
      %c0_14 = arith.constant 0 : index
      %c0_15 = arith.constant 0 : index
      %18 = vector.load %arg7[%c0_14, %c0_15] : memref<128x512xf32, #tpu.memory_space<vmem>>, vector<128x512xf32>
      tpu.vector_store %arg7[%c0_14, %c0_15], %17 {strides = array<i32>} : memref<128x512xf32, #tpu.memory_space<vmem>>, vector<128x512xf32>,
    } else {
    }
    %c0_i32_1 = arith.constant 0 : i32
    %3 = arith.cmpi eq, %arg1, %c0_i32_1 : i32
    %c0_i32_2 = arith.constant 0 : i32
    %4 = arith.cmpi eq, %arg2, %c0_i32_2 : i32
    %5 = arith.andi %3, %4 : i1
    %6 = arith.extui %5 : i1 to i32
    %c0_i32_3 = arith.constant 0 : i32
    %7 = arith.cmpi ne, %6, %c0_i32_3 : i32
    scf.if %7 {
      %cst_13 = arith.constant 0.000000e+00 : f32
      %17 = vector.broadcast %cst_13 : f32 to vector<2x512xf32>
      %c0_14 = arith.constant 0 : index
      %c0_15 = arith.constant 0 : index
      %18 = vector.load %arg8[%c0_14, %c0_15] : memref<2x512xf32, #tpu.memory_space<vmem>>, vector<2x512xf32>
      tpu.vector_store %arg8[%c0_14, %c0_15], %17 {strides = array<i32>} : memref<2x512xf32, #tpu.memory_space<vmem>>, vector<2x512xf32>,
    } else {
    }
    %c0 = arith.constant 0 : index
    %c0_4 = arith.constant 0 : index
    %8 = vector.load %arg7[%c0, %c0_4] : memref<128x512xf32, #tpu.memory_space<vmem>>, vector<128x512xf32>
    %c0_5 = arith.constant 0 : index
    %c0_6 = arith.constant 0 : index
    %9 = vector.load %arg3[%c0_5, %c0_6] : memref<128x1152xbf16, #tpu.memory_space<vmem>>, vector<128x1152xbf16>
    %c0_7 = arith.constant 0 : index
    %c0_8 = arith.constant 0 : index
    %10 = vector.load %arg4[%c0_7, %c0_8] : memref<1152x512xbf16, #tpu.memory_space<vmem>>, vector<1152x512xbf16>
    %cst = arith.constant dense<0.000000e+00> : vector<128x512xf32>
    %11 = tpu.matmul %9, %10, %cst {dimension_numbers = #tpu.dot_dimension_numbers<[1], [0], [0], [1], [0, 0, 1, 1], [], []>} : vector<128x1152xbf16>, vector<1152x512xbf16>, vector<128x512xf32> -> vector<128x512xf32>
    %12 = arith.addf %8, %11 : vector<128x512xf32>
    %c0_9 = arith.constant 0 : index
    %c0_10 = arith.constant 0 : index
    %13 = vector.load %arg7[%c0_9, %c0_10] : memref<128x512xf32, #tpu.memory_space<vmem>>, vector<128x512xf32>
    tpu.vector_store %arg7[%c0_9, %c0_10], %12 {strides = array<i32>} : memref<128x512xf32, #tpu.memory_space<vmem>>, vector<128x512xf32>,
    %c0_i32_11 = arith.constant 0 : i32
    %14 = arith.cmpi eq, %arg2, %c0_i32_11 : i32
    %15 = arith.extui %14 : i1 to i32
    %c0_i32_12 = arith.constant 0 : i32
    %16 = arith.cmpi ne, %15, %c0_i32_12 : i32
    scf.if %16 {
      %c0_13 = arith.constant 0 : index
      %c0_14 = arith.constant 0 : index
      %17 = vector.load %arg7[%c0_13, %c0_14] : memref<128x512xf32, #tpu.memory_space<vmem>>, vector<128x512xf32>
      %c0_15 = arith.constant 0 : index
      %c0_16 = arith.constant 0 : index
      %18 = vector.load %arg5[%c0_15, %c0_16] : memref<128x512xf32, #tpu.memory_space<vmem>>, vector<128x512xf32>
      tpu.vector_store %arg5[%c0_15, %c0_16], %17 {strides = array<i32>} : memref<128x512xf32, #tpu.memory_space<vmem>>, vector<128x512xf32>,
      %c0_17 = arith.constant 0 : index
      %c0_18 = arith.constant 0 : index
      %19 = vector.load %arg8[%c0_17, %c0_18] : memref<2x512xf32, #tpu.memory_space<vmem>>, vector<2x512xf32>
      %cst_19 = arith.constant dense<0.000000e+00> : vector<512xf32>
      %20 = vector.multi_reduction <add>, %17, %cst_19 [0] : vector<128x512xf32> to vector<512xf32>
      %21 = vector.shape_cast %20 : vector<512xf32> to vector<1x512xf32>
      %22 = arith.mulf %17, %17 : vector<128x512xf32>
      %cst_20 = arith.constant dense<0.000000e+00> : vector<512xf32>
      %23 = vector.multi_reduction <add>, %22, %cst_20 [0] : vector<128x512xf32> to vector<512xf32>
      %24 = vector.shape_cast %23 : vector<512xf32> to vector<1x512xf32>
      %25 = tpu.concatenate %21, %24 in 0 : vector<1x512xf32>, vector<1x512xf32> -> vector<2x512xf32>
      %26 = arith.addf %19, %25 : vector<2x512xf32>
      %c0_21 = arith.constant 0 : index
      %c0_22 = arith.constant 0 : index
      %27 = vector.load %arg8[%c0_21, %c0_22] : memref<2x512xf32, #tpu.memory_space<vmem>>, vector<2x512xf32>
      tpu.vector_store %arg8[%c0_21, %c0_22], %26 {strides = array<i32>} : memref<2x512xf32, #tpu.memory_space<vmem>>, vector<2x512xf32>,
      %c0_23 = arith.constant 0 : index
      %c0_24 = arith.constant 0 : index
      %28 = vector.load %arg8[%c0_23, %c0_24] : memref<2x512xf32, #tpu.memory_space<vmem>>, vector<2x512xf32>
      %c0_25 = arith.constant 0 : index
      %c0_26 = arith.constant 0 : index
      %29 = vector.load %arg6[%c0_25, %c0_26] : memref<2x512xf32, #tpu.memory_space<vmem>>, vector<2x512xf32>
      tpu.vector_store %arg6[%c0_25, %c0_26], %28 {strides = array<i32>} : memref<2x512xf32, #tpu.memory_space<vmem>>, vector<2x512xf32>,
    } else {
    }
    return
  }
  func.func @transform_0(%arg0: i32, %arg1: i32, %arg2: i32) -> (i32, i32) {
    %c0_i32 = arith.constant 0 : i32
    return %arg1, %arg2 : i32, i32
  }
  func.func @transform_1(%arg0: i32, %arg1: i32, %arg2: i32) -> (i32, i32) {
    %c0_i32 = arith.constant 0 : i32
    return %arg2, %arg0 : i32, i32
  }
  func.func @transform_2(%arg0: i32, %arg1: i32, %arg2: i32) -> (i32, i32) {
    %c0_i32 = arith.constant 0 : i32
    return %arg1, %arg0 : i32, i32
  }
  func.func @transform_3(%arg0: i32, %arg1: i32, %arg2: i32) -> (i32, i32) {
    %c0_i32 = arith.constant 0 : i32
    %c0_i32_0 = arith.constant 0 : i32
    return %c0_i32, %arg0 : i32, i32
  }
}

module attributes {stable_mosaic.version = 11 : i64} {
  func.func @_bn_norm_kernel(%arg0: i32, %arg1: memref<128x512xf32, #tpu.memory_space<vmem>>, %arg2: memref<2x512xf32, #tpu.memory_space<vmem>>, %arg3: memref<128x512xf32, #tpu.memory_space<vmem>>) attributes {dimension_semantics = [#tpu.dimension_semantics<parallel>], iteration_bounds = array<i64: 1>, scalar_prefetch = 0 : i64, scratch_operands = 0 : i64, tpu.core_type = #tpu.core_type<tc>, window_params = [{transform_indices = @transform_0, window_bounds = array<i64: 128, 512>}, {pipeline_mode = #tpu.pipeline_mode<synchronous>, transform_indices = @transform_1, window_bounds = array<i64: 2, 512>}, {transform_indices = @transform_2, window_bounds = array<i64: 128, 512>}]} {
    %c0 = arith.constant 0 : index
    %c0_0 = arith.constant 0 : index
    %0 = vector.load %arg1[%c0, %c0_0] : memref<128x512xf32, #tpu.memory_space<vmem>>, vector<128x512xf32>
    %c0_1 = arith.constant 0 : index
    %c0_2 = arith.constant 0 : index
    %1 = vector.load %arg2[%c0_1, %c0_2] : memref<2x512xf32, #tpu.memory_space<vmem>>, vector<1x512xf32>
    %2 = vector.broadcast %1 : vector<1x512xf32> to vector<128x512xf32>
    %3 = arith.mulf %0, %2 : vector<128x512xf32>
    %c1 = arith.constant 1 : index
    %c0_3 = arith.constant 0 : index
    %4 = vector.load %arg2[%c1, %c0_3] : memref<2x512xf32, #tpu.memory_space<vmem>>, vector<1x512xf32>
    %5 = vector.broadcast %4 : vector<1x512xf32> to vector<128x512xf32>
    %6 = arith.addf %3, %5 : vector<128x512xf32>
    %c0_4 = arith.constant 0 : index
    %c0_5 = arith.constant 0 : index
    %7 = vector.load %arg3[%c0_4, %c0_5] : memref<128x512xf32, #tpu.memory_space<vmem>>, vector<128x512xf32>
    tpu.vector_store %arg3[%c0_4, %c0_5], %6 {strides = array<i32>} : memref<128x512xf32, #tpu.memory_space<vmem>>, vector<128x512xf32>,
    return
  }
  func.func @transform_0(%arg0: i32) -> (i32, i32) {
    %c0_i32 = arith.constant 0 : i32
    %c0_i32_0 = arith.constant 0 : i32
    return %arg0, %c0_i32 : i32, i32
  }
  func.func @transform_1(%arg0: i32) -> (i32, i32) {
    %c0_i32 = arith.constant 0 : i32
    %c0_i32_0 = arith.constant 0 : i32
    %c0_i32_1 = arith.constant 0 : i32
    return %c0_i32, %c0_i32_0 : i32, i32
  }
  func.func @transform_2(%arg0: i32) -> (i32, i32) {
    %c0_i32 = arith.constant 0 : i32
    %c0_i32_0 = arith.constant 0 : i32
    return %arg0, %c0_i32 : i32, i32
  }
}

</mosaic_0001>

<llo_original>
// kernel: unet_innermost_forward.3
$region0: #{unet_innermost_forward.3}
  #allocation0 [shape = 'u32[]', space=smem, size = 0x4, offset = 0x4, fixed_abs, tag = 'smem constant byte address 0x4 - core index']
  #allocation1 [shape = 'u32[72,128]{1,0:T(1,128)}', space=vmem, size = 0x9000, scoped, tag = 'internal scratch']
  #allocation2 [shape = 'f32[128,128]{1,0:T(8,128)}', space=vmem, size = 0x10000, scoped, tag = 'scratch operand']
  %s0 = inlined_call_operand.vmem [shape: bf16[128,128], index: 0, kind: input, shape index: {}]
  %s1 = inlined_call_operand.vmem [shape: bf16[128,128], index: 1, kind: input, shape index: {}]
  %s2 = inlined_call_operand.vmem [shape: bf16[128,128], index: 2, kind: output, shape index: {}]
  %s3 = sld [smem:[#allocation0]]
  $region26: #{unet_innermost_forward.3} parent=0
    _
  %s5 = ssub.s32 1, %s3
  %s6 = scalar_select 0, %s5, %s3
  // Predicated region
  $region2: #{unet_innermost_forward.3} parent=0 // pred_check
    _
  $region3: #{unet_innermost_forward.3} parent=0 // pred_check_branch
    %8 = sbr.rel (0) target = $region5
  $region4: #{unet_innermost_forward.3} parent=0 // pred_region
    _
  $region5: #{unet_innermost_forward.3} parent=0 // pred_fallthru
    _
  // Predicated region
  $region6: #{unet_innermost_forward.3} parent=0 // pred_check
    _
  $region7: #{unet_innermost_forward.3} parent=0 // pred_check_branch
    %10 = sbr.rel (0) target = $region9
  $region8: #{unet_innermost_forward.3} parent=0 // pred_region
    _
  $region9: #{unet_innermost_forward.3} parent=0 // pred_fallthru
    _
  %p11 = scmp.eq.s32.totalorder 0, 0
  // Predicated region
  $region10: #{unet_innermost_forward.3} parent=0 // pred_check
    %p12 = pneg %p11
  $region11: #{unet_innermost_forward.3} parent=0 // pred_check_branch
    %14 = sbr.rel (%p12) target = $region13
  $region12: #{unet_innermost_forward.3} parent=0 // pred_region
    %15 = vst [vmem:[#allocation2] sm:$0xff] 0.0
    %16 = vst [vmem:[#allocation2 + $0x8] sm:$0xff] 0.0
    %17 = vst [vmem:[#allocation2 + $0x10] sm:$0xff] 0.0
    %18 = vst [vmem:[#allocation2 + $0x18] sm:$0xff] 0.0
    %19 = vst [vmem:[#allocation2 + $0x20] sm:$0xff] 0.0
    %20 = vst [vmem:[#allocation2 + $0x28] sm:$0xff] 0.0
    %21 = vst [vmem:[#allocation2 + $0x30] sm:$0xff] 0.0
    %22 = vst [vmem:[#allocation2 + $0x38] sm:$0xff] 0.0
    %23 = vst [vmem:[#allocation2 + $0x40] sm:$0xff] 0.0
    %24 = vst [vmem:[#allocation2 + $0x48] sm:$0xff] 0.0
    %25 = vst [vmem:[#allocation2 + $0x50] sm:$0xff] 0.0
    %26 = vst [vmem:[#allocation2 + $0x58] sm:$0xff] 0.0
    %27 = vst [vmem:[#allocation2 + $0x60] sm:$0xff] 0.0
    %28 = vst [vmem:[#allocation2 + $0x68] sm:$0xff] 0.0
    %29 = vst [vmem:[#allocation2 + $0x70] sm:$0xff] 0.0
    %30 = vst [vmem:[#allocation2 + $0x78] sm:$0xff] 0.0
  $region13: #{unet_innermost_forward.3} parent=0 // pred_fallthru
    _
  %v31 = vld [vmem:[%s0] sm:$0xf]
  %v32 = vld [vmem:[%s0 + $0x4] sm:$0xf]
  %v33 = vld [vmem:[%s0 + $0x8] sm:$0xf]
  %v34 = vld [vmem:[%s0 + $0xc] sm:$0xf]
  %v35 = vld [vmem:[%s0 + $0x10] sm:$0xf]
  %v36 = vld [vmem:[%s0 + $0x14] sm:$0xf]
  %v37 = vld [vmem:[%s0 + $0x18] sm:$0xf]
  %v38 = vld [vmem:[%s0 + $0x1c] sm:$0xf]
  %v39 = vld [vmem:[%s0 + $0x20] sm:$0xf]
  %v40 = vld [vmem:[%s0 + $0x24] sm:$0xf]
  %v41 = vld [vmem:[%s0 + $0x28] sm:$0xf]
  %v42 = vld [vmem:[%s0 + $0x2c] sm:$0xf]
  %v43 = vld [vmem:[%s0 + $0x30] sm:$0xf]
  %v44 = vld [vmem:[%s0 + $0x34] sm:$0xf]
  %v45 = vld [vmem:[%s0 + $0x38] sm:$0xf]
  %v46 = vld [vmem:[%s0 + $0x3c] sm:$0xf]
  %v47 = vunpack.c.l.bf16 %v31
  %v48 = vunpack.c.l.bf16 %v32
  %v49 = vunpack.c.l.bf16 %v33
  %v50 = vunpack.c.l.bf16 %v34
  %v51 = vunpack.c.l.bf16 %v35
  %v52 = vunpack.c.l.bf16 %v36
  %v53 = vunpack.c.l.bf16 %v37
  %v54 = vunpack.c.l.bf16 %v38
  %v55 = vunpack.c.l.bf16 %v39
  %v56 = vunpack.c.l.bf16 %v40
  %v57 = vunpack.c.l.bf16 %v41
  %v58 = vunpack.c.l.bf16 %v42
  %v59 = vunpack.c.l.bf16 %v43
  %v60 = vunpack.c.l.bf16 %v44
  %v61 = vunpack.c.l.bf16 %v45
  %v62 = vunpack.c.l.bf16 %v46
  %vm63 = vcmp.gt.f32.partialorder %v47, 0.0
  %vm64 = vcmp.gt.f32.partialorder %v48, 0.0
  %vm65 = vcmp.gt.f32.partialorder %v49, 0.0
  %vm66 = vcmp.gt.f32.partialorder %v50, 0.0
  %vm67 = vcmp.gt.f32.partialorder %v51, 0.0
  %vm68 = vcmp.gt.f32.partialorder %v52, 0.0
  %vm69 = vcmp.gt.f32.partialorder %v53, 0.0
  %vm70 = vcmp.gt.f32.partialorder %v54, 0.0
  %vm71 = vcmp.gt.f32.partialorder %v55, 0.0
  %vm72 = vcmp.gt.f32.partialorder %v56, 0.0
  %vm73 = vcmp.gt.f32.partialorder %v57, 0.0
  %vm74 = vcmp.gt.f32.partialorder %v58, 0.0
  %vm75 = vcmp.gt.f32.partialorder %v59, 0.0
  %vm76 = vcmp.gt.f32.partialorder %v60, 0.0
  %vm77 = vcmp.gt.f32.partialorder %v61, 0.0
  %vm78 = vcmp.gt.f32.partialorder %v62, 0.0
  %v79 = vmul.f32 %v47, 0.20019531
  %v80 = vmul.f32 %v48, 0.20019531
  %v81 = vmul.f32 %v49, 0.20019531
  %v82 = vmul.f32 %v50, 0.20019531
  %v83 = vmul.f32 %v51, 0.20019531
  %v84 = vmul.f32 %v52, 0.20019531
  %v85 = vmul.f32 %v53, 0.20019531
  %v86 = vmul.f32 %v54, 0.20019531
  %v87 = vmul.f32 %v55, 0.20019531
  %v88 = vmul.f32 %v56, 0.20019531
  %v89 = vmul.f32 %v57, 0.20019531
  %v90 = vmul.f32 %v58, 0.20019531
  %v91 = vmul.f32 %v59, 0.20019531
  %v92 = vmul.f32 %v60, 0.20019531
  %v93 = vmul.f32 %v61, 0.20019531
  %v94 = vmul.f32 %v62, 0.20019531
  %v95 = vpack.c.bf16 %v79, %v79
  %v96 = vpack.c.bf16 %v80, %v80
  %v97 = vpack.c.bf16 %v81, %v81
  %v98 = vpack.c.bf16 %v82, %v82
  %v99 = vpack.c.bf16 %v83, %v83
  %v100 = vpack.c.bf16 %v84, %v84
  %v101 = vpack.c.bf16 %v85, %v85
  %v102 = vpack.c.bf16 %v86, %v86
  %v103 = vpack.c.bf16 %v87, %v87
  %v104 = vpack.c.bf16 %v88, %v88
  %v105 = vpack.c.bf16 %v89, %v89
  %v106 = vpack.c.bf16 %v90, %v90
  %v107 = vpack.c.bf16 %v91, %v91
  %v108 = vpack.c.bf16 %v92, %v92
  %v109 = vpack.c.bf16 %v93, %v93
  %v110 = vpack.c.bf16 %v94, %v94
  %vm111 = vmpackc.low %vm63, %vm63
  %vm112 = vmpackc.low %vm64, %vm64
  %vm113 = vmpackc.low %vm65, %vm65
  %vm114 = vmpackc.low %vm66, %vm66
  %vm115 = vmpackc.low %vm67, %vm67
  %vm116 = vmpackc.low %vm68, %vm68
  %vm117 = vmpackc.low %vm69, %vm69
  %vm118 = vmpackc.low %vm70, %vm70
  %vm119 = vmpackc.low %vm71, %vm71
  %vm120 = vmpackc.low %vm72, %vm72
  %vm121 = vmpackc.low %vm73, %vm73
  %vm122 = vmpackc.low %vm74, %vm74
  %vm123 = vmpackc.low %vm75, %vm75
  %vm124 = vmpackc.low %vm76, %vm76
  %vm125 = vmpackc.low %vm77, %vm77
  %vm126 = vmpackc.low %vm78, %vm78
  %v127 = vsel %vm111, %v31, %v95
  %v128 = vsel %vm112, %v32, %v96
  %v129 = vsel %vm113, %v33, %v97
  %v130 = vsel %vm114, %v34, %v98
  %v131 = vsel %vm115, %v35, %v99
  %v132 = vsel %vm116, %v36, %v100
  %v133 = vsel %vm117, %v37, %v101
  %v134 = vsel %vm118, %v38, %v102
  %v135 = vsel %vm119, %v39, %v103
  %v136 = vsel %vm120, %v40, %v104
  %v137 = vsel %vm121, %v41, %v105
  %v138 = vsel %vm122, %v42, %v106
  %v139 = vsel %vm123, %v43, %v107
  %v140 = vsel %vm124, %v44, %v108
  %v141 = vsel %vm125, %v45, %v109
  %v142 = vsel %vm126, %v46, %v110
  %v143 = vld [vmem:[#allocation2] sm:$0xff]
  %v144 = vld [vmem:[#allocation2 + $0x8] sm:$0xff]
  %v145 = vld [vmem:[#allocation2 + $0x10] sm:$0xff]
  %v146 = vld [vmem:[#allocation2 + $0x18] sm:$0xff]
  %v147 = vld [vmem:[#allocation2 + $0x20] sm:$0xff]
  %v148 = vld [vmem:[#allocation2 + $0x28] sm:$0xff]
  %v149 = vld [vmem:[#allocation2 + $0x30] sm:$0xff]
  %v150 = vld [vmem:[#allocation2 + $0x38] sm:$0xff]
  %v151 = vld [vmem:[#allocation2 + $0x40] sm:$0xff]
  %v152 = vld [vmem:[#allocation2 + $0x48] sm:$0xff]
  %v153 = vld [vmem:[#allocation2 + $0x50] sm:$0xff]
  %v154 = vld [vmem:[#allocation2 + $0x58] sm:$0xff]
  %v155 = vld [vmem:[#allocation2 + $0x60] sm:$0xff]
  %v156 = vld [vmem:[#allocation2 + $0x68] sm:$0xff]
  %v157 = vld [vmem:[#allocation2 + $0x70] sm:$0xff]
  %v158 = vld [vmem:[#allocation2 + $0x78] sm:$0xff]
  %v159 = vld [vmem:[%s1] sm:$0xf]
  %v160 = vld [vmem:[%s1 + $0x4] sm:$0xf]
  %v161 = vld [vmem:[%s1 + $0x8] sm:$0xf]
  %v162 = vld [vmem:[%s1 + $0xc] sm:$0xf]
  %v163 = vld [vmem:[%s1 + $0x10] sm:$0xf]
  %v164 = vld [vmem:[%s1 + $0x14] sm:$0xf]
  %v165 = vld [vmem:[%s1 + $0x18] sm:$0xf]
  %v166 = vld [vmem:[%s1 + $0x1c] sm:$0xf]
  %v167 = vld [vmem:[%s1 + $0x20] sm:$0xf]
  %v168 = vld [vmem:[%s1 + $0x24] sm:$0xf]
  %v169 = vld [vmem:[%s1 + $0x28] sm:$0xf]
  %v170 = vld [vmem:[%s1 + $0x2c] sm:$0xf]
  %v171 = vld [vmem:[%s1 + $0x30] sm:$0xf]
  %v172 = vld [vmem:[%s1 + $0x34] sm:$0xf]
  %v173 = vld [vmem:[%s1 + $0x38] sm:$0xf]
  %v174 = vld [vmem:[%s1 + $0x3c] sm:$0xf]
  %v191 = vunpack.c.l.b16 %v127
  %v192 = vunpack.c.l.b16 %v128
  %v193 = vunpack.c.l.b16 %v129
  %v194 = vunpack.c.l.b16 %v130
  %v195 = vunpack.c.l.b16 %v131
  %v196 = vunpack.c.l.b16 %v132
  %v197 = vunpack.c.l.b16 %v133
  %v198 = vunpack.c.l.b16 %v134
  %v199 = vunpack.c.l.b16 %v135
  %v200 = vunpack.c.l.b16 %v136
  %v201 = vunpack.c.l.b16 %v137
  %v202 = vunpack.c.l.b16 %v138
  %v203 = vunpack.c.l.b16 %v139
  %v204 = vunpack.c.l.b16 %v140
  %v205 = vunpack.c.l.b16 %v141
  %v206 = vunpack.c.l.b16 %v142
  %v207 = vpack.c.b16 %v192, %v191
  %v208 = vpack.c.b16 %v194, %v193
  %v209 = vpack.c.b16 %v196, %v195
  %v210 = vpack.c.b16 %v198, %v197
  %v211 = vpack.c.b16 %v200, %v199
  %v212 = vpack.c.b16 %v202, %v201
  %v213 = vpack.c.b16 %v204, %v203
  %v214 = vpack.c.b16 %v206, %v205
  %v239 = vunpack.c.l.b16 %v159
  %v240 = vunpack.c.l.b16 %v160
  %v241 = vunpack.c.l.b16 %v161
  %v242 = vunpack.c.l.b16 %v162
  %v243 = vunpack.c.l.b16 %v163
  %v244 = vunpack.c.l.b16 %v164
  %v245 = vunpack.c.l.b16 %v165
  %v246 = vunpack.c.l.b16 %v166
  %v247 = vunpack.c.l.b16 %v167
  %v248 = vunpack.c.l.b16 %v168
  %v249 = vunpack.c.l.b16 %v169
  %v250 = vunpack.c.l.b16 %v170
  %v251 = vunpack.c.l.b16 %v171
  %v252 = vunpack.c.l.b16 %v172
  %v253 = vunpack.c.l.b16 %v173
  %v254 = vunpack.c.l.b16 %v174
  %v255 = vpack.c.b16 %v240, %v239
  %v256 = vpack.c.b16 %v242, %v241
  %v257 = vpack.c.b16 %v244, %v243
  %v258 = vpack.c.b16 %v246, %v245
  %v259 = vpack.c.b16 %v248, %v247
  %v260 = vpack.c.b16 %v250, %v249
  %v261 = vpack.c.b16 %v252, %v251
  %v262 = vpack.c.b16 %v254, %v253
  %271 = vmatpush.bf16.msra.mxu0 %v262
  %272 = vmatpush.bf16.msra.mxu0 %v261
  %273 = vmatpush.bf16.msra.mxu0 %v260
  %274 = vmatpush.bf16.msra.mxu0 %v259
  %275 = vmatpush.bf16.msra.mxu0 %v258
  %276 = vmatpush.bf16.msra.mxu0 %v257
  %277 = vmatpush.bf16.msra.mxu0 %v256
  %278 = vmatpush.bf16.msra.mxu0 %v255
  %279 = vmatmul.bf16.gmra.mxu0 %v207
  %v280 = vpop.f32.mrf.mxu0
  %v281 = vadd.f32 0.0, %v280
  %v282 = vpop.f32.mrf.mxu0
  %v283 = vadd.f32 0.0, %v282
  %284 = vmatmul.bf16.gmra.mxu0 %v208
  %v285 = vpop.f32.mrf.mxu0
  %v286 = vadd.f32 0.0, %v285
  %v287 = vpop.f32.mrf.mxu0
  %v288 = vadd.f32 0.0, %v287
  %289 = vmatmul.bf16.gmra.mxu0 %v209
  %v290 = vpop.f32.mrf.mxu0
  %v291 = vadd.f32 0.0, %v290
  %v292 = vpop.f32.mrf.mxu0
  %v293 = vadd.f32 0.0, %v292
  %294 = vmatmul.bf16.gmra.mxu0 %v210
  %v295 = vpop.f32.mrf.mxu0
  %v296 = vadd.f32 0.0, %v295
  %v297 = vpop.f32.mrf.mxu0
  %v298 = vadd.f32 0.0, %v297
  %299 = vmatmul.bf16.gmra.mxu0 %v211
  %v300 = vpop.f32.mrf.mxu0
  %v301 = vadd.f32 0.0, %v300
  %v302 = vpop.f32.mrf.mxu0
  %v303 = vadd.f32 0.0, %v302
  %304 = vmatmul.bf16.gmra.mxu0 %v212
  %v305 = vpop.f32.mrf.mxu0
  %v306 = vadd.f32 0.0, %v305
  %v307 = vpop.f32.mrf.mxu0
  %v308 = vadd.f32 0.0, %v307
  %309 = vmatmul.bf16.gmra.mxu0 %v213
  %v310 = vpop.f32.mrf.mxu0
  %v311 = vadd.f32 0.0, %v310
  %v312 = vpop.f32.mrf.mxu0
  %v313 = vadd.f32 0.0, %v312
  %314 = vmatmul.bf16.gmra.mxu0 %v214
  %v315 = vpop.f32.mrf.mxu0
  %v316 = vadd.f32 0.0, %v315
  %v317 = vpop.f32.mrf.mxu0
  %v318 = vadd.f32 0.0, %v317
  %319 = vdwg.mxu0
  %v320 = vadd.f32 %v143, %v281
  %v321 = vadd.f32 %v144, %v283
  %v322 = vadd.f32 %v145, %v286
  %v323 = vadd.f32 %v146, %v288
  %v324 = vadd.f32 %v147, %v291
  %v325 = vadd.f32 %v148, %v293
  %v326 = vadd.f32 %v149, %v296
  %v327 = vadd.f32 %v150, %v298
  %v328 = vadd.f32 %v151, %v301
  %v329 = vadd.f32 %v152, %v303
  %v330 = vadd.f32 %v153, %v306
  %v331 = vadd.f32 %v154, %v308
  %v332 = vadd.f32 %v155, %v311
  %v333 = vadd.f32 %v156, %v313
  %v334 = vadd.f32 %v157, %v316
  %v335 = vadd.f32 %v158, %v318
  %336 = vst [vmem:[#allocation2] sm:$0xff] %v320
  %337 = vst [vmem:[#allocation2 + $0x8] sm:$0xff] %v321
  %338 = vst [vmem:[#allocation2 + $0x10] sm:$0xff] %v322
  %339 = vst [vmem:[#allocation2 + $0x18] sm:$0xff] %v323
  %340 = vst [vmem:[#allocation2 + $0x20] sm:$0xff] %v324
  %341 = vst [vmem:[#allocation2 + $0x28] sm:$0xff] %v325
  %342 = vst [vmem:[#allocation2 + $0x30] sm:$0xff] %v326
  %343 = vst [vmem:[#allocation2 + $0x38] sm:$0xff] %v327
  %344 = vst [vmem:[#allocation2 + $0x40] sm:$0xff] %v328
  %345 = vst [vmem:[#allocation2 + $0x48] sm:$0xff] %v329
  %346 = vst [vmem:[#allocation2 + $0x50] sm:$0xff] %v330
  %347 = vst [vmem:[#allocation2 + $0x58] sm:$0xff] %v331
  %348 = vst [vmem:[#allocation2 + $0x60] sm:$0xff] %v332
  %349 = vst [vmem:[#allocation2 + $0x68] sm:$0xff] %v333
  %350 = vst [vmem:[#allocation2 + $0x70] sm:$0xff] %v334
  %351 = vst [vmem:[#allocation2 + $0x78] sm:$0xff] %v335
  // Predicated region
  $region14: #{unet_innermost_forward.3} parent=0 // pred_check
    %p352 = pneg %p11
  $region15: #{unet_innermost_forward.3} parent=0 // pred_check_branch
    %354 = sbr.rel (%p352) target = $region17
  $region16: #{unet_innermost_forward.3} parent=0 // pred_region
    %v355 = vld [vmem:[#allocation2] sm:$0xff]
    %v356 = vld [vmem:[#allocation2 + $0x8] sm:$0xff]
    %v357 = vld [vmem:[#allocation2 + $0x10] sm:$0xff]
    %v358 = vld [vmem:[#allocation2 + $0x18] sm:$0xff]
    %v359 = vld [vmem:[#allocation2 + $0x20] sm:$0xff]
    %v360 = vld [vmem:[#allocation2 + $0x28] sm:$0xff]
    %v361 = vld [vmem:[#allocation2 + $0x30] sm:$0xff]
    %v362 = vld [vmem:[#allocation2 + $0x38] sm:$0xff]
    %v363 = vld [vmem:[#allocation2 + $0x40] sm:$0xff]
    %v364 = vld [vmem:[#allocation2 + $0x48] sm:$0xff]
    %v365 = vld [vmem:[#allocation2 + $0x50] sm:$0xff]
    %v366 = vld [vmem:[#allocation2 + $0x58] sm:$0xff]
    %v367 = vld [vmem:[#allocation2 + $0x60] sm:$0xff]
    %v368 = vld [vmem:[#allocation2 + $0x68] sm:$0xff]
    %v369 = vld [vmem:[#allocation2 + $0x70] sm:$0xff]
    %v370 = vld [vmem:[#allocation2 + $0x78] sm:$0xff]
    %v371 = vmax.f32 %v355, 0.0
    %v372 = vmax.f32 %v356, 0.0
    %v373 = vmax.f32 %v357, 0.0
    %v374 = vmax.f32 %v358, 0.0
    %v375 = vmax.f32 %v359, 0.0
    %v376 = vmax.f32 %v360, 0.0
    %v377 = vmax.f32 %v361, 0.0
    %v378 = vmax.f32 %v362, 0.0
    %v379 = vmax.f32 %v363, 0.0
    %v380 = vmax.f32 %v364, 0.0
    %v381 = vmax.f32 %v365, 0.0
    %v382 = vmax.f32 %v366, 0.0
    %v383 = vmax.f32 %v367, 0.0
    %v384 = vmax.f32 %v368, 0.0
    %v385 = vmax.f32 %v369, 0.0
    %v386 = vmax.f32 %v370, 0.0
    %v387 = vpack.c.bf16 %v371, %v371
    %v388 = vpack.c.bf16 %v372, %v372
    %v389 = vpack.c.bf16 %v373, %v373
    %v390 = vpack.c.bf16 %v374, %v374
    %v391 = vpack.c.bf16 %v375, %v375
    %v392 = vpack.c.bf16 %v376, %v376
    %v393 = vpack.c.bf16 %v377, %v377
    %v394 = vpack.c.bf16 %v378, %v378
    %v395 = vpack.c.bf16 %v379, %v379
    %v396 = vpack.c.bf16 %v380, %v380
    %v397 = vpack.c.bf16 %v381, %v381
    %v398 = vpack.c.bf16 %v382, %v382
    %v399 = vpack.c.bf16 %v383, %v383
    %v400 = vpack.c.bf16 %v384, %v384
    %v401 = vpack.c.bf16 %v385, %v385
    %v402 = vpack.c.bf16 %v386, %v386
    %403 = vst [vmem:[%s2] sm:$0xf] %v387
    %404 = vst [vmem:[%s2 + $0x4] sm:$0xf] %v388
    %405 = vst [vmem:[%s2 + $0x8] sm:$0xf] %v389
    %406 = vst [vmem:[%s2 + $0xc] sm:$0xf] %v390
    %407 = vst [vmem:[%s2 + $0x10] sm:$0xf] %v391
    %408 = vst [vmem:[%s2 + $0x14] sm:$0xf] %v392
    %409 = vst [vmem:[%s2 + $0x18] sm:$0xf] %v393
    %410 = vst [vmem:[%s2 + $0x1c] sm:$0xf] %v394
    %411 = vst [vmem:[%s2 + $0x20] sm:$0xf] %v395
    %412 = vst [vmem:[%s2 + $0x24] sm:$0xf] %v396
    %413 = vst [vmem:[%s2 + $0x28] sm:$0xf] %v397
    %414 = vst [vmem:[%s2 + $0x2c] sm:$0xf] %v398
    %415 = vst [vmem:[%s2 + $0x30] sm:$0xf] %v399
    %416 = vst [vmem:[%s2 + $0x34] sm:$0xf] %v400
    %417 = vst [vmem:[%s2 + $0x38] sm:$0xf] %v401
    %418 = vst [vmem:[%s2 + $0x3c] sm:$0xf] %v402
  $region17: #{unet_innermost_forward.3} parent=0 // pred_fallthru
    _
  // Predicated region
  $region18: #{unet_innermost_forward.3} parent=0 // pred_check
    _
  $region19: #{unet_innermost_forward.3} parent=0 // pred_check_branch
    %420 = sbr.rel (0) target = $region21
  $region20: #{unet_innermost_forward.3} parent=0 // pred_region
    _
  $region21: #{unet_innermost_forward.3} parent=0 // pred_fallthru
    _
  // Predicated region
  $region22: #{unet_innermost_forward.3} parent=0 // pred_check
    _
  $region23: #{unet_innermost_forward.3} parent=0 // pred_check_branch
    %422 = sbr.rel (0) target = $region25
  $region24: #{unet_innermost_forward.3} parent=0 // pred_region
    _
  $region25: #{unet_innermost_forward.3} parent=0 // pred_fallthru
    _

// kernel: tile.13
$region0: #{tile.13}
  #allocation0 [shape = 's32[1]{0}', space=sflag, size = 0x4, scoped, tag = 'scoped memory for tile.13']
  %s0 = inlined_call_operand.vmem [shape: f32[128], index: 0, kind: input, shape index: {}]
  %s1 = inlined_call_operand.vmem [shape: f32[4,128], index: 1, kind: output, shape index: {}]
  // Predicated region
  $region2: #{tile.13} parent=0 // pred_check
    _
  $region3: #{tile.13} parent=0 // pred_check_branch
    %3 = sbr.rel (0) target = $region5
  $region4: #{tile.13} parent=0 // pred_region
    _
  $region5: #{tile.13} parent=0 // pred_fallthru
    _
  %v4 = vld [vmem:[%s0] ss:$0 sm:$0xff]
  %5 = vst [vmem:[%s1] sm:$0xf] %v4

// kernel: unet_innermost_forward.5
$region0: #{unet_innermost_forward.5}
  #allocation0 [shape = 'u32[]', space=smem, size = 0x4, offset = 0x4, fixed_abs, tag = 'smem constant byte address 0x4 - core index']
  #allocation1 [shape = 'u32[72,128]{1,0:T(1,128)}', space=vmem, size = 0x9000, scoped, tag = 'internal scratch']
  %s0 = inlined_call_operand.vmem [shape: f32[128,512], index: 0, kind: input, shape index: {}]
  %s1 = inlined_call_operand.vmem [shape: f32[2,512], index: 1, kind: input, shape index: {}]
  %s2 = inlined_call_operand.vmem [shape: f32[128,512], index: 2, kind: output, shape index: {}]
  %s3 = sld [smem:[#allocation0]]
  $region18: #{unet_innermost_forward.5} parent=0
    _
  %s5 = ssub.s32 1, %s3
  %s6 = scalar_select 0, %s5, %s3
  // Predicated region
  $region2: #{unet_innermost_forward.5} parent=0 // pred_check
    _
  $region3: #{unet_innermost_forward.5} parent=0 // pred_check_branch
    %8 = sbr.rel (0) target = $region5
  $region4: #{unet_innermost_forward.5} parent=0 // pred_region
    _
  $region5: #{unet_innermost_forward.5} parent=0 // pred_fallthru
    _
  // Predicated region
  $region6: #{unet_innermost_forward.5} parent=0 // pred_check
    _
  $region7: #{unet_innermost_forward.5} parent=0 // pred_check_branch
    %10 = sbr.rel (0) target = $region9
  $region8: #{unet_innermost_forward.5} parent=0 // pred_region
    _
  $region9: #{unet_innermost_forward.5} parent=0 // pred_fallthru
    _
  %v11 = vld [vmem:[%s0] sm:$0xff]
  %v12 = vld [vmem:[%s0 + $0x8] sm:$0xff]
  %v13 = vld [vmem:[%s0 + $0x10] sm:$0xff]
  %v14 = vld [vmem:[%s0 + $0x18] sm:$0xff]
  %v15 = vld [vmem:[%s0 + $0x20] sm:$0xff]
  %v16 = vld [vmem:[%s0 + $0x28] sm:$0xff]
  %v17 = vld [vmem:[%s0 + $0x30] sm:$0xff]
  %v18 = vld [vmem:[%s0 + $0x38] sm:$0xff]
  %v19 = vld [vmem:[%s0 + $0x40] sm:$0xff]
  %v20 = vld [vmem:[%s0 + $0x48] sm:$0xff]
  %v21 = vld [vmem:[%s0 + $0x50] sm:$0xff]
  %v22 = vld [vmem:[%s0 + $0x58] sm:$0xff]
  %v23 = vld [vmem:[%s0 + $0x60] sm:$0xff]
  %v24 = vld [vmem:[%s0 + $0x68] sm:$0xff]
  %v25 = vld [vmem:[%s0 + $0x70] sm:$0xff]
  %v26 = vld [vmem:[%s0 + $0x78] sm:$0xff]
  %v27 = vld [vmem:[%s0 + $0x80] sm:$0xff]
  %v28 = vld [vmem:[%s0 + $0x88] sm:$0xff]
  %v29 = vld [vmem:[%s0 + $0x90] sm:$0xff]
  %v30 = vld [vmem:[%s0 + $0x98] sm:$0xff]
  %v31 = vld [vmem:[%s0 + $0xa0] sm:$0xff]
  %v32 = vld [vmem:[%s0 + $0xa8] sm:$0xff]
  %v33 = vld [vmem:[%s0 + $0xb0] sm:$0xff]
  %v34 = vld [vmem:[%s0 + $0xb8] sm:$0xff]
  %v35 = vld [vmem:[%s0 + $0xc0] sm:$0xff]
  %v36 = vld [vmem:[%s0 + $0xc8] sm:$0xff]
  %v37 = vld [vmem:[%s0 + $0xd0] sm:$0xff]
  %v38 = vld [vmem:[%s0 + $0xd8] sm:$0xff]
  %v39 = vld [vmem:[%s0 + $0xe0] sm:$0xff]
  %v40 = vld [vmem:[%s0 + $0xe8] sm:$0xff]
  %v41 = vld [vmem:[%s0 + $0xf0] sm:$0xff]
  %v42 = vld [vmem:[%s0 + $0xf8] sm:$0xff]
  %v43 = vld [vmem:[%s0 + $0x100] sm:$0xff]
  %v44 = vld [vmem:[%s0 + $0x108] sm:$0xff]
  %v45 = vld [vmem:[%s0 + $0x110] sm:$0xff]
  %v46 = vld [vmem:[%s0 + $0x118] sm:$0xff]
  %v47 = vld [vmem:[%s0 + $0x120] sm:$0xff]
  %v48 = vld [vmem:[%s0 + $0x128] sm:$0xff]
  %v49 = vld [vmem:[%s0 + $0x130] sm:$0xff]
  %v50 = vld [vmem:[%s0 + $0x138] sm:$0xff]
  %v51 = vld [vmem:[%s0 + $0x140] sm:$0xff]
  %v52 = vld [vmem:[%s0 + $0x148] sm:$0xff]
  %v53 = vld [vmem:[%s0 + $0x150] sm:$0xff]
  %v54 = vld [vmem:[%s0 + $0x158] sm:$0xff]
  %v55 = vld [vmem:[%s0 + $0x160] sm:$0xff]
  %v56 = vld [vmem:[%s0 + $0x168] sm:$0xff]
  %v57 = vld [vmem:[%s0 + $0x170] sm:$0xff]
  %v58 = vld [vmem:[%s0 + $0x178] sm:$0xff]
  %v59 = vld [vmem:[%s0 + $0x180] sm:$0xff]
  %v60 = vld [vmem:[%s0 + $0x188] sm:$0xff]
  %v61 = vld [vmem:[%s0 + $0x190] sm:$0xff]
  %v62 = vld [vmem:[%s0 + $0x198] sm:$0xff]
  %v63 = vld [vmem:[%s0 + $0x1a0] sm:$0xff]
  %v64 = vld [vmem:[%s0 + $0x1a8] sm:$0xff]
  %v65 = vld [vmem:[%s0 + $0x1b0] sm:$0xff]
  %v66 = vld [vmem:[%s0 + $0x1b8] sm:$0xff]
  %v67 = vld [vmem:[%s0 + $0x1c0] sm:$0xff]
  %v68 = vld [vmem:[%s0 + $0x1c8] sm:$0xff]
  %v69 = vld [vmem:[%s0 + $0x1d0] sm:$0xff]
  %v70 = vld [vmem:[%s0 + $0x1d8] sm:$0xff]
  %v71 = vld [vmem:[%s0 + $0x1e0] sm:$0xff]
  %v72 = vld [vmem:[%s0 + $0x1e8] sm:$0xff]
  %v73 = vld [vmem:[%s0 + $0x1f0] sm:$0xff]
  %v74 = vld [vmem:[%s0 + $0x1f8] sm:$0xff]
  %v75 = vld [vmem:[%s1] ss:$2 sm:$0xf]
  %v77 = vperm.slane %v75, 0
  %v78 = vperm.slane %v75, 1
  %v79 = vperm.slane %v75, 2
  %v80 = vperm.slane %v75, 3
  %v85 = vmul.f32 %v11, %v77
  %v86 = vmul.f32 %v12, %v78
  %v87 = vmul.f32 %v13, %v79
  %v88 = vmul.f32 %v14, %v80
  %v89 = vmul.f32 %v15, %v77
  %v90 = vmul.f32 %v16, %v78
  %v91 = vmul.f32 %v17, %v79
  %v92 = vmul.f32 %v18, %v80
  %v93 = vmul.f32 %v19, %v77
  %v94 = vmul.f32 %v20, %v78
  %v95 = vmul.f32 %v21, %v79
  %v96 = vmul.f32 %v22, %v80
  %v97 = vmul.f32 %v23, %v77
  %v98 = vmul.f32 %v24, %v78
  %v99 = vmul.f32 %v25, %v79
  %v100 = vmul.f32 %v26, %v80
  %v101 = vmul.f32 %v27, %v77
  %v102 = vmul.f32 %v28, %v78
  %v103 = vmul.f32 %v29, %v79
  %v104 = vmul.f32 %v30, %v80
  %v105 = vmul.f32 %v31, %v77
  %v106 = vmul.f32 %v32, %v78
  %v107 = vmul.f32 %v33, %v79
  %v108 = vmul.f32 %v34, %v80
  %v109 = vmul.f32 %v35, %v77
  %v110 = vmul.f32 %v36, %v78
  %v111 = vmul.f32 %v37, %v79
  %v112 = vmul.f32 %v38, %v80
  %v113 = vmul.f32 %v39, %v77
  %v114 = vmul.f32 %v40, %v78
  %v115 = vmul.f32 %v41, %v79
  %v116 = vmul.f32 %v42, %v80
  %v117 = vmul.f32 %v43, %v77
  %v118 = vmul.f32 %v44, %v78
  %v119 = vmul.f32 %v45, %v79
  %v120 = vmul.f32 %v46, %v80
  %v121 = vmul.f32 %v47, %v77
  %v122 = vmul.f32 %v48, %v78
  %v123 = vmul.f32 %v49, %v79
  %v124 = vmul.f32 %v50, %v80
  %v125 = vmul.f32 %v51, %v77
  %v126 = vmul.f32 %v52, %v78
  %v127 = vmul.f32 %v53, %v79
  %v128 = vmul.f32 %v54, %v80
  %v129 = vmul.f32 %v55, %v77
  %v130 = vmul.f32 %v56, %v78
  %v131 = vmul.f32 %v57, %v79
  %v132 = vmul.f32 %v58, %v80
  %v133 = vmul.f32 %v59, %v77
  %v134 = vmul.f32 %v60, %v78
  %v135 = vmul.f32 %v61, %v79
  %v136 = vmul.f32 %v62, %v80
  %v137 = vmul.f32 %v63, %v77
  %v138 = vmul.f32 %v64, %v78
  %v139 = vmul.f32 %v65, %v79
  %v140 = vmul.f32 %v66, %v80
  %v141 = vmul.f32 %v67, %v77
  %v142 = vmul.f32 %v68, %v78
  %v143 = vmul.f32 %v69, %v79
  %v144 = vmul.f32 %v70, %v80
  %v145 = vmul.f32 %v71, %v77
  %v146 = vmul.f32 %v72, %v78
  %v147 = vmul.f32 %v73, %v79
  %v148 = vmul.f32 %v74, %v80
  %s149 = scalar_lea.vmem %s1, 1
  %v150 = vld [vmem:[%s149] ss:$2 sm:$0xf]
  %v152 = vperm.slane %v150, 0
  %v153 = vperm.slane %v150, 1
  %v154 = vperm.slane %v150, 2
  %v155 = vperm.slane %v150, 3
  %v160 = vadd.f32 %v85, %v152
  %v161 = vadd.f32 %v86, %v153
  %v162 = vadd.f32 %v87, %v154
  %v163 = vadd.f32 %v88, %v155
  %v164 = vadd.f32 %v89, %v152
  %v165 = vadd.f32 %v90, %v153
  %v166 = vadd.f32 %v91, %v154
  %v167 = vadd.f32 %v92, %v155
  %v168 = vadd.f32 %v93, %v152
  %v169 = vadd.f32 %v94, %v153
  %v170 = vadd.f32 %v95, %v154
  %v171 = vadd.f32 %v96, %v155
  %v172 = vadd.f32 %v97, %v152
  %v173 = vadd.f32 %v98, %v153
  %v174 = vadd.f32 %v99, %v154
  %v175 = vadd.f32 %v100, %v155
  %v176 = vadd.f32 %v101, %v152
  %v177 = vadd.f32 %v102, %v153
  %v178 = vadd.f32 %v103, %v154
  %v179 = vadd.f32 %v104, %v155
  %v180 = vadd.f32 %v105, %v152
  %v181 = vadd.f32 %v106, %v153
  %v182 = vadd.f32 %v107, %v154
  %v183 = vadd.f32 %v108, %v155
  %v184 = vadd.f32 %v109, %v152
  %v185 = vadd.f32 %v110, %v153
  %v186 = vadd.f32 %v111, %v154
  %v187 = vadd.f32 %v112, %v155
  %v188 = vadd.f32 %v113, %v152
  %v189 = vadd.f32 %v114, %v153
  %v190 = vadd.f32 %v115, %v154
  %v191 = vadd.f32 %v116, %v155
  %v192 = vadd.f32 %v117, %v152
  %v193 = vadd.f32 %v118, %v153
  %v194 = vadd.f32 %v119, %v154
  %v195 = vadd.f32 %v120, %v155
  %v196 = vadd.f32 %v121, %v152
  %v197 = vadd.f32 %v122, %v153
  %v198 = vadd.f32 %v123, %v154
  %v199 = vadd.f32 %v124, %v155
  %v200 = vadd.f32 %v125, %v152
  %v201 = vadd.f32 %v126, %v153
  %v202 = vadd.f32 %v127, %v154
  %v203 = vadd.f32 %v128, %v155
  %v204 = vadd.f32 %v129, %v152
  %v205 = vadd.f32 %v130, %v153
  %v206 = vadd.f32 %v131, %v154
  %v207 = vadd.f32 %v132, %v155
  %v208 = vadd.f32 %v133, %v152
  %v209 = vadd.f32 %v134, %v153
  %v210 = vadd.f32 %v135, %v154
  %v211 = vadd.f32 %v136, %v155
  %v212 = vadd.f32 %v137, %v152
  %v213 = vadd.f32 %v138, %v153
  %v214 = vadd.f32 %v139, %v154
  %v215 = vadd.f32 %v140, %v155
  %v216 = vadd.f32 %v141, %v152
  %v217 = vadd.f32 %v142, %v153
  %v218 = vadd.f32 %v143, %v154
  %v219 = vadd.f32 %v144, %v155
  %v220 = vadd.f32 %v145, %v152
  %v221 = vadd.f32 %v146, %v153
  %v222 = vadd.f32 %v147, %v154
  %v223 = vadd.f32 %v148, %v155
  %224 = vst [vmem:[%s2] sm:$0xff] %v160
  %225 = vst [vmem:[%s2 + $0x8] sm:$0xff] %v161
  %226 = vst [vmem:[%s2 + $0x10] sm:$0xff] %v162
  %227 = vst [vmem:[%s2 + $0x18] sm:$0xff] %v163
  %228 = vst [vmem:[%s2 + $0x20] sm:$0xff] %v164
  %229 = vst [vmem:[%s2 + $0x28] sm:$0xff] %v165
  %230 = vst [vmem:[%s2 + $0x30] sm:$0xff] %v166
  %231 = vst [vmem:[%s2 + $0x38] sm:$0xff] %v167
  %232 = vst [vmem:[%s2 + $0x40] sm:$0xff] %v168
  %233 = vst [vmem:[%s2 + $0x48] sm:$0xff] %v169
  %234 = vst [vmem:[%s2 + $0x50] sm:$0xff] %v170
  %235 = vst [vmem:[%s2 + $0x58] sm:$0xff] %v171
  %236 = vst [vmem:[%s2 + $0x60] sm:$0xff] %v172
  %237 = vst [vmem:[%s2 + $0x68] sm:$0xff] %v173
  %238 = vst [vmem:[%s2 + $0x70] sm:$0xff] %v174
  %239 = vst [vmem:[%s2 + $0x78] sm:$0xff] %v175
  %240 = vst [vmem:[%s2 + $0x80] sm:$0xff] %v176
  %241 = vst [vmem:[%s2 + $0x88] sm:$0xff] %v177
  %242 = vst [vmem:[%s2 + $0x90] sm:$0xff] %v178
  %243 = vst [vmem:[%s2 + $0x98] sm:$0xff] %v179
  %244 = vst [vmem:[%s2 + $0xa0] sm:$0xff] %v180
  %245 = vst [vmem:[%s2 + $0xa8] sm:$0xff] %v181
  %246 = vst [vmem:[%s2 + $0xb0] sm:$0xff] %v182
  %247 = vst [vmem:[%s2 + $0xb8] sm:$0xff] %v183
  %248 = vst [vmem:[%s2 + $0xc0] sm:$0xff] %v184
  %249 = vst [vmem:[%s2 + $0xc8] sm:$0xff] %v185
  %250 = vst [vmem:[%s2 + $0xd0] sm:$0xff] %v186
  %251 = vst [vmem:[%s2 + $0xd8] sm:$0xff] %v187
  %252 = vst [vmem:[%s2 + $0xe0] sm:$0xff] %v188
  %253 = vst [vmem:[%s2 + $0xe8] sm:$0xff] %v189
  %254 = vst [vmem:[%s2 + $0xf0] sm:$0xff] %v190
  %255 = vst [vmem:[%s2 + $0xf8] sm:$0xff] %v191
  %256 = vst [vmem:[%s2 + $0x100] sm:$0xff] %v192
  %257 = vst [vmem:[%s2 + $0x108] sm:$0xff] %v193
  %258 = vst [vmem:[%s2 + $0x110] sm:$0xff] %v194
  %259 = vst [vmem:[%s2 + $0x118] sm:$0xff] %v195
  %260 = vst [vmem:[%s2 + $0x120] sm:$0xff] %v196
  %261 = vst [vmem:[%s2 + $0x128] sm:$0xff] %v197
  %262 = vst [vmem:[%s2 + $0x130] sm:$0xff] %v198
  %263 = vst [vmem:[%s2 + $0x138] sm:$0xff] %v199
  %264 = vst [vmem:[%s2 + $0x140] sm:$0xff] %v200
  %265 = vst [vmem:[%s2 + $0x148] sm:$0xff] %v201
  %266 = vst [vmem:[%s2 + $0x150] sm:$0xff] %v202
  %267 = vst [vmem:[%s2 + $0x158] sm:$0xff] %v203
  %268 = vst [vmem:[%s2 + $0x160] sm:$0xff] %v204
  %269 = vst [vmem:[%s2 + $0x168] sm:$0xff] %v205
  %270 = vst [vmem:[%s2 + $0x170] sm:$0xff] %v206
  %271 = vst [vmem:[%s2 + $0x178] sm:$0xff] %v207
  %272 = vst [vmem:[%s2 + $0x180] sm:$0xff] %v208
  %273 = vst [vmem:[%s2 + $0x188] sm:$0xff] %v209
  %274 = vst [vmem:[%s2 + $0x190] sm:$0xff] %v210
  %275 = vst [vmem:[%s2 + $0x198] sm:$0xff] %v211
  %276 = vst [vmem:[%s2 + $0x1a0] sm:$0xff] %v212
  %277 = vst [vmem:[%s2 + $0x1a8] sm:$0xff] %v213
  %278 = vst [vmem:[%s2 + $0x1b0] sm:$0xff] %v214
  %279 = vst [vmem:[%s2 + $0x1b8] sm:$0xff] %v215
  %280 = vst [vmem:[%s2 + $0x1c0] sm:$0xff] %v216
  %281 = vst [vmem:[%s2 + $0x1c8] sm:$0xff] %v217
  %282 = vst [vmem:[%s2 + $0x1d0] sm:$0xff] %v218
  %283 = vst [vmem:[%s2 + $0x1d8] sm:$0xff] %v219
  %284 = vst [vmem:[%s2 + $0x1e0] sm:$0xff] %v220
  %285 = vst [vmem:[%s2 + $0x1e8] sm:$0xff] %v221
  %286 = vst [vmem:[%s2 + $0x1f0] sm:$0xff] %v222
  %287 = vst [vmem:[%s2 + $0x1f8] sm:$0xff] %v223
  // Predicated region
  $region10: #{unet_innermost_forward.5} parent=0 // pred_check
    _
  $region11: #{unet_innermost_forward.5} parent=0 // pred_check_branch
    %289 = sbr.rel (0) target = $region13
  $region12: #{unet_innermost_forward.5} parent=0 // pred_region
    _
  $region13: #{unet_innermost_forward.5} parent=0 // pred_fallthru
    _
  // Predicated region
  $region14: #{unet_innermost_forward.5} parent=0 // pred_check
    _
  $region15: #{unet_innermost_forward.5} parent=0 // pred_check_branch
    %291 = sbr.rel (0) target = $region17
  $region16: #{unet_innermost_forward.5} parent=0 // pred_region
    _
  $region17: #{unet_innermost_forward.5} parent=0 // pred_fallthru
    _

// kernel: unet_innermost_forward.4
$region0: #{unet_innermost_forward.4}
  #allocation0 [shape = 'u32[]', space=smem, size = 0x4, offset = 0x4, fixed_abs, tag = 'smem constant byte address 0x4 - core index']
  #allocation1 [shape = 'u32[72,128]{1,0:T(1,128)}', space=vmem, size = 0x9000, scoped, tag = 'internal scratch']
  #allocation2 [shape = 'f32[128,512]{1,0:T(8,128)}', space=vmem, size = 0x40000, scoped, tag = 'scratch operand']
  #allocation3 [shape = 'f32[2,512]{1,0:T(2,128)}', space=vmem, size = 0x1000, scoped, tag = 'scratch operand']
  %s0 = inlined_call_operand.vmem [shape: bf16[128,1152], index: 0, kind: input, shape index: {}]
  %s1 = inlined_call_operand.vmem [shape: bf16[1152,512], index: 1, kind: input, shape index: {}]
  %s2 = inlined_call_operand.vmem [shape: f32[128,512], index: 2, kind: output, shape index: {0}]
  %s3 = inlined_call_operand.vmem [shape: f32[2,512], index: 3, kind: output, shape index: {1}]
  %4 = xla_tuple %s2, %s3
  %s5 = sld [smem:[#allocation0]]
  $region38: #{unet_innermost_forward.4} parent=0
    _
  %s7 = ssub.s32 1, %s5
  %s8 = scalar_select 0, %s7, %s5
  // Predicated region
  $region2: #{unet_innermost_forward.4} parent=0 // pred_check
    _
  $region3: #{unet_innermost_forward.4} parent=0 // pred_check_branch
    %10 = sbr.rel (0) target = $region5
  $region4: #{unet_innermost_forward.4} parent=0 // pred_region
    _
  $region5: #{unet_innermost_forward.4} parent=0 // pred_fallthru
    _
  // Predicated region
  $region6: #{unet_innermost_forward.4} parent=0 // pred_check
    _
  $region7: #{unet_innermost_forward.4} parent=0 // pred_check_branch
    %12 = sbr.rel (0) target = $region9
  $region8: #{unet_innermost_forward.4} parent=0 // pred_region
    _
  $region9: #{unet_innermost_forward.4} parent=0 // pred_fallthru
    _
  %p13 = scmp.eq.s32.totalorder 0, 0
  // Predicated region
  $region10: #{unet_innermost_forward.4} parent=0 // pred_check
    %p14 = pneg %p13
  $region11: #{unet_innermost_forward.4} parent=0 // pred_check_branch
    %16 = sbr.rel (%p14) target = $region13
  $region12: #{unet_innermost_forward.4} parent=0 // pred_region
    %17 = vst [vmem:[#allocation2] sm:$0xff] 0.0
    %18 = vst [vmem:[#allocation2 + $0x8] sm:$0xff] 0.0
    %19 = vst [vmem:[#allocation2 + $0x10] sm:$0xff] 0.0
    %20 = vst [vmem:[#allocation2 + $0x18] sm:$0xff] 0.0
    %21 = vst [vmem:[#allocation2 + $0x20] sm:$0xff] 0.0
    %22 = vst [vmem:[#allocation2 + $0x28] sm:$0xff] 0.0
    %23 = vst [vmem:[#allocation2 + $0x30] sm:$0xff] 0.0
    %24 = vst [vmem:[#allocation2 + $0x38] sm:$0xff] 0.0
    %25 = vst [vmem:[#allocation2 + $0x40] sm:$0xff] 0.0
    %26 = vst [vmem:[#allocation2 + $0x48] sm:$0xff] 0.0
    %27 = vst [vmem:[#allocation2 + $0x50] sm:$0xff] 0.0
    %28 = vst [vmem:[#allocation2 + $0x58] sm:$0xff] 0.0
    %29 = vst [vmem:[#allocation2 + $0x60] sm:$0xff] 0.0
    %30 = vst [vmem:[#allocation2 + $0x68] sm:$0xff] 0.0
    %31 = vst [vmem:[#allocation2 + $0x70] sm:$0xff] 0.0
    %32 = vst [vmem:[#allocation2 + $0x78] sm:$0xff] 0.0
    %33 = vst [vmem:[#allocation2 + $0x80] sm:$0xff] 0.0
    %34 = vst [vmem:[#allocation2 + $0x88] sm:$0xff] 0.0
    %35 = vst [vmem:[#allocation2 + $0x90] sm:$0xff] 0.0
    %36 = vst [vmem:[#allocation2 + $0x98] sm:$0xff] 0.0
    %37 = vst [vmem:[#allocation2 + $0xa0] sm:$0xff] 0.0
    %38 = vst [vmem:[#allocation2 + $0xa8] sm:$0xff] 0.0
    %39 = vst [vmem:[#allocation2 + $0xb0] sm:$0xff] 0.0
    %40 = vst [vmem:[#allocation2 + $0xb8] sm:$0xff] 0.0
    %41 = vst [vmem:[#allocation2 + $0xc0] sm:$0xff] 0.0
    %42 = vst [vmem:[#allocation2 + $0xc8] sm:$0xff] 0.0
    %43 = vst [vmem:[#allocation2 + $0xd0] sm:$0xff] 0.0
    %44 = vst [vmem:[#allocation2 + $0xd8] sm:$0xff] 0.0
    %45 = vst [vmem:[#allocation2 + $0xe0] sm:$0xff] 0.0
    %46 = vst [vmem:[#allocation2 + $0xe8] sm:$0xff] 0.0
    %47 = vst [vmem:[#allocation2 + $0xf0] sm:$0xff] 0.0
    %48 = vst [vmem:[#allocation2 + $0xf8] sm:$0xff] 0.0
    %49 = vst [vmem:[#allocation2 + $0x100] sm:$0xff] 0.0
    %50 = vst [vmem:[#allocation2 + $0x108] sm:$0xff] 0.0
    %51 = vst [vmem:[#allocation2 + $0x110] sm:$0xff] 0.0
    %52 = vst [vmem:[#allocation2 + $0x118] sm:$0xff] 0.0
    %53 = vst [vmem:[#allocation2 + $0x120] sm:$0xff] 0.0
    %54 = vst [vmem:[#allocation2 + $0x128] sm:$0xff] 0.0
    %55 = vst [vmem:[#allocation2 + $0x130] sm:$0xff] 0.0
    %56 = vst [vmem:[#allocation2 + $0x138] sm:$0xff] 0.0
    %57 = vst [vmem:[#allocation2 + $0x140] sm:$0xff] 0.0
    %58 = vst [vmem:[#allocation2 + $0x148] sm:$0xff] 0.0
    %59 = vst [vmem:[#allocation2 + $0x150] sm:$0xff] 0.0
    %60 = vst [vmem:[#allocation2 + $0x158] sm:$0xff] 0.0
    %61 = vst [vmem:[#allocation2 + $0x160] sm:$0xff] 0.0
    %62 = vst [vmem:[#allocation2 + $0x168] sm:$0xff] 0.0
    %63 = vst [vmem:[#allocation2 + $0x170] sm:$0xff] 0.0
    %64 = vst [vmem:[#allocation2 + $0x178] sm:$0xff] 0.0
    %65 = vst [vmem:[#allocation2 + $0x180] sm:$0xff] 0.0
    %66 = vst [vmem:[#allocation2 + $0x188] sm:$0xff] 0.0
    %67 = vst [vmem:[#allocation2 + $0x190] sm:$0xff] 0.0
    %68 = vst [vmem:[#allocation2 + $0x198] sm:$0xff] 0.0
    %69 = vst [vmem:[#allocation2 + $0x1a0] sm:$0xff] 0.0
    %70 = vst [vmem:[#allocation2 + $0x1a8] sm:$0xff] 0.0
    %71 = vst [vmem:[#allocation2 + $0x1b0] sm:$0xff] 0.0
    %72 = vst [vmem:[#allocation2 + $0x1b8] sm:$0xff] 0.0
    %73 = vst [vmem:[#allocation2 + $0x1c0] sm:$0xff] 0.0
    %74 = vst [vmem:[#allocation2 + $0x1c8] sm:$0xff] 0.0
    %75 = vst [vmem:[#allocation2 + $0x1d0] sm:$0xff] 0.0
    %76 = vst [vmem:[#allocation2 + $0x1d8] sm:$0xff] 0.0
    %77 = vst [vmem:[#allocation2 + $0x1e0] sm:$0xff] 0.0
    %78 = vst [vmem:[#allocation2 + $0x1e8] sm:$0xff] 0.0
    %79 = vst [vmem:[#allocation2 + $0x1f0] sm:$0xff] 0.0
    %80 = vst [vmem:[#allocation2 + $0x1f8] sm:$0xff] 0.0
  $region13: #{unet_innermost_forward.4} parent=0 // pred_fallthru
    _
  %p81 = scmp.eq.s32.totalorder 0, 0
  %p82 = pnand %p81, %p13
  %p83 = pneg %p82
  // Predicated region
  $region14: #{unet_innermost_forward.4} parent=0 // pred_check
    _
  $region15: #{unet_innermost_forward.4} parent=0 // pred_check_branch
    %85 = sbr.rel (%p82) target = $region17
  $region16: #{unet_innermost_forward.4} parent=0 // pred_region
    %86 = vst [vmem:[#allocation3] sm:$0xff] 0.0
  $region17: #{unet_innermost_forward.4} parent=0 // pred_fallthru
    _
  %v87 = vld [vmem:[#allocation2] sm:$0xff]
  %v88 = vld [vmem:[#allocation2 + $0x8] sm:$0xff]
  %v89 = vld [vmem:[#allocation2 + $0x10] sm:$0xff]
  %v90 = vld [vmem:[#allocation2 + $0x18] sm:$0xff]
  %v91 = vld [vmem:[#allocation2 + $0x20] sm:$0xff]
  %v92 = vld [vmem:[#allocation2 + $0x28] sm:$0xff]
  %v93 = vld [vmem:[#allocation2 + $0x30] sm:$0xff]
  %v94 = vld [vmem:[#allocation2 + $0x38] sm:$0xff]
  %v95 = vld [vmem:[#allocation2 + $0x40] sm:$0xff]
  %v96 = vld [vmem:[#allocation2 + $0x48] sm:$0xff]
  %v97 = vld [vmem:[#allocation2 + $0x50] sm:$0xff]
  %v98 = vld [vmem:[#allocation2 + $0x58] sm:$0xff]
  %v99 = vld [vmem:[#allocation2 + $0x60] sm:$0xff]
  %v100 = vld [vmem:[#allocation2 + $0x68] sm:$0xff]
  %v101 = vld [vmem:[#allocation2 + $0x70] sm:$0xff]
  %v102 = vld [vmem:[#allocation2 + $0x78] sm:$0xff]
  %v103 = vld [vmem:[#allocation2 + $0x80] sm:$0xff]
  %v104 = vld [vmem:[#allocation2 + $0x88] sm:$0xff]
  %v105 = vld [vmem:[#allocation2 + $0x90] sm:$0xff]
  %v106 = vld [vmem:[#allocation2 + $0x98] sm:$0xff]
  %v107 = vld [vmem:[#allocation2 + $0xa0] sm:$0xff]
  %v108 = vld [vmem:[#allocation2 + $0xa8] sm:$0xff]
  %v109 = vld [vmem:[#allocation2 + $0xb0] sm:$0xff]
  %v110 = vld [vmem:[#allocation2 + $0xb8] sm:$0xff]
  %v111 = vld [vmem:[#allocation2 + $0xc0] sm:$0xff]
  %v112 = vld [vmem:[#allocation2 + $0xc8] sm:$0xff]
  %v113 = vld [vmem:[#allocation2 + $0xd0] sm:$0xff]
  %v114 = vld [vmem:[#allocation2 + $0xd8] sm:$0xff]
  %v115 = vld [vmem:[#allocation2 + $0xe0] sm:$0xff]
  %v116 = vld [vmem:[#allocation2 + $0xe8] sm:$0xff]
  %v117 = vld [vmem:[#allocation2 + $0xf0] sm:$0xff]
  %v118 = vld [vmem:[#allocation2 + $0xf8] sm:$0xff]
  %v119 = vld [vmem:[#allocation2 + $0x100] sm:$0xff]
  %v120 = vld [vmem:[#allocation2 + $0x108] sm:$0xff]
  %v121 = vld [vmem:[#allocation2 + $0x110] sm:$0xff]
  %v122 = vld [vmem:[#allocation2 + $0x118] sm:$0xff]
  %v123 = vld [vmem:[#allocation2 + $0x120] sm:$0xff]
  %v124 = vld [vmem:[#allocation2 + $0x128] sm:$0xff]
  %v125 = vld [vmem:[#allocation2 + $0x130] sm:$0xff]
  %v126 = vld [vmem:[#allocation2 + $0x138] sm:$0xff]
  %v127 = vld [vmem:[#allocation2 + $0x140] sm:$0xff]
  %v128 = vld [vmem:[#allocation2 + $0x148] sm:$0xff]
  %v129 = vld [vmem:[#allocation2 + $0x150] sm:$0xff]
  %v130 = vld [vmem:[#allocation2 + $0x158] sm:$0xff]
  %v131 = vld [vmem:[#allocation2 + $0x160] sm:$0xff]
  %v132 = vld [vmem:[#allocation2 + $0x168] sm:$0xff]
  %v133 = vld [vmem:[#allocation2 + $0x170] sm:$0xff]
  %v134 = vld [vmem:[#allocation2 + $0x178] sm:$0xff]
  %v135 = vld [vmem:[#allocation2 + $0x180] sm:$0xff]
  %v136 = vld [vmem:[#allocation2 + $0x188] sm:$0xff]
  %v137 = vld [vmem:[#allocation2 + $0x190] sm:$0xff]
  %v138 = vld [vmem:[#allocation2 + $0x198] sm:$0xff]
  %v139 = vld [vmem:[#allocation2 + $0x1a0] sm:$0xff]
  %v140 = vld [vmem:[#allocation2 + $0x1a8] sm:$0xff]
  %v141 = vld [vmem:[#allocation2 + $0x1b0] sm:$0xff]
  %v142 = vld [vmem:[#allocation2 + $0x1b8] sm:$0xff]
  %v143 = vld [vmem:[#allocation2 + $0x1c0] sm:$0xff]
  %v144 = vld [vmem:[#allocation2 + $0x1c8] sm:$0xff]
  %v145 = vld [vmem:[#allocation2 + $0x1d0] sm:$0xff]
  %v146 = vld [vmem:[#allocation2 + $0x1d8] sm:$0xff]
  %v147 = vld [vmem:[#allocation2 + $0x1e0] sm:$0xff]
  %v148 = vld [vmem:[#allocation2 + $0x1e8] sm:$0xff]
  %v149 = vld [vmem:[#allocation2 + $0x1f0] sm:$0xff]
  %v150 = vld [vmem:[#allocation2 + $0x1f8] sm:$0xff]
  %v151 = vld [vmem:[%s0] sm:$0xff]
  %v152 = vld [vmem:[%s0 + $0x8] sm:$0xff]
  %v153 = vld [vmem:[%s0 + $0x10] sm:$0xff]
  %v154 = vld [vmem:[%s0 + $0x18] sm:$0xff]
  %v155 = vld [vmem:[%s0 + $0x20] sm:$0xf]
  %v156 = vld [vmem:[%s0 + $0x24] sm:$0xff]
  %v157 = vld [vmem:[%s0 + $0x2c] sm:$0xff]
  %v158 = vld [vmem:[%s0 + $0x34] sm:$0xff]
  %v159 = vld [vmem:[%s0 + $0x3c] sm:$0xff]
  %v160 = vld [vmem:[%s0 + $0x44] sm:$0xf]
  %v161 = vld [vmem:[%s0 + $0x48] sm:$0xff]
  %v162 = vld [vmem:[%s0 + $0x50] sm:$0xff]
  %v163 = vld [vmem:[%s0 + $0x58] sm:$0xff]
  %v164 = vld [vmem:[%s0 + $0x60] sm:$0xff]
  %v165 = vld [vmem:[%s0 + $0x68] sm:$0xf]
  %v166 = vld [vmem:[%s0 + $0x6c] sm:$0xff]
  %v167 = vld [vmem:[%s0 + $0x74] sm:$0xff]
  %v168 = vld [vmem:[%s0 + $0x7c] sm:$0xff]
  %v169 = vld [vmem:[%s0 + $0x84] sm:$0xff]
  %v170 = vld [vmem:[%s0 + $0x8c] sm:$0xf]
  %v171 = vld [vmem:[%s0 + $0x90] sm:$0xff]
  %v172 = vld [vmem:[%s0 + $0x98] sm:$0xff]
  %v173 = vld [vmem:[%s0 + $0xa0] sm:$0xff]
  %v174 = vld [vmem:[%s0 + $0xa8] sm:$0xff]
  %v175 = vld [vmem:[%s0 + $0xb0] sm:$0xf]
  %v176 = vld [vmem:[%s0 + $0xb4] sm:$0xff]
  %v177 = vld [vmem:[%s0 + $0xbc] sm:$0xff]
  %v178 = vld [vmem:[%s0 + $0xc4] sm:$0xff]
  %v179 = vld [vmem:[%s0 + $0xcc] sm:$0xff]
  %v180 = vld [vmem:[%s0 + $0xd4] sm:$0xf]
  %v181 = vld [vmem:[%s0 + $0xd8] sm:$0xff]
  %v182 = vld [vmem:[%s0 + $0xe0] sm:$0xff]
  %v183 = vld [vmem:[%s0 + $0xe8] sm:$0xff]
  %v184 = vld [vmem:[%s0 + $0xf0] sm:$0xff]
  %v185 = vld [vmem:[%s0 + $0xf8] sm:$0xf]
  %v186 = vld [vmem:[%s0 + $0xfc] sm:$0xff]
  %v187 = vld [vmem:[%s0 + $0x104] sm:$0xff]
  %v188 = vld [vmem:[%s0 + $0x10c] sm:$0xff]
  %v189 = vld [vmem:[%s0 + $0x114] sm:$0xff]
  %v190 = vld [vmem:[%s0 + $0x11c] sm:$0xf]
  %v191 = vld [vmem:[%s0 + $0x120] sm:$0xff]
  %v192 = vld [vmem:[%s0 + $0x128] sm:$0xff]
  %v193 = vld [vmem:[%s0 + $0x130] sm:$0xff]
  %v194 = vld [vmem:[%s0 + $0x138] sm:$0xff]
  %v195 = vld [vmem:[%s0 + $0x140] sm:$0xf]
  %v196 = vld [vmem:[%s0 + $0x144] sm:$0xff]
  %v197 = vld [vmem:[%s0 + $0x14c] sm:$0xff]
  %v198 = vld [vmem:[%s0 + $0x154] sm:$0xff]
  %v199 = vld [vmem:[%s0 + $0x15c] sm:$0xff]
  %v200 = vld [vmem:[%s0 + $0x164] sm:$0xf]
  %v201 = vld [vmem:[%s0 + $0x168] sm:$0xff]
  %v202 = vld [vmem:[%s0 + $0x170] sm:$0xff]
  %v203 = vld [vmem:[%s0 + $0x178] sm:$0xff]
  %v204 = vld [vmem:[%s0 + $0x180] sm:$0xff]
  %v205 = vld [vmem:[%s0 + $0x188] sm:$0xf]
  %v206 = vld [vmem:[%s0 + $0x18c] sm:$0xff]
  %v207 = vld [vmem:[%s0 + $0x194] sm:$0xff]
  %v208 = vld [vmem:[%s0 + $0x19c] sm:$0xff]
  %v209 = vld [vmem:[%s0 + $0x1a4] sm:$0xff]
  %v210 = vld [vmem:[%s0 + $0x1ac] sm:$0xf]
  %v211 = vld [vmem:[%s0 + $0x1b0] sm:$0xff]
  %v212 = vld [vmem:[%s0 + $0x1b8] sm:$0xff]
  %v213 = vld [vmem:[%s0 + $0x1c0] sm:$0xff]
  %v214 = vld [vmem:[%s0 + $0x1c8] sm:$0xff]
  %v215 = vld [vmem:[%s0 + $0x1d0] sm:$0xf]
  %v216 = vld [vmem:[%s0 + $0x1d4] sm:$0xff]
  %v217 = vld [vmem:[%s0 + $0x1dc] sm:$0xff]
  %v218 = vld [vmem:[%s0 + $0x1e4] sm:$0xff]
  %v219 = vld [vmem:[%s0 + $0x1ec] sm:$0xff]
  %v220 = vld [vmem:[%s0 + $0x1f4] sm:$0xf]
  %v221 = vld [vmem:[%s0 + $0x1f8] sm:$0xff]
  %v222 = vld [vmem:[%s0 + $0x200] sm:$0xff]
  %v223 = vld [vmem:[%s0 + $0x208] sm:$0xff]
  %v224 = vld [vmem:[%s0 + $0x210] sm:$0xff]
  %v225 = vld [vmem:[%s0 + $0x218] sm:$0xf]
  %v226 = vld [vmem:[%s0 + $0x21c] sm:$0xff]
  %v227 = vld [vmem:[%s0 + $0x224] sm:$0xff]
  %v228 = vld [vmem:[%s0 + $0x22c] sm:$0xff]
  %v229 = vld [vmem:[%s0 + $0x234] sm:$0xff]
  %v230 = vld [vmem:[%s0 + $0x23c] sm:$0xf]
  %v231 = vld [vmem:[%s1] sm:$0xff]
  %v232 = vld [vmem:[%s1 + $0x8] sm:$0xff]
  %v233 = vld [vmem:[%s1 + $0x10] sm:$0xff]
  %v234 = vld [vmem:[%s1 + $0x18] sm:$0xff]
  %v235 = vld [vmem:[%s1 + $0x20] sm:$0xff]
  %v236 = vld [vmem:[%s1 + $0x28] sm:$0xff]
  %v237 = vld [vmem:[%s1 + $0x30] sm:$0xff]
  %v238 = vld [vmem:[%s1 + $0x38] sm:$0xff]
  %v239 = vld [vmem:[%s1 + $0x40] sm:$0xff]
  %v240 = vld [vmem:[%s1 + $0x48] sm:$0xff]
  %v241 = vld [vmem:[%s1 + $0x50] sm:$0xff]
  %v242 = vld [vmem:[%s1 + $0x58] sm:$0xff]
  %v243 = vld [vmem:[%s1 + $0x60] sm:$0xff]
  %v244 = vld [vmem:[%s1 + $0x68] sm:$0xff]
  %v245 = vld [vmem:[%s1 + $0x70] sm:$0xff]
  %v246 = vld [vmem:[%s1 + $0x78] sm:$0xff]
  %v247 = vld [vmem:[%s1 + $0x80] sm:$0xff]
  %v248 = vld [vmem:[%s1 + $0x88] sm:$0xff]
  %v249 = vld [vmem:[%s1 + $0x90] sm:$0xff]
  %v250 = vld [vmem:[%s1 + $0x98] sm:$0xff]
  %v251 = vld [vmem:[%s1 + $0xa0] sm:$0xff]
  %v252 = vld [vmem:[%s1 + $0xa8] sm:$0xff]
  %v253 = vld [vmem:[%s1 + $0xb0] sm:$0xff]
  %v254 = vld [vmem:[%s1 + $0xb8] sm:$0xff]
  %v255 = vld [vmem:[%s1 + $0xc0] sm:$0xff]
  %v256 = vld [vmem:[%s1 + $0xc8] sm:$0xff]
  %v257 = vld [vmem:[%s1 + $0xd0] sm:$0xff]
  %v258 = vld [vmem:[%s1 + $0xd8] sm:$0xff]
  %v259 = vld [vmem:[%s1 + $0xe0] sm:$0xff]
  %v260 = vld [vmem:[%s1 + $0xe8] sm:$0xff]
  %v261 = vld [vmem:[%s1 + $0xf0] sm:$0xff]
  %v262 = vld [vmem:[%s1 + $0xf8] sm:$0xff]
  %v263 = vld [vmem:[%s1 + $0x100] sm:$0xff]
  %v264 = vld [vmem:[%s1 + $0x108] sm:$0xff]
  %v265 = vld [vmem:[%s1 + $0x110] sm:$0xff]
  %v266 = vld [vmem:[%s1 + $0x118] sm:$0xff]
  %v267 = vld [vmem:[%s1 + $0x120] sm:$0xff]
  %v268 = vld [vmem:[%s1 + $0x128] sm:$0xff]
  %v269 = vld [vmem:[%s1 + $0x130] sm:$0xff]
  %v270 = vld [vmem:[%s1 + $0x138] sm:$0xff]
  %v271 = vld [vmem:[%s1 + $0x140] sm:$0xff]
  %v272 = vld [vmem:[%s1 + $0x148] sm:$0xff]
  %v273 = vld [vmem:[%s1 + $0x150] sm:$0xff]
  %v274 = vld [vmem:[%s1 + $0x158] sm:$0xff]
  %v275 = vld [vmem:[%s1 + $0x160] sm:$0xff]
  %v276 = vld [vmem:[%s1 + $0x168] sm:$0xff]
  %v277 = vld [vmem:[%s1 + $0x170] sm:$0xff]
  %v278 = vld [vmem:[%s1 + $0x178] sm:$0xff]
  %v279 = vld [vmem:[%s1 + $0x180] sm:$0xff]
  %v280 = vld [vmem:[%s1 + $0x188] sm:$0xff]
  %v281 = vld [vmem:[%s1 + $0x190] sm:$0xff]
  %v282 = vld [vmem:[%s1 + $0x198] sm:$0xff]
  %v283 = vld [vmem:[%s1 + $0x1a0] sm:$0xff]
  %v284 = vld [vmem:[%s1 + $0x1a8] sm:$0xff]
  %v285 = vld [vmem:[%s1 + $0x1b0] sm:$0xff]
  %v286 = vld [vmem:[%s1 + $0x1b8] sm:$0xff]
  %v287 = vld [vmem:[%s1 + $0x1c0] sm:$0xff]
  %v288 = vld [vmem:[%s1 + $0x1c8] sm:$0xff]
  %v289 = vld [vmem:[%s1 + $0x1d0] sm:$0xff]
  %v290 = vld [vmem:[%s1 + $0x1d8] sm:$0xff]
  %v291 = vld [vmem:[%s1 + $0x1e0] sm:$0xff]
  %v292 = vld [vmem:[%s1 + $0x1e8] sm:$0xff]
  %v293 = vld [vmem:[%s1 + $0x1f0] sm:$0xff]
  %v294 = vld [vmem:[%s1 + $0x1f8] sm:$0xff]
  %v295 = vld [vmem:[%s1 + $0x200] sm:$0xff]
  %v296 = vld [vmem:[%s1 + $0x208] sm:$0xff]
  %v297 = vld [vmem:[%s1 + $0x210] sm:$0xff]
  %v298 = vld [vmem:[%s1 + $0x218] sm:$0xff]
  %v299 = vld [vmem:[%s1 + $0x220] sm:$0xff]
  %v300 = vld [vmem:[%s1 + $0x228] sm:$0xff]
  %v301 = vld [vmem:[%s1 + $0x230] sm:$0xff]
  %v302 = vld [vmem:[%s1 + $0x238] sm:$0xff]
  %v303 = vld [vmem:[%s1 + $0x240] sm:$0xff]
  %v304 = vld [vmem:[%s1 + $0x248] sm:$0xff]
  %v305 = vld [vmem:[%s1 + $0x250] sm:$0xff]
  %v306 = vld [vmem:[%s1 + $0x258] sm:$0xff]
  %v307 = vld [vmem:[%s1 + $0x260] sm:$0xff]
  %v308 = vld [vmem:[%s1 + $0x268] sm:$0xff]
  %v309 = vld [vmem:[%s1 + $0x270] sm:$0xff]
  %v310 = vld [vmem:[%s1 + $0x278] sm:$0xff]
  %v311 = vld [vmem:[%s1 + $0x280] sm:$0xff]
  %v312 = vld [vmem:[%s1 + $0x288] sm:$0xff]
  %v313 = vld [vmem:[%s1 + $0x290] sm:$0xff]
  %v314 = vld [vmem:[%s1 + $0x298] sm:$0xff]
  %v315 = vld [vmem:[%s1 + $0x2a0] sm:$0xff]
  %v316 = vld [vmem:[%s1 + $0x2a8] sm:$0xff]
  %v317 = vld [vmem:[%s1 + $0x2b0] sm:$0xff]
  %v318 = vld [vmem:[%s1 + $0x2b8] sm:$0xff]
  %v319 = vld [vmem:[%s1 + $0x2c0] sm:$0xff]
  %v320 = vld [vmem:[%s1 + $0x2c8] sm:$0xff]
  %v321 = vld [vmem:[%s1 + $0x2d0] sm:$0xff]
  %v322 = vld [vmem:[%s1 + $0x2d8] sm:$0xff]
  %v323 = vld [vmem:[%s1 + $0x2e0] sm:$0xff]
  %v324 = vld [vmem:[%s1 + $0x2e8] sm:$0xff]
  %v325 = vld [vmem:[%s1 + $0x2f0] sm:$0xff]
  %v326 = vld [vmem:[%s1 + $0x2f8] sm:$0xff]
  %v327 = vld [vmem:[%s1 + $0x300] sm:$0xff]
  %v328 = vld [vmem:[%s1 + $0x308] sm:$0xff]
  %v329 = vld [vmem:[%s1 + $0x310] sm:$0xff]
  %v330 = vld [vmem:[%s1 + $0x318] sm:$0xff]
  %v331 = vld [vmem:[%s1 + $0x320] sm:$0xff]
  %v332 = vld [vmem:[%s1 + $0x328] sm:$0xff]
  %v333 = vld [vmem:[%s1 + $0x330] sm:$0xff]
  %v334 = vld [vmem:[%s1 + $0x338] sm:$0xff]
  %v335 = vld [vmem:[%s1 + $0x340] sm:$0xff]
  %v336 = vld [vmem:[%s1 + $0x348] sm:$0xff]
  %v337 = vld [vmem:[%s1 + $0x350] sm:$0xff]
  %v338 = vld [vmem:[%s1 + $0x358] sm:$0xff]
  %v339 = vld [vmem:[%s1 + $0x360] sm:$0xff]
  %v340 = vld [vmem:[%s1 + $0x368] sm:$0xff]
  %v341 = vld [vmem:[%s1 + $0x370] sm:$0xff]
  %v342 = vld [vmem:[%s1 + $0x378] sm:$0xff]
  %v343 = vld [vmem:[%s1 + $0x380] sm:$0xff]
  %v344 = vld [vmem:[%s1 + $0x388] sm:$0xff]
  %v345 = vld [vmem:[%s1 + $0x390] sm:$0xff]
  %v346 = vld [vmem:[%s1 + $0x398] sm:$0xff]
  %v347 = vld [vmem:[%s1 + $0x3a0] sm:$0xff]
  %v348 = vld [vmem:[%s1 + $0x3a8] sm:$0xff]
  %v349 = vld [vmem:[%s1 + $0x3b0] sm:$0xff]
  %v350 = vld [vmem:[%s1 + $0x3b8] sm:$0xff]
  %v351 = vld [vmem:[%s1 + $0x3c0] sm:$0xff]
  %v352 = vld [vmem:[%s1 + $0x3c8] sm:$0xff]
  %v353 = vld [vmem:[%s1 + $0x3d0] sm:$0xff]
  %v354 = vld [vmem:[%s1 + $0x3d8] sm:$0xff]
  %v355 = vld [vmem:[%s1 + $0x3e0] sm:$0xff]
  %v356 = vld [vmem:[%s1 + $0x3e8] sm:$0xff]
  %v357 = vld [vmem:[%s1 + $0x3f0] sm:$0xff]
  %v358 = vld [vmem:[%s1 + $0x3f8] sm:$0xff]
  %v359 = vld [vmem:[%s1 + $0x400] sm:$0xff]
  %v360 = vld [vmem:[%s1 + $0x408] sm:$0xff]
  %v361 = vld [vmem:[%s1 + $0x410] sm:$0xff]
  %v362 = vld [vmem:[%s1 + $0x418] sm:$0xff]
  %v363 = vld [vmem:[%s1 + $0x420] sm:$0xff]
  %v364 = vld [vmem:[%s1 + $0x428] sm:$0xff]
  %v365 = vld [vmem:[%s1 + $0x430] sm:$0xff]
  %v366 = vld [vmem:[%s1 + $0x438] sm:$0xff]
  %v367 = vld [vmem:[%s1 + $0x440] sm:$0xff]
  %v368 = vld [vmem:[%s1 + $0x448] sm:$0xff]
  %v369 = vld [vmem:[%s1 + $0x450] sm:$0xff]
  %v370 = vld [vmem:[%s1 + $0x458] sm:$0xff]
  %v371 = vld [vmem:[%s1 + $0x460] sm:$0xff]
  %v372 = vld [vmem:[%s1 + $0x468] sm:$0xff]
  %v373 = vld [vmem:[%s1 + $0x470] sm:$0xff]
  %v374 = vld [vmem:[%s1 + $0x478] sm:$0xff]
  %v375 = vld [vmem:[%s1 + $0x480] sm:$0xff]
  %v376 = vld [vmem:[%s1 + $0x488] sm:$0xff]
  %v377 = vld [vmem:[%s1 + $0x490] sm:$0xff]
  %v378 = vld [vmem:[%s1 + $0x498] sm:$0xff]
  %v379 = vld [vmem:[%s1 + $0x4a0] sm:$0xff]
  %v380 = vld [vmem:[%s1 + $0x4a8] sm:$0xff]
  %v381 = vld [vmem:[%s1 + $0x4b0] sm:$0xff]
  %v382 = vld [vmem:[%s1 + $0x4b8] sm:$0xff]
  %v383 = vld [vmem:[%s1 + $0x4c0] sm:$0xff]
  %v384 = vld [vmem:[%s1 + $0x4c8] sm:$0xff]
  %v385 = vld [vmem:[%s1 + $0x4d0] sm:$0xff]
  %v386 = vld [vmem:[%s1 + $0x4d8] sm:$0xff]
  %v387 = vld [vmem:[%s1 + $0x4e0] sm:$0xff]
  %v388 = vld [vmem:[%s1 + $0x4e8] sm:$0xff]
  %v389 = vld [vmem:[%s1 + $0x4f0] sm:$0xff]
  %v390 = vld [vmem:[%s1 + $0x4f8] sm:$0xff]
  %v391 = vld [vmem:[%s1 + $0x500] sm:$0xff]
  %v392 = vld [vmem:[%s1 + $0x508] sm:$0xff]
  %v393 = vld [vmem:[%s1 + $0x510] sm:$0xff]
  %v394 = vld [vmem:[%s1 + $0x518] sm:$0xff]
  %v395 = vld [vmem:[%s1 + $0x520] sm:$0xff]
  %v396 = vld [vmem:[%s1 + $0x528] sm:$0xff]
  %v397 = vld [vmem:[%s1 + $0x530] sm:$0xff]
  %v398 = vld [vmem:[%s1 + $0x538] sm:$0xff]
  %v399 = vld [vmem:[%s1 + $0x540] sm:$0xff]
  %v400 = vld [vmem:[%s1 + $0x548] sm:$0xff]
  %v401 = vld [vmem:[%s1 + $0x550] sm:$0xff]
  %v402 = vld [vmem:[%s1 + $0x558] sm:$0xff]
  %v403 = vld [vmem:[%s1 + $0x560] sm:$0xff]
  %v404 = vld [vmem:[%s1 + $0x568] sm:$0xff]
  %v405 = vld [vmem:[%s1 + $0x570] sm:$0xff]
  %v406 = vld [vmem:[%s1 + $0x578] sm:$0xff]
  %v407 = vld [vmem:[%s1 + $0x580] sm:$0xff]
  %v408 = vld [vmem:[%s1 + $0x588] sm:$0xff]
  %v409 = vld [vmem:[%s1 + $0x590] sm:$0xff]
  %v410 = vld [vmem:[%s1 + $0x598] sm:$0xff]
  %v411 = vld [vmem:[%s1 + $0x5a0] sm:$0xff]
  %v412 = vld [vmem:[%s1 + $0x5a8] sm:$0xff]
  %v413 = vld [vmem:[%s1 + $0x5b0] sm:$0xff]
  %v414 = vld [vmem:[%s1 + $0x5b8] sm:$0xff]
  %v415 = vld [vmem:[%s1 + $0x5c0] sm:$0xff]
  %v416 = vld [vmem:[%s1 + $0x5c8] sm:$0xff]
  %v417 = vld [vmem:[%s1 + $0x5d0] sm:$0xff]
  %v418 = vld [vmem:[%s1 + $0x5d8] sm:$0xff]
  %v419 = vld [vmem:[%s1 + $0x5e0] sm:$0xff]
  %v420 = vld [vmem:[%s1 + $0x5e8] sm:$0xff]
  %v421 = vld [vmem:[%s1 + $0x5f0] sm:$0xff]
  %v422 = vld [vmem:[%s1 + $0x5f8] sm:$0xff]
  %v423 = vld [vmem:[%s1 + $0x600] sm:$0xff]
  %v424 = vld [vmem:[%s1 + $0x608] sm:$0xff]
  %v425 = vld [vmem:[%s1 + $0x610] sm:$0xff]
  %v426 = vld [vmem:[%s1 + $0x618] sm:$0xff]
  %v427 = vld [vmem:[%s1 + $0x620] sm:$0xff]
  %v428 = vld [vmem:[%s1 + $0x628] sm:$0xff]
  %v429 = vld [vmem:[%s1 + $0x630] sm:$0xff]
  %v430 = vld [vmem:[%s1 + $0x638] sm:$0xff]
  %v431 = vld [vmem:[%s1 + $0x640] sm:$0xff]
  %v432 = vld [vmem:[%s1 + $0x648] sm:$0xff]
  %v433 = vld [vmem:[%s1 + $0x650] sm:$0xff]
  %v434 = vld [vmem:[%s1 + $0x658] sm:$0xff]
  %v435 = vld [vmem:[%s1 + $0x660] sm:$0xff]
  %v436 = vld [vmem:[%s1 + $0x668] sm:$0xff]
  %v437 = vld [vmem:[%s1 + $0x670] sm:$0xff]
  %v438 = vld [vmem:[%s1 + $0x678] sm:$0xff]
  %v439 = vld [vmem:[%s1 + $0x680] sm:$0xff]
  %v440 = vld [vmem:[%s1 + $0x688] sm:$0xff]
  %v441 = vld [vmem:[%s1 + $0x690] sm:$0xff]
  %v442 = vld [vmem:[%s1 + $0x698] sm:$0xff]
  %v443 = vld [vmem:[%s1 + $0x6a0] sm:$0xff]
  %v444 = vld [vmem:[%s1 + $0x6a8] sm:$0xff]
  %v445 = vld [vmem:[%s1 + $0x6b0] sm:$0xff]
  %v446 = vld [vmem:[%s1 + $0x6b8] sm:$0xff]
  %v447 = vld [vmem:[%s1 + $0x6c0] sm:$0xff]
  %v448 = vld [vmem:[%s1 + $0x6c8] sm:$0xff]
  %v449 = vld [vmem:[%s1 + $0x6d0] sm:$0xff]
  %v450 = vld [vmem:[%s1 + $0x6d8] sm:$0xff]
  %v451 = vld [vmem:[%s1 + $0x6e0] sm:$0xff]
  %v452 = vld [vmem:[%s1 + $0x6e8] sm:$0xff]
  %v453 = vld [vmem:[%s1 + $0x6f0] sm:$0xff]
  %v454 = vld [vmem:[%s1 + $0x6f8] sm:$0xff]
  %v455 = vld [vmem:[%s1 + $0x700] sm:$0xff]
  %v456 = vld [vmem:[%s1 + $0x708] sm:$0xff]
  %v457 = vld [vmem:[%s1 + $0x710] sm:$0xff]
  %v458 = vld [vmem:[%s1 + $0x718] sm:$0xff]
  %v459 = vld [vmem:[%s1 + $0x720] sm:$0xff]
  %v460 = vld [vmem:[%s1 + $0x728] sm:$0xff]
  %v461 = vld [vmem:[%s1 + $0x730] sm:$0xff]
  %v462 = vld [vmem:[%s1 + $0x738] sm:$0xff]
  %v463 = vld [vmem:[%s1 + $0x740] sm:$0xff]
  %v464 = vld [vmem:[%s1 + $0x748] sm:$0xff]
  %v465 = vld [vmem:[%s1 + $0x750] sm:$0xff]
  %v466 = vld [vmem:[%s1 + $0x758] sm:$0xff]
  %v467 = vld [vmem:[%s1 + $0x760] sm:$0xff]
  %v468 = vld [vmem:[%s1 + $0x768] sm:$0xff]
  %v469 = vld [vmem:[%s1 + $0x770] sm:$0xff]
  %v470 = vld [vmem:[%s1 + $0x778] sm:$0xff]
  %v471 = vld [vmem:[%s1 + $0x780] sm:$0xff]
  %v472 = vld [vmem:[%s1 + $0x788] sm:$0xff]
  %v473 = vld [vmem:[%s1 + $0x790] sm:$0xff]
  %v474 = vld [vmem:[%s1 + $0x798] sm:$0xff]
  %v475 = vld [vmem:[%s1 + $0x7a0] sm:$0xff]
  %v476 = vld [vmem:[%s1 + $0x7a8] sm:$0xff]
  %v477 = vld [vmem:[%s1 + $0x7b0] sm:$0xff]
  %v478 = vld [vmem:[%s1 + $0x7b8] sm:$0xff]
  %v479 = vld [vmem:[%s1 + $0x7c0] sm:$0xff]
  %v480 = vld [vmem:[%s1 + $0x7c8] sm:$0xff]
  %v481 = vld [vmem:[%s1 + $0x7d0] sm:$0xff]
  %v482 = vld [vmem:[%s1 + $0x7d8] sm:$0xff]
  %v483 = vld [vmem:[%s1 + $0x7e0] sm:$0xff]
  %v484 = vld [vmem:[%s1 + $0x7e8] sm:$0xff]
  %v485 = vld [vmem:[%s1 + $0x7f0] sm:$0xff]
  %v486 = vld [vmem:[%s1 + $0x7f8] sm:$0xff]
  %v487 = vld [vmem:[%s1 + $0x800] sm:$0xff]
  %v488 = vld [vmem:[%s1 + $0x808] sm:$0xff]
  %v489 = vld [vmem:[%s1 + $0x810] sm:$0xff]
  %v490 = vld [vmem:[%s1 + $0x818] sm:$0xff]
  %v491 = vld [vmem:[%s1 + $0x820] sm:$0xff]
  %v492 = vld [vmem:[%s1 + $0x828] sm:$0xff]
  %v493 = vld [vmem:[%s1 + $0x830] sm:$0xff]
  %v494 = vld [vmem:[%s1 + $0x838] sm:$0xff]
  %v495 = vld [vmem:[%s1 + $0x840] sm:$0xff]
  %v496 = vld [vmem:[%s1 + $0x848] sm:$0xff]
  %v497 = vld [vmem:[%s1 + $0x850] sm:$0xff]
  %v498 = vld [vmem:[%s1 + $0x858] sm:$0xff]
  %v499 = vld [vmem:[%s1 + $0x860] sm:$0xff]
  %v500 = vld [vmem:[%s1 + $0x868] sm:$0xff]
  %v501 = vld [vmem:[%s1 + $0x870] sm:$0xff]
  %v502 = vld [vmem:[%s1 + $0x878] sm:$0xff]
  %v503 = vld [vmem:[%s1 + $0x880] sm:$0xff]
  %v504 = vld [vmem:[%s1 + $0x888] sm:$0xff]
  %v505 = vld [vmem:[%s1 + $0x890] sm:$0xff]
  %v506 = vld [vmem:[%s1 + $0x898] sm:$0xff]
  %v507 = vld [vmem:[%s1 + $0x8a0] sm:$0xff]
  %v508 = vld [vmem:[%s1 + $0x8a8] sm:$0xff]
  %v509 = vld [vmem:[%s1 + $0x8b0] sm:$0xff]
  %v510 = vld [vmem:[%s1 + $0x8b8] sm:$0xff]
  %v511 = vld [vmem:[%s1 + $0x8c0] sm:$0xff]
  %v512 = vld [vmem:[%s1 + $0x8c8] sm:$0xff]
  %v513 = vld [vmem:[%s1 + $0x8d0] sm:$0xff]
  %v514 = vld [vmem:[%s1 + $0x8d8] sm:$0xff]
  %v515 = vld [vmem:[%s1 + $0x8e0] sm:$0xff]
  %v516 = vld [vmem:[%s1 + $0x8e8] sm:$0xff]
  %v517 = vld [vmem:[%s1 + $0x8f0] sm:$0xff]
  %v518 = vld [vmem:[%s1 + $0x8f8] sm:$0xff]
  %v599 = vunpack.c.l.b16 %v151
  %v600 = vunpack.c.h.b16 %v151
  %v601 = vunpack.c.l.b16 %v152
  %v602 = vunpack.c.h.b16 %v152
  %v603 = vunpack.c.l.b16 %v153
  %v604 = vunpack.c.h.b16 %v153
  %v605 = vunpack.c.l.b16 %v154
  %v606 = vunpack.c.h.b16 %v154
  %v607 = vunpack.c.l.b16 %v155
  %v608 = vunpack.c.l.b16 %v156
  %v609 = vunpack.c.h.b16 %v156
  %v610 = vunpack.c.l.b16 %v157
  %v611 = vunpack.c.h.b16 %v157
  %v612 = vunpack.c.l.b16 %v158
  %v613 = vunpack.c.h.b16 %v158
  %v614 = vunpack.c.l.b16 %v159
  %v615 = vunpack.c.h.b16 %v159
  %v616 = vunpack.c.l.b16 %v160
  %v617 = vunpack.c.l.b16 %v161
  %v618 = vunpack.c.h.b16 %v161
  %v619 = vunpack.c.l.b16 %v162
  %v620 = vunpack.c.h.b16 %v162
  %v621 = vunpack.c.l.b16 %v163
  %v622 = vunpack.c.h.b16 %v163
  %v623 = vunpack.c.l.b16 %v164
  %v624 = vunpack.c.h.b16 %v164
  %v625 = vunpack.c.l.b16 %v165
  %v626 = vunpack.c.l.b16 %v166
  %v627 = vunpack.c.h.b16 %v166
  %v628 = vunpack.c.l.b16 %v167
  %v629 = vunpack.c.h.b16 %v167
  %v630 = vunpack.c.l.b16 %v168
  %v631 = vunpack.c.h.b16 %v168
  %v632 = vunpack.c.l.b16 %v169
  %v633 = vunpack.c.h.b16 %v169
  %v634 = vunpack.c.l.b16 %v170
  %v635 = vunpack.c.l.b16 %v171
  %v636 = vunpack.c.h.b16 %v171
  %v637 = vunpack.c.l.b16 %v172
  %v638 = vunpack.c.h.b16 %v172
  %v639 = vunpack.c.l.b16 %v173
  %v640 = vunpack.c.h.b16 %v173
  %v641 = vunpack.c.l.b16 %v174
  %v642 = vunpack.c.h.b16 %v174
  %v643 = vunpack.c.l.b16 %v175
  %v644 = vunpack.c.l.b16 %v176
  %v645 = vunpack.c.h.b16 %v176
  %v646 = vunpack.c.l.b16 %v177
  %v647 = vunpack.c.h.b16 %v177
  %v648 = vunpack.c.l.b16 %v178
  %v649 = vunpack.c.h.b16 %v178
  %v650 = vunpack.c.l.b16 %v179
  %v651 = vunpack.c.h.b16 %v179
  %v652 = vunpack.c.l.b16 %v180
  %v653 = vunpack.c.l.b16 %v181
  %v654 = vunpack.c.h.b16 %v181
  %v655 = vunpack.c.l.b16 %v182
  %v656 = vunpack.c.h.b16 %v182
  %v657 = vunpack.c.l.b16 %v183
  %v658 = vunpack.c.h.b16 %v183
  %v659 = vunpack.c.l.b16 %v184
  %v660 = vunpack.c.h.b16 %v184
  %v661 = vunpack.c.l.b16 %v185
  %v662 = vunpack.c.l.b16 %v186
  %v663 = vunpack.c.h.b16 %v186
  %v664 = vunpack.c.l.b16 %v187
  %v665 = vunpack.c.h.b16 %v187
  %v666 = vunpack.c.l.b16 %v188
  %v667 = vunpack.c.h.b16 %v188
  %v668 = vunpack.c.l.b16 %v189
  %v669 = vunpack.c.h.b16 %v189
  %v670 = vunpack.c.l.b16 %v190
  %v671 = vunpack.c.l.b16 %v191
  %v672 = vunpack.c.h.b16 %v191
  %v673 = vunpack.c.l.b16 %v192
  %v674 = vunpack.c.h.b16 %v192
  %v675 = vunpack.c.l.b16 %v193
  %v676 = vunpack.c.h.b16 %v193
  %v677 = vunpack.c.l.b16 %v194
  %v678 = vunpack.c.h.b16 %v194
  %v679 = vunpack.c.l.b16 %v195
  %v680 = vunpack.c.l.b16 %v196
  %v681 = vunpack.c.h.b16 %v196
  %v682 = vunpack.c.l.b16 %v197
  %v683 = vunpack.c.h.b16 %v197
  %v684 = vunpack.c.l.b16 %v198
  %v685 = vunpack.c.h.b16 %v198
  %v686 = vunpack.c.l.b16 %v199
  %v687 = vunpack.c.h.b16 %v199
  %v688 = vunpack.c.l.b16 %v200
  %v689 = vunpack.c.l.b16 %v201
  %v690 = vunpack.c.h.b16 %v201
  %v691 = vunpack.c.l.b16 %v202
  %v692 = vunpack.c.h.b16 %v202
  %v693 = vunpack.c.l.b16 %v203
  %v694 = vunpack.c.h.b16 %v203
  %v695 = vunpack.c.l.b16 %v204
  %v696 = vunpack.c.h.b16 %v204
  %v697 = vunpack.c.l.b16 %v205
  %v698 = vunpack.c.l.b16 %v206
  %v699 = vunpack.c.h.b16 %v206
  %v700 = vunpack.c.l.b16 %v207
  %v701 = vunpack.c.h.b16 %v207
  %v702 = vunpack.c.l.b16 %v208
  %v703 = vunpack.c.h.b16 %v208
  %v704 = vunpack.c.l.b16 %v209
  %v705 = vunpack.c.h.b16 %v209
  %v706 = vunpack.c.l.b16 %v210
  %v707 = vunpack.c.l.b16 %v211
  %v708 = vunpack.c.h.b16 %v211
  %v709 = vunpack.c.l.b16 %v212
  %v710 = vunpack.c.h.b16 %v212
  %v711 = vunpack.c.l.b16 %v213
  %v712 = vunpack.c.h.b16 %v213
  %v713 = vunpack.c.l.b16 %v214
  %v714 = vunpack.c.h.b16 %v214
  %v715 = vunpack.c.l.b16 %v215
  %v716 = vunpack.c.l.b16 %v216
  %v717 = vunpack.c.h.b16 %v216
  %v718 = vunpack.c.l.b16 %v217
  %v719 = vunpack.c.h.b16 %v217
  %v720 = vunpack.c.l.b16 %v218
  %v721 = vunpack.c.h.b16 %v218
  %v722 = vunpack.c.l.b16 %v219
  %v723 = vunpack.c.h.b16 %v219
  %v724 = vunpack.c.l.b16 %v220
  %v725 = vunpack.c.l.b16 %v221
  %v726 = vunpack.c.h.b16 %v221
  %v727 = vunpack.c.l.b16 %v222
  %v728 = vunpack.c.h.b16 %v222
  %v729 = vunpack.c.l.b16 %v223
  %v730 = vunpack.c.h.b16 %v223
  %v731 = vunpack.c.l.b16 %v224
  %v732 = vunpack.c.h.b16 %v224
  %v733 = vunpack.c.l.b16 %v225
  %v734 = vunpack.c.l.b16 %v226
  %v735 = vunpack.c.h.b16 %v226
  %v736 = vunpack.c.l.b16 %v227
  %v737 = vunpack.c.h.b16 %v227
  %v738 = vunpack.c.l.b16 %v228
  %v739 = vunpack.c.h.b16 %v228
  %v740 = vunpack.c.l.b16 %v229
  %v741 = vunpack.c.h.b16 %v229
  %v742 = vunpack.c.l.b16 %v230
  %v743 = vpack.c.b16 %v608, %v599
  %v744 = vpack.c.b16 %v609, %v600
  %v745 = vpack.c.b16 %v610, %v601
  %v746 = vpack.c.b16 %v611, %v602
  %v747 = vpack.c.b16 %v612, %v603
  %v748 = vpack.c.b16 %v613, %v604
  %v749 = vpack.c.b16 %v614, %v605
  %v750 = vpack.c.b16 %v615, %v606
  %v751 = vpack.c.b16 %v616, %v607
  %v752 = vpack.c.b16 %v626, %v617
  %v753 = vpack.c.b16 %v627, %v618
  %v754 = vpack.c.b16 %v628, %v619
  %v755 = vpack.c.b16 %v629, %v620
  %v756 = vpack.c.b16 %v630, %v621
  %v757 = vpack.c.b16 %v631, %v622
  %v758 = vpack.c.b16 %v632, %v623
  %v759 = vpack.c.b16 %v633, %v624
  %v760 = vpack.c.b16 %v634, %v625
  %v761 = vpack.c.b16 %v644, %v635
  %v762 = vpack.c.b16 %v645, %v636
  %v763 = vpack.c.b16 %v646, %v637
  %v764 = vpack.c.b16 %v647, %v638
  %v765 = vpack.c.b16 %v648, %v639
  %v766 = vpack.c.b16 %v649, %v640
  %v767 = vpack.c.b16 %v650, %v641
  %v768 = vpack.c.b16 %v651, %v642
  %v769 = vpack.c.b16 %v652, %v643
  %v770 = vpack.c.b16 %v662, %v653
  %v771 = vpack.c.b16 %v663, %v654
  %v772 = vpack.c.b16 %v664, %v655
  %v773 = vpack.c.b16 %v665, %v656
  %v774 = vpack.c.b16 %v666, %v657
  %v775 = vpack.c.b16 %v667, %v658
  %v776 = vpack.c.b16 %v668, %v659
  %v777 = vpack.c.b16 %v669, %v660
  %v778 = vpack.c.b16 %v670, %v661
  %v779 = vpack.c.b16 %v680, %v671
  %v780 = vpack.c.b16 %v681, %v672
  %v781 = vpack.c.b16 %v682, %v673
  %v782 = vpack.c.b16 %v683, %v674
  %v783 = vpack.c.b16 %v684, %v675
  %v784 = vpack.c.b16 %v685, %v676
  %v785 = vpack.c.b16 %v686, %v677
  %v786 = vpack.c.b16 %v687, %v678
  %v787 = vpack.c.b16 %v688, %v679
  %v788 = vpack.c.b16 %v698, %v689
  %v789 = vpack.c.b16 %v699, %v690
  %v790 = vpack.c.b16 %v700, %v691
  %v791 = vpack.c.b16 %v701, %v692
  %v792 = vpack.c.b16 %v702, %v693
  %v793 = vpack.c.b16 %v703, %v694
  %v794 = vpack.c.b16 %v704, %v695
  %v795 = vpack.c.b16 %v705, %v696
  %v796 = vpack.c.b16 %v706, %v697
  %v797 = vpack.c.b16 %v716, %v707
  %v798 = vpack.c.b16 %v717, %v708
  %v799 = vpack.c.b16 %v718, %v709
  %v800 = vpack.c.b16 %v719, %v710
  %v801 = vpack.c.b16 %v720, %v711
  %v802 = vpack.c.b16 %v721, %v712
  %v803 = vpack.c.b16 %v722, %v713
  %v804 = vpack.c.b16 %v723, %v714
  %v805 = vpack.c.b16 %v724, %v715
  %v806 = vpack.c.b16 %v734, %v725
  %v807 = vpack.c.b16 %v735, %v726
  %v808 = vpack.c.b16 %v736, %v727
  %v809 = vpack.c.b16 %v737, %v728
  %v810 = vpack.c.b16 %v738, %v729
  %v811 = vpack.c.b16 %v739, %v730
  %v812 = vpack.c.b16 %v740, %v731
  %v813 = vpack.c.b16 %v741, %v732
  %v814 = vpack.c.b16 %v742, %v733
  %v1175 = vunpack.c.l.b16 %v231
  %v1176 = vunpack.c.h.b16 %v231
  %v1177 = vunpack.c.l.b16 %v232
  %v1178 = vunpack.c.h.b16 %v232
  %v1179 = vunpack.c.l.b16 %v233
  %v1180 = vunpack.c.h.b16 %v233
  %v1181 = vunpack.c.l.b16 %v234
  %v1182 = vunpack.c.h.b16 %v234
  %v1183 = vunpack.c.l.b16 %v235
  %v1184 = vunpack.c.h.b16 %v235
  %v1185 = vunpack.c.l.b16 %v236
  %v1186 = vunpack.c.h.b16 %v236
  %v1187 = vunpack.c.l.b16 %v237
  %v1188 = vunpack.c.h.b16 %v237
  %v1189 = vunpack.c.l.b16 %v238
  %v1190 = vunpack.c.h.b16 %v238
  %v1191 = vunpack.c.l.b16 %v239
  %v1192 = vunpack.c.h.b16 %v239
  %v1193 = vunpack.c.l.b16 %v240
  %v1194 = vunpack.c.h.b16 %v240
  %v1195 = vunpack.c.l.b16 %v241
  %v1196 = vunpack.c.h.b16 %v241
  %v1197 = vunpack.c.l.b16 %v242
  %v1198 = vunpack.c.h.b16 %v242
  %v1199 = vunpack.c.l.b16 %v243
  %v1200 = vunpack.c.h.b16 %v243
  %v1201 = vunpack.c.l.b16 %v244
  %v1202 = vunpack.c.h.b16 %v244
  %v1203 = vunpack.c.l.b16 %v245
  %v1204 = vunpack.c.h.b16 %v245
  %v1205 = vunpack.c.l.b16 %v246
  %v1206 = vunpack.c.h.b16 %v246
  %v1207 = vunpack.c.l.b16 %v247
  %v1208 = vunpack.c.h.b16 %v247
  %v1209 = vunpack.c.l.b16 %v248
  %v1210 = vunpack.c.h.b16 %v248
  %v1211 = vunpack.c.l.b16 %v249
  %v1212 = vunpack.c.h.b16 %v249
  %v1213 = vunpack.c.l.b16 %v250
  %v1214 = vunpack.c.h.b16 %v250
  %v1215 = vunpack.c.l.b16 %v251
  %v1216 = vunpack.c.h.b16 %v251
  %v1217 = vunpack.c.l.b16 %v252
  %v1218 = vunpack.c.h.b16 %v252
  %v1219 = vunpack.c.l.b16 %v253
  %v1220 = vunpack.c.h.b16 %v253
  %v1221 = vunpack.c.l.b16 %v254
  %v1222 = vunpack.c.h.b16 %v254
  %v1223 = vunpack.c.l.b16 %v255
  %v1224 = vunpack.c.h.b16 %v255
  %v1225 = vunpack.c.l.b16 %v256
  %v1226 = vunpack.c.h.b16 %v256
  %v1227 = vunpack.c.l.b16 %v257
  %v1228 = vunpack.c.h.b16 %v257
  %v1229 = vunpack.c.l.b16 %v258
  %v1230 = vunpack.c.h.b16 %v258
  %v1231 = vunpack.c.l.b16 %v259
  %v1232 = vunpack.c.h.b16 %v259
  %v1233 = vunpack.c.l.b16 %v260
  %v1234 = vunpack.c.h.b16 %v260
  %v1235 = vunpack.c.l.b16 %v261
  %v1236 = vunpack.c.h.b16 %v261
  %v1237 = vunpack.c.l.b16 %v262
  %v1238 = vunpack.c.h.b16 %v262
  %v1239 = vunpack.c.l.b16 %v263
  %v1240 = vunpack.c.h.b16 %v263
  %v1241 = vunpack.c.l.b16 %v264
  %v1242 = vunpack.c.h.b16 %v264
  %v1243 = vunpack.c.l.b16 %v265
  %v1244 = vunpack.c.h.b16 %v265
  %v1245 = vunpack.c.l.b16 %v266
  %v1246 = vunpack.c.h.b16 %v266
  %v1247 = vunpack.c.l.b16 %v267
  %v1248 = vunpack.c.h.b16 %v267
  %v1249 = vunpack.c.l.b16 %v268
  %v1250 = vunpack.c.h.b16 %v268
  %v1251 = vunpack.c.l.b16 %v269
  %v1252 = vunpack.c.h.b16 %v269
  %v1253 = vunpack.c.l.b16 %v270
  %v1254 = vunpack.c.h.b16 %v270
  %v1255 = vunpack.c.l.b16 %v271
  %v1256 = vunpack.c.h.b16 %v271
  %v1257 = vunpack.c.l.b16 %v272
  %v1258 = vunpack.c.h.b16 %v272
  %v1259 = vunpack.c.l.b16 %v273
  %v1260 = vunpack.c.h.b16 %v273
  %v1261 = vunpack.c.l.b16 %v274
  %v1262 = vunpack.c.h.b16 %v274
  %v1263 = vunpack.c.l.b16 %v275
  %v1264 = vunpack.c.h.b16 %v275
  %v1265 = vunpack.c.l.b16 %v276
  %v1266 = vunpack.c.h.b16 %v276
  %v1267 = vunpack.c.l.b16 %v277
  %v1268 = vunpack.c.h.b16 %v277
  %v1269 = vunpack.c.l.b16 %v278
  %v1270 = vunpack.c.h.b16 %v278
  %v1271 = vunpack.c.l.b16 %v279
  %v1272 = vunpack.c.h.b16 %v279
  %v1273 = vunpack.c.l.b16 %v280
  %v1274 = vunpack.c.h.b16 %v280
  %v1275 = vunpack.c.l.b16 %v281
  %v1276 = vunpack.c.h.b16 %v281
  %v1277 = vunpack.c.l.b16 %v282
  %v1278 = vunpack.c.h.b16 %v282
  %v1279 = vunpack.c.l.b16 %v283
  %v1280 = vunpack.c.h.b16 %v283
  %v1281 = vunpack.c.l.b16 %v284
  %v1282 = vunpack.c.h.b16 %v284
  %v1283 = vunpack.c.l.b16 %v285
  %v1284 = vunpack.c.h.b16 %v285
  %v1285 = vunpack.c.l.b16 %v286
  %v1286 = vunpack.c.h.b16 %v286
  %v1287 = vunpack.c.l.b16 %v287
  %v1288 = vunpack.c.h.b16 %v287
  %v1289 = vunpack.c.l.b16 %v288
  %v1290 = vunpack.c.h.b16 %v288
  %v1291 = vunpack.c.l.b16 %v289
  %v1292 = vunpack.c.h.b16 %v289
  %v1293 = vunpack.c.l.b16 %v290
  %v1294 = vunpack.c.h.b16 %v290
  %v1295 = vunpack.c.l.b16 %v291
  %v1296 = vunpack.c.h.b16 %v291
  %v1297 = vunpack.c.l.b16 %v292
  %v1298 = vunpack.c.h.b16 %v292
  %v1299 = vunpack.c.l.b16 %v293
  %v1300 = vunpack.c.h.b16 %v293
  %v1301 = vunpack.c.l.b16 %v294
  %v1302 = vunpack.c.h.b16 %v294
  %v1303 = vunpack.c.l.b16 %v295
  %v1304 = vunpack.c.h.b16 %v295
  %v1305 = vunpack.c.l.b16 %v296
  %v1306 = vunpack.c.h.b16 %v296
  %v1307 = vunpack.c.l.b16 %v297
  %v1308 = vunpack.c.h.b16 %v297
  %v1309 = vunpack.c.l.b16 %v298
  %v1310 = vunpack.c.h.b16 %v298
  %v1311 = vunpack.c.l.b16 %v299
  %v1312 = vunpack.c.h.b16 %v299
  %v1313 = vunpack.c.l.b16 %v300
  %v1314 = vunpack.c.h.b16 %v300
  %v1315 = vunpack.c.l.b16 %v301
  %v1316 = vunpack.c.h.b16 %v301
  %v1317 = vunpack.c.l.b16 %v302
  %v1318 = vunpack.c.h.b16 %v302
  %v1319 = vunpack.c.l.b16 %v303
  %v1320 = vunpack.c.h.b16 %v303
  %v1321 = vunpack.c.l.b16 %v304
  %v1322 = vunpack.c.h.b16 %v304
  %v1323 = vunpack.c.l.b16 %v305
  %v1324 = vunpack.c.h.b16 %v305
  %v1325 = vunpack.c.l.b16 %v306
  %v1326 = vunpack.c.h.b16 %v306
  %v1327 = vunpack.c.l.b16 %v307
  %v1328 = vunpack.c.h.b16 %v307
  %v1329 = vunpack.c.l.b16 %v308
  %v1330 = vunpack.c.h.b16 %v308
  %v1331 = vunpack.c.l.b16 %v309
  %v1332 = vunpack.c.h.b16 %v309
  %v1333 = vunpack.c.l.b16 %v310
  %v1334 = vunpack.c.h.b16 %v310
  %v1335 = vunpack.c.l.b16 %v311
  %v1336 = vunpack.c.h.b16 %v311
  %v1337 = vunpack.c.l.b16 %v312
  %v1338 = vunpack.c.h.b16 %v312
  %v1339 = vunpack.c.l.b16 %v313
  %v1340 = vunpack.c.h.b16 %v313
  %v1341 = vunpack.c.l.b16 %v314
  %v1342 = vunpack.c.h.b16 %v314
  %v1343 = vunpack.c.l.b16 %v315
  %v1344 = vunpack.c.h.b16 %v315
  %v1345 = vunpack.c.l.b16 %v316
  %v1346 = vunpack.c.h.b16 %v316
  %v1347 = vunpack.c.l.b16 %v317
  %v1348 = vunpack.c.h.b16 %v317
  %v1349 = vunpack.c.l.b16 %v318
  %v1350 = vunpack.c.h.b16 %v318
  %v1351 = vunpack.c.l.b16 %v319
  %v1352 = vunpack.c.h.b16 %v319
  %v1353 = vunpack.c.l.b16 %v320
  %v1354 = vunpack.c.h.b16 %v320
  %v1355 = vunpack.c.l.b16 %v321
  %v1356 = vunpack.c.h.b16 %v321
  %v1357 = vunpack.c.l.b16 %v322
  %v1358 = vunpack.c.h.b16 %v322
  %v1359 = vunpack.c.l.b16 %v323
  %v1360 = vunpack.c.h.b16 %v323
  %v1361 = vunpack.c.l.b16 %v324
  %v1362 = vunpack.c.h.b16 %v324
  %v1363 = vunpack.c.l.b16 %v325
  %v1364 = vunpack.c.h.b16 %v325
  %v1365 = vunpack.c.l.b16 %v326
  %v1366 = vunpack.c.h.b16 %v326
  %v1367 = vunpack.c.l.b16 %v327
  %v1368 = vunpack.c.h.b16 %v327
  %v1369 = vunpack.c.l.b16 %v328
  %v1370 = vunpack.c.h.b16 %v328
  %v1371 = vunpack.c.l.b16 %v329
  %v1372 = vunpack.c.h.b16 %v329
  %v1373 = vunpack.c.l.b16 %v330
  %v1374 = vunpack.c.h.b16 %v330
  %v1375 = vunpack.c.l.b16 %v331
  %v1376 = vunpack.c.h.b16 %v331
  %v1377 = vunpack.c.l.b16 %v332
  %v1378 = vunpack.c.h.b16 %v332
  %v1379 = vunpack.c.l.b16 %v333
  %v1380 = vunpack.c.h.b16 %v333
  %v1381 = vunpack.c.l.b16 %v334
  %v1382 = vunpack.c.h.b16 %v334
  %v1383 = vunpack.c.l.b16 %v335
  %v1384 = vunpack.c.h.b16 %v335
  %v1385 = vunpack.c.l.b16 %v336
  %v1386 = vunpack.c.h.b16 %v336
  %v1387 = vunpack.c.l.b16 %v337
  %v1388 = vunpack.c.h.b16 %v337
  %v1389 = vunpack.c.l.b16 %v338
  %v1390 = vunpack.c.h.b16 %v338
  %v1391 = vunpack.c.l.b16 %v339
  %v1392 = vunpack.c.h.b16 %v339
  %v1393 = vunpack.c.l.b16 %v340
  %v1394 = vunpack.c.h.b16 %v340
  %v1395 = vunpack.c.l.b16 %v341
  %v1396 = vunpack.c.h.b16 %v341
  %v1397 = vunpack.c.l.b16 %v342
  %v1398 = vunpack.c.h.b16 %v342
  %v1399 = vunpack.c.l.b16 %v343
  %v1400 = vunpack.c.h.b16 %v343
  %v1401 = vunpack.c.l.b16 %v344
  %v1402 = vunpack.c.h.b16 %v344
  %v1403 = vunpack.c.l.b16 %v345
  %v1404 = vunpack.c.h.b16 %v345
  %v1405 = vunpack.c.l.b16 %v346
  %v1406 = vunpack.c.h.b16 %v346
  %v1407 = vunpack.c.l.b16 %v347
  %v1408 = vunpack.c.h.b16 %v347
  %v1409 = vunpack.c.l.b16 %v348
  %v1410 = vunpack.c.h.b16 %v348
  %v1411 = vunpack.c.l.b16 %v349
  %v1412 = vunpack.c.h.b16 %v349
  %v1413 = vunpack.c.l.b16 %v350
  %v1414 = vunpack.c.h.b16 %v350
  %v1415 = vunpack.c.l.b16 %v351
  %v1416 = vunpack.c.h.b16 %v351
  %v1417 = vunpack.c.l.b16 %v352
  %v1418 = vunpack.c.h.b16 %v352
  %v1419 = vunpack.c.l.b16 %v353
  %v1420 = vunpack.c.h.b16 %v353
  %v1421 = vunpack.c.l.b16 %v354
  %v1422 = vunpack.c.h.b16 %v354
  %v1423 = vunpack.c.l.b16 %v355
  %v1424 = vunpack.c.h.b16 %v355
  %v1425 = vunpack.c.l.b16 %v356
  %v1426 = vunpack.c.h.b16 %v356
  %v1427 = vunpack.c.l.b16 %v357
  %v1428 = vunpack.c.h.b16 %v357
  %v1429 = vunpack.c.l.b16 %v358
  %v1430 = vunpack.c.h.b16 %v358
  %v1431 = vunpack.c.l.b16 %v359
  %v1432 = vunpack.c.h.b16 %v359
  %v1433 = vunpack.c.l.b16 %v360
  %v1434 = vunpack.c.h.b16 %v360
  %v1435 = vunpack.c.l.b16 %v361
  %v1436 = vunpack.c.h.b16 %v361
  %v1437 = vunpack.c.l.b16 %v362
  %v1438 = vunpack.c.h.b16 %v362
  %v1439 = vunpack.c.l.b16 %v363
  %v1440 = vunpack.c.h.b16 %v363
  %v1441 = vunpack.c.l.b16 %v364
  %v1442 = vunpack.c.h.b16 %v364
  %v1443 = vunpack.c.l.b16 %v365
  %v1444 = vunpack.c.h.b16 %v365
  %v1445 = vunpack.c.l.b16 %v366
  %v1446 = vunpack.c.h.b16 %v366
  %v1447 = vunpack.c.l.b16 %v367
  %v1448 = vunpack.c.h.b16 %v367
  %v1449 = vunpack.c.l.b16 %v368
  %v1450 = vunpack.c.h.b16 %v368
  %v1451 = vunpack.c.l.b16 %v369
  %v1452 = vunpack.c.h.b16 %v369
  %v1453 = vunpack.c.l.b16 %v370
  %v1454 = vunpack.c.h.b16 %v370
  %v1455 = vunpack.c.l.b16 %v371
  %v1456 = vunpack.c.h.b16 %v371
  %v1457 = vunpack.c.l.b16 %v372
  %v1458 = vunpack.c.h.b16 %v372
  %v1459 = vunpack.c.l.b16 %v373
  %v1460 = vunpack.c.h.b16 %v373
  %v1461 = vunpack.c.l.b16 %v374
  %v1462 = vunpack.c.h.b16 %v374
  %v1463 = vunpack.c.l.b16 %v375
  %v1464 = vunpack.c.h.b16 %v375
  %v1465 = vunpack.c.l.b16 %v376
  %v1466 = vunpack.c.h.b16 %v376
  %v1467 = vunpack.c.l.b16 %v377
  %v1468 = vunpack.c.h.b16 %v377
  %v1469 = vunpack.c.l.b16 %v378
  %v1470 = vunpack.c.h.b16 %v378
  %v1471 = vunpack.c.l.b16 %v379
  %v1472 = vunpack.c.h.b16 %v379
  %v1473 = vunpack.c.l.b16 %v380
  %v1474 = vunpack.c.h.b16 %v380
  %v1475 = vunpack.c.l.b16 %v381
  %v1476 = vunpack.c.h.b16 %v381
  %v1477 = vunpack.c.l.b16 %v382
  %v1478 = vunpack.c.h.b16 %v382
  %v1479 = vunpack.c.l.b16 %v383
  %v1480 = vunpack.c.h.b16 %v383
  %v1481 = vunpack.c.l.b16 %v384
  %v1482 = vunpack.c.h.b16 %v384
  %v1483 = vunpack.c.l.b16 %v385
  %v1484 = vunpack.c.h.b16 %v385
  %v1485 = vunpack.c.l.b16 %v386
  %v1486 = vunpack.c.h.b16 %v386
  %v1487 = vunpack.c.l.b16 %v387
  %v1488 = vunpack.c.h.b16 %v387
  %v1489 = vunpack.c.l.b16 %v388
  %v1490 = vunpack.c.h.b16 %v388
  %v1491 = vunpack.c.l.b16 %v389
  %v1492 = vunpack.c.h.b16 %v389
  %v1493 = vunpack.c.l.b16 %v390
  %v1494 = vunpack.c.h.b16 %v390
  %v1495 = vunpack.c.l.b16 %v391
  %v1496 = vunpack.c.h.b16 %v391
  %v1497 = vunpack.c.l.b16 %v392
  %v1498 = vunpack.c.h.b16 %v392
  %v1499 = vunpack.c.l.b16 %v393
  %v1500 = vunpack.c.h.b16 %v393
  %v1501 = vunpack.c.l.b16 %v394
  %v1502 = vunpack.c.h.b16 %v394
  %v1503 = vunpack.c.l.b16 %v395
  %v1504 = vunpack.c.h.b16 %v395
  %v1505 = vunpack.c.l.b16 %v396
  %v1506 = vunpack.c.h.b16 %v396
  %v1507 = vunpack.c.l.b16 %v397
  %v1508 = vunpack.c.h.b16 %v397
  %v1509 = vunpack.c.l.b16 %v398
  %v1510 = vunpack.c.h.b16 %v398
  %v1511 = vunpack.c.l.b16 %v399
  %v1512 = vunpack.c.h.b16 %v399
  %v1513 = vunpack.c.l.b16 %v400
  %v1514 = vunpack.c.h.b16 %v400
  %v1515 = vunpack.c.l.b16 %v401
  %v1516 = vunpack.c.h.b16 %v401
  %v1517 = vunpack.c.l.b16 %v402
  %v1518 = vunpack.c.h.b16 %v402
  %v1519 = vunpack.c.l.b16 %v403
  %v1520 = vunpack.c.h.b16 %v403
  %v1521 = vunpack.c.l.b16 %v404
  %v1522 = vunpack.c.h.b16 %v404
  %v1523 = vunpack.c.l.b16 %v405
  %v1524 = vunpack.c.h.b16 %v405
  %v1525 = vunpack.c.l.b16 %v406
  %v1526 = vunpack.c.h.b16 %v406
  %v1527 = vunpack.c.l.b16 %v407
  %v1528 = vunpack.c.h.b16 %v407
  %v1529 = vunpack.c.l.b16 %v408
  %v1530 = vunpack.c.h.b16 %v408
  %v1531 = vunpack.c.l.b16 %v409
  %v1532 = vunpack.c.h.b16 %v409
  %v1533 = vunpack.c.l.b16 %v410
  %v1534 = vunpack.c.h.b16 %v410
  %v1535 = vunpack.c.l.b16 %v411
  %v1536 = vunpack.c.h.b16 %v411
  %v1537 = vunpack.c.l.b16 %v412
  %v1538 = vunpack.c.h.b16 %v412
  %v1539 = vunpack.c.l.b16 %v413
  %v1540 = vunpack.c.h.b16 %v413
  %v1541 = vunpack.c.l.b16 %v414
  %v1542 = vunpack.c.h.b16 %v414
  %v1543 = vunpack.c.l.b16 %v415
  %v1544 = vunpack.c.h.b16 %v415
  %v1545 = vunpack.c.l.b16 %v416
  %v1546 = vunpack.c.h.b16 %v416
  %v1547 = vunpack.c.l.b16 %v417
  %v1548 = vunpack.c.h.b16 %v417
  %v1549 = vunpack.c.l.b16 %v418
  %v1550 = vunpack.c.h.b16 %v418
  %v1551 = vunpack.c.l.b16 %v419
  %v1552 = vunpack.c.h.b16 %v419
  %v1553 = vunpack.c.l.b16 %v420
  %v1554 = vunpack.c.h.b16 %v420
  %v1555 = vunpack.c.l.b16 %v421
  %v1556 = vunpack.c.h.b16 %v421
  %v1557 = vunpack.c.l.b16 %v422
  %v1558 = vunpack.c.h.b16 %v422
  %v1559 = vunpack.c.l.b16 %v423
  %v1560 = vunpack.c.h.b16 %v423
  %v1561 = vunpack.c.l.b16 %v424
  %v1562 = vunpack.c.h.b16 %v424
  %v1563 = vunpack.c.l.b16 %v425
  %v1564 = vunpack.c.h.b16 %v425
  %v1565 = vunpack.c.l.b16 %v426
  %v1566 = vunpack.c.h.b16 %v426
  %v1567 = vunpack.c.l.b16 %v427
  %v1568 = vunpack.c.h.b16 %v427
  %v1569 = vunpack.c.l.b16 %v428
  %v1570 = vunpack.c.h.b16 %v428
  %v1571 = vunpack.c.l.b16 %v429
  %v1572 = vunpack.c.h.b16 %v429
  %v1573 = vunpack.c.l.b16 %v430
  %v1574 = vunpack.c.h.b16 %v430
  %v1575 = vunpack.c.l.b16 %v431
  %v1576 = vunpack.c.h.b16 %v431
  %v1577 = vunpack.c.l.b16 %v432
  %v1578 = vunpack.c.h.b16 %v432
  %v1579 = vunpack.c.l.b16 %v433
  %v1580 = vunpack.c.h.b16 %v433
  %v1581 = vunpack.c.l.b16 %v434
  %v1582 = vunpack.c.h.b16 %v434
  %v1583 = vunpack.c.l.b16 %v435
  %v1584 = vunpack.c.h.b16 %v435
  %v1585 = vunpack.c.l.b16 %v436
  %v1586 = vunpack.c.h.b16 %v436
  %v1587 = vunpack.c.l.b16 %v437
  %v1588 = vunpack.c.h.b16 %v437
  %v1589 = vunpack.c.l.b16 %v438
  %v1590 = vunpack.c.h.b16 %v438
  %v1591 = vunpack.c.l.b16 %v439
  %v1592 = vunpack.c.h.b16 %v439
  %v1593 = vunpack.c.l.b16 %v440
  %v1594 = vunpack.c.h.b16 %v440
  %v1595 = vunpack.c.l.b16 %v441
  %v1596 = vunpack.c.h.b16 %v441
  %v1597 = vunpack.c.l.b16 %v442
  %v1598 = vunpack.c.h.b16 %v442
  %v1599 = vunpack.c.l.b16 %v443
  %v1600 = vunpack.c.h.b16 %v443
  %v1601 = vunpack.c.l.b16 %v444
  %v1602 = vunpack.c.h.b16 %v444
  %v1603 = vunpack.c.l.b16 %v445
  %v1604 = vunpack.c.h.b16 %v445
  %v1605 = vunpack.c.l.b16 %v446
  %v1606 = vunpack.c.h.b16 %v446
  %v1607 = vunpack.c.l.b16 %v447
  %v1608 = vunpack.c.h.b16 %v447
  %v1609 = vunpack.c.l.b16 %v448
  %v1610 = vunpack.c.h.b16 %v448
  %v1611 = vunpack.c.l.b16 %v449
  %v1612 = vunpack.c.h.b16 %v449
  %v1613 = vunpack.c.l.b16 %v450
  %v1614 = vunpack.c.h.b16 %v450
  %v1615 = vunpack.c.l.b16 %v451
  %v1616 = vunpack.c.h.b16 %v451
  %v1617 = vunpack.c.l.b16 %v452
  %v1618 = vunpack.c.h.b16 %v452
  %v1619 = vunpack.c.l.b16 %v453
  %v1620 = vunpack.c.h.b16 %v453
  %v1621 = vunpack.c.l.b16 %v454
  %v1622 = vunpack.c.h.b16 %v454
  %v1623 = vunpack.c.l.b16 %v455
  %v1624 = vunpack.c.h.b16 %v455
  %v1625 = vunpack.c.l.b16 %v456
  %v1626 = vunpack.c.h.b16 %v456
  %v1627 = vunpack.c.l.b16 %v457
  %v1628 = vunpack.c.h.b16 %v457
  %v1629 = vunpack.c.l.b16 %v458
  %v1630 = vunpack.c.h.b16 %v458
  %v1631 = vunpack.c.l.b16 %v459
  %v1632 = vunpack.c.h.b16 %v459
  %v1633 = vunpack.c.l.b16 %v460
  %v1634 = vunpack.c.h.b16 %v460
  %v1635 = vunpack.c.l.b16 %v461
  %v1636 = vunpack.c.h.b16 %v461
  %v1637 = vunpack.c.l.b16 %v462
  %v1638 = vunpack.c.h.b16 %v462
  %v1639 = vunpack.c.l.b16 %v463
  %v1640 = vunpack.c.h.b16 %v463
  %v1641 = vunpack.c.l.b16 %v464
  %v1642 = vunpack.c.h.b16 %v464
  %v1643 = vunpack.c.l.b16 %v465
  %v1644 = vunpack.c.h.b16 %v465
  %v1645 = vunpack.c.l.b16 %v466
  %v1646 = vunpack.c.h.b16 %v466
  %v1647 = vunpack.c.l.b16 %v467
  %v1648 = vunpack.c.h.b16 %v467
  %v1649 = vunpack.c.l.b16 %v468
  %v1650 = vunpack.c.h.b16 %v468
  %v1651 = vunpack.c.l.b16 %v469
  %v1652 = vunpack.c.h.b16 %v469
  %v1653 = vunpack.c.l.b16 %v470
  %v1654 = vunpack.c.h.b16 %v470
  %v1655 = vunpack.c.l.b16 %v471
  %v1656 = vunpack.c.h.b16 %v471
  %v1657 = vunpack.c.l.b16 %v472
  %v1658 = vunpack.c.h.b16 %v472
  %v1659 = vunpack.c.l.b16 %v473
  %v1660 = vunpack.c.h.b16 %v473
  %v1661 = vunpack.c.l.b16 %v474
  %v1662 = vunpack.c.h.b16 %v474
  %v1663 = vunpack.c.l.b16 %v475
  %v1664 = vunpack.c.h.b16 %v475
  %v1665 = vunpack.c.l.b16 %v476
  %v1666 = vunpack.c.h.b16 %v476
  %v1667 = vunpack.c.l.b16 %v477
  %v1668 = vunpack.c.h.b16 %v477
  %v1669 = vunpack.c.l.b16 %v478
  %v1670 = vunpack.c.h.b16 %v478
  %v1671 = vunpack.c.l.b16 %v479
  %v1672 = vunpack.c.h.b16 %v479
  %v1673 = vunpack.c.l.b16 %v480
  %v1674 = vunpack.c.h.b16 %v480
  %v1675 = vunpack.c.l.b16 %v481
  %v1676 = vunpack.c.h.b16 %v481
  %v1677 = vunpack.c.l.b16 %v482
  %v1678 = vunpack.c.h.b16 %v482
  %v1679 = vunpack.c.l.b16 %v483
  %v1680 = vunpack.c.h.b16 %v483
  %v1681 = vunpack.c.l.b16 %v484
  %v1682 = vunpack.c.h.b16 %v484
  %v1683 = vunpack.c.l.b16 %v485
  %v1684 = vunpack.c.h.b16 %v485
  %v1685 = vunpack.c.l.b16 %v486
  %v1686 = vunpack.c.h.b16 %v486
  %v1687 = vunpack.c.l.b16 %v487
  %v1688 = vunpack.c.h.b16 %v487
  %v1689 = vunpack.c.l.b16 %v488
  %v1690 = vunpack.c.h.b16 %v488
  %v1691 = vunpack.c.l.b16 %v489
  %v1692 = vunpack.c.h.b16 %v489
  %v1693 = vunpack.c.l.b16 %v490
  %v1694 = vunpack.c.h.b16 %v490
  %v1695 = vunpack.c.l.b16 %v491
  %v1696 = vunpack.c.h.b16 %v491
  %v1697 = vunpack.c.l.b16 %v492
  %v1698 = vunpack.c.h.b16 %v492
  %v1699 = vunpack.c.l.b16 %v493
  %v1700 = vunpack.c.h.b16 %v493
  %v1701 = vunpack.c.l.b16 %v494
  %v1702 = vunpack.c.h.b16 %v494
  %v1703 = vunpack.c.l.b16 %v495
  %v1704 = vunpack.c.h.b16 %v495
  %v1705 = vunpack.c.l.b16 %v496
  %v1706 = vunpack.c.h.b16 %v496
  %v1707 = vunpack.c.l.b16 %v497
  %v1708 = vunpack.c.h.b16 %v497
  %v1709 = vunpack.c.l.b16 %v498
  %v1710 = vunpack.c.h.b16 %v498
  %v1711 = vunpack.c.l.b16 %v499
  %v1712 = vunpack.c.h.b16 %v499
  %v1713 = vunpack.c.l.b16 %v500
  %v1714 = vunpack.c.h.b16 %v500
  %v1715 = vunpack.c.l.b16 %v501
  %v1716 = vunpack.c.h.b16 %v501
  %v1717 = vunpack.c.l.b16 %v502
  %v1718 = vunpack.c.h.b16 %v502
  %v1719 = vunpack.c.l.b16 %v503
  %v1720 = vunpack.c.h.b16 %v503
  %v1721 = vunpack.c.l.b16 %v504
  %v1722 = vunpack.c.h.b16 %v504
  %v1723 = vunpack.c.l.b16 %v505
  %v1724 = vunpack.c.h.b16 %v505
  %v1725 = vunpack.c.l.b16 %v506
  %v1726 = vunpack.c.h.b16 %v506
  %v1727 = vunpack.c.l.b16 %v507
  %v1728 = vunpack.c.h.b16 %v507
  %v1729 = vunpack.c.l.b16 %v508
  %v1730 = vunpack.c.h.b16 %v508
  %v1731 = vunpack.c.l.b16 %v509
  %v1732 = vunpack.c.h.b16 %v509
  %v1733 = vunpack.c.l.b16 %v510
  %v1734 = vunpack.c.h.b16 %v510
  %v1735 = vunpack.c.l.b16 %v511
  %v1736 = vunpack.c.h.b16 %v511
  %v1737 = vunpack.c.l.b16 %v512
  %v1738 = vunpack.c.h.b16 %v512
  %v1739 = vunpack.c.l.b16 %v513
  %v1740 = vunpack.c.h.b16 %v513
  %v1741 = vunpack.c.l.b16 %v514
  %v1742 = vunpack.c.h.b16 %v514
  %v1743 = vunpack.c.l.b16 %v515
  %v1744 = vunpack.c.h.b16 %v515
  %v1745 = vunpack.c.l.b16 %v516
  %v1746 = vunpack.c.h.b16 %v516
  %v1747 = vunpack.c.l.b16 %v517
  %v1748 = vunpack.c.h.b16 %v517
  %v1749 = vunpack.c.l.b16 %v518
  %v1750 = vunpack.c.h.b16 %v518
  %v1751 = vpack.c.b16 %v1179, %v1175
  %v1752 = vpack.c.b16 %v1180, %v1176
  %v1753 = vpack.c.b16 %v1181, %v1177
  %v1754 = vpack.c.b16 %v1182, %v1178
  %v1755 = vpack.c.b16 %v1187, %v1183
  %v1756 = vpack.c.b16 %v1188, %v1184
  %v1757 = vpack.c.b16 %v1189, %v1185
  %v1758 = vpack.c.b16 %v1190, %v1186
  %v1759 = vpack.c.b16 %v1195, %v1191
  %v1760 = vpack.c.b16 %v1196, %v1192
  %v1761 = vpack.c.b16 %v1197, %v1193
  %v1762 = vpack.c.b16 %v1198, %v1194
  %v1763 = vpack.c.b16 %v1203, %v1199
  %v1764 = vpack.c.b16 %v1204, %v1200
  %v1765 = vpack.c.b16 %v1205, %v1201
  %v1766 = vpack.c.b16 %v1206, %v1202
  %v1767 = vpack.c.b16 %v1211, %v1207
  %v1768 = vpack.c.b16 %v1212, %v1208
  %v1769 = vpack.c.b16 %v1213, %v1209
  %v1770 = vpack.c.b16 %v1214, %v1210
  %v1771 = vpack.c.b16 %v1219, %v1215
  %v1772 = vpack.c.b16 %v1220, %v1216
  %v1773 = vpack.c.b16 %v1221, %v1217
  %v1774 = vpack.c.b16 %v1222, %v1218
  %v1775 = vpack.c.b16 %v1227, %v1223
  %v1776 = vpack.c.b16 %v1228, %v1224
  %v1777 = vpack.c.b16 %v1229, %v1225
  %v1778 = vpack.c.b16 %v1230, %v1226
  %v1779 = vpack.c.b16 %v1235, %v1231
  %v1780 = vpack.c.b16 %v1236, %v1232
  %v1781 = vpack.c.b16 %v1237, %v1233
  %v1782 = vpack.c.b16 %v1238, %v1234
  %v1783 = vpack.c.b16 %v1243, %v1239
  %v1784 = vpack.c.b16 %v1244, %v1240
  %v1785 = vpack.c.b16 %v1245, %v1241
  %v1786 = vpack.c.b16 %v1246, %v1242
  %v1787 = vpack.c.b16 %v1251, %v1247
  %v1788 = vpack.c.b16 %v1252, %v1248
  %v1789 = vpack.c.b16 %v1253, %v1249
  %v1790 = vpack.c.b16 %v1254, %v1250
  %v1791 = vpack.c.b16 %v1259, %v1255
  %v1792 = vpack.c.b16 %v1260, %v1256
  %v1793 = vpack.c.b16 %v1261, %v1257
  %v1794 = vpack.c.b16 %v1262, %v1258
  %v1795 = vpack.c.b16 %v1267, %v1263
  %v1796 = vpack.c.b16 %v1268, %v1264
  %v1797 = vpack.c.b16 %v1269, %v1265
  %v1798 = vpack.c.b16 %v1270, %v1266
  %v1799 = vpack.c.b16 %v1275, %v1271
  %v1800 = vpack.c.b16 %v1276, %v1272
  %v1801 = vpack.c.b16 %v1277, %v1273
  %v1802 = vpack.c.b16 %v1278, %v1274
  %v1803 = vpack.c.b16 %v1283, %v1279
  %v1804 = vpack.c.b16 %v1284, %v1280
  %v1805 = vpack.c.b16 %v1285, %v1281
  %v1806 = vpack.c.b16 %v1286, %v1282
  %v1807 = vpack.c.b16 %v1291, %v1287
  %v1808 = vpack.c.b16 %v1292, %v1288
  %v1809 = vpack.c.b16 %v1293, %v1289
  %v1810 = vpack.c.b16 %v1294, %v1290
  %v1811 = vpack.c.b16 %v1299, %v1295
  %v1812 = vpack.c.b16 %v1300, %v1296
  %v1813 = vpack.c.b16 %v1301, %v1297
  %v1814 = vpack.c.b16 %v1302, %v1298
  %v1815 = vpack.c.b16 %v1307, %v1303
  %v1816 = vpack.c.b16 %v1308, %v1304
  %v1817 = vpack.c.b16 %v1309, %v1305
  %v1818 = vpack.c.b16 %v1310, %v1306
  %v1819 = vpack.c.b16 %v1315, %v1311
  %v1820 = vpack.c.b16 %v1316, %v1312
  %v1821 = vpack.c.b16 %v1317, %v1313
  %v1822 = vpack.c.b16 %v1318, %v1314
  %v1823 = vpack.c.b16 %v1323, %v1319
  %v1824 = vpack.c.b16 %v1324, %v1320
  %v1825 = vpack.c.b16 %v1325, %v1321
  %v1826 = vpack.c.b16 %v1326, %v1322
  %v1827 = vpack.c.b16 %v1331, %v1327
  %v1828 = vpack.c.b16 %v1332, %v1328
  %v1829 = vpack.c.b16 %v1333, %v1329
  %v1830 = vpack.c.b16 %v1334, %v1330
  %v1831 = vpack.c.b16 %v1339, %v1335
  %v1832 = vpack.c.b16 %v1340, %v1336
  %v1833 = vpack.c.b16 %v1341, %v1337
  %v1834 = vpack.c.b16 %v1342, %v1338
  %v1835 = vpack.c.b16 %v1347, %v1343
  %v1836 = vpack.c.b16 %v1348, %v1344
  %v1837 = vpack.c.b16 %v1349, %v1345
  %v1838 = vpack.c.b16 %v1350, %v1346
  %v1839 = vpack.c.b16 %v1355, %v1351
  %v1840 = vpack.c.b16 %v1356, %v1352
  %v1841 = vpack.c.b16 %v1357, %v1353
  %v1842 = vpack.c.b16 %v1358, %v1354
  %v1843 = vpack.c.b16 %v1363, %v1359
  %v1844 = vpack.c.b16 %v1364, %v1360
  %v1845 = vpack.c.b16 %v1365, %v1361
  %v1846 = vpack.c.b16 %v1366, %v1362
  %v1847 = vpack.c.b16 %v1371, %v1367
  %v1848 = vpack.c.b16 %v1372, %v1368
  %v1849 = vpack.c.b16 %v1373, %v1369
  %v1850 = vpack.c.b16 %v1374, %v1370
  %v1851 = vpack.c.b16 %v1379, %v1375
  %v1852 = vpack.c.b16 %v1380, %v1376
  %v1853 = vpack.c.b16 %v1381, %v1377
  %v1854 = vpack.c.b16 %v1382, %v1378
  %v1855 = vpack.c.b16 %v1387, %v1383
  %v1856 = vpack.c.b16 %v1388, %v1384
  %v1857 = vpack.c.b16 %v1389, %v1385
  %v1858 = vpack.c.b16 %v1390, %v1386
  %v1859 = vpack.c.b16 %v1395, %v1391
  %v1860 = vpack.c.b16 %v1396, %v1392
  %v1861 = vpack.c.b16 %v1397, %v1393
  %v1862 = vpack.c.b16 %v1398, %v1394
  %v1863 = vpack.c.b16 %v1403, %v1399
  %v1864 = vpack.c.b16 %v1404, %v1400
  %v1865 = vpack.c.b16 %v1405, %v1401
  %v1866 = vpack.c.b16 %v1406, %v1402
  %v1867 = vpack.c.b16 %v1411, %v1407
  %v1868 = vpack.c.b16 %v1412, %v1408
  %v1869 = vpack.c.b16 %v1413, %v1409
  %v1870 = vpack.c.b16 %v1414, %v1410
  %v1871 = vpack.c.b16 %v1419, %v1415
  %v1872 = vpack.c.b16 %v1420, %v1416
  %v1873 = vpack.c.b16 %v1421, %v1417
  %v1874 = vpack.c.b16 %v1422, %v1418
  %v1875 = vpack.c.b16 %v1427, %v1423
  %v1876 = vpack.c.b16 %v1428, %v1424
  %v1877 = vpack.c.b16 %v1429, %v1425
  %v1878 = vpack.c.b16 %v1430, %v1426
  %v1879 = vpack.c.b16 %v1435, %v1431
  %v1880 = vpack.c.b16 %v1436, %v1432
  %v1881 = vpack.c.b16 %v1437, %v1433
  %v1882 = vpack.c.b16 %v1438, %v1434
  %v1883 = vpack.c.b16 %v1443, %v1439
  %v1884 = vpack.c.b16 %v1444, %v1440
  %v1885 = vpack.c.b16 %v1445, %v1441
  %v1886 = vpack.c.b16 %v1446, %v1442
  %v1887 = vpack.c.b16 %v1451, %v1447
  %v1888 = vpack.c.b16 %v1452, %v1448
  %v1889 = vpack.c.b16 %v1453, %v1449
  %v1890 = vpack.c.b16 %v1454, %v1450
  %v1891 = vpack.c.b16 %v1459, %v1455
  %v1892 = vpack.c.b16 %v1460, %v1456
  %v1893 = vpack.c.b16 %v1461, %v1457
  %v1894 = vpack.c.b16 %v1462, %v1458
  %v1895 = vpack.c.b16 %v1467, %v1463
  %v1896 = vpack.c.b16 %v1468, %v1464
  %v1897 = vpack.c.b16 %v1469, %v1465
  %v1898 = vpack.c.b16 %v1470, %v1466
  %v1899 = vpack.c.b16 %v1475, %v1471
  %v1900 = vpack.c.b16 %v1476, %v1472
  %v1901 = vpack.c.b16 %v1477, %v1473
  %v1902 = vpack.c.b16 %v1478, %v1474
  %v1903 = vpack.c.b16 %v1483, %v1479
  %v1904 = vpack.c.b16 %v1484, %v1480
  %v1905 = vpack.c.b16 %v1485, %v1481
  %v1906 = vpack.c.b16 %v1486, %v1482
  %v1907 = vpack.c.b16 %v1491, %v1487
  %v1908 = vpack.c.b16 %v1492, %v1488
  %v1909 = vpack.c.b16 %v1493, %v1489
  %v1910 = vpack.c.b16 %v1494, %v1490
  %v1911 = vpack.c.b16 %v1499, %v1495
  %v1912 = vpack.c.b16 %v1500, %v1496
  %v1913 = vpack.c.b16 %v1501, %v1497
  %v1914 = vpack.c.b16 %v1502, %v1498
  %v1915 = vpack.c.b16 %v1507, %v1503
  %v1916 = vpack.c.b16 %v1508, %v1504
  %v1917 = vpack.c.b16 %v1509, %v1505
  %v1918 = vpack.c.b16 %v1510, %v1506
  %v1919 = vpack.c.b16 %v1515, %v1511
  %v1920 = vpack.c.b16 %v1516, %v1512
  %v1921 = vpack.c.b16 %v1517, %v1513
  %v1922 = vpack.c.b16 %v1518, %v1514
  %v1923 = vpack.c.b16 %v1523, %v1519
  %v1924 = vpack.c.b16 %v1524, %v1520
  %v1925 = vpack.c.b16 %v1525, %v1521
  %v1926 = vpack.c.b16 %v1526, %v1522
  %v1927 = vpack.c.b16 %v1531, %v1527
  %v1928 = vpack.c.b16 %v1532, %v1528
  %v1929 = vpack.c.b16 %v1533, %v1529
  %v1930 = vpack.c.b16 %v1534, %v1530
  %v1931 = vpack.c.b16 %v1539, %v1535
  %v1932 = vpack.c.b16 %v1540, %v1536
  %v1933 = vpack.c.b16 %v1541, %v1537
  %v1934 = vpack.c.b16 %v1542, %v1538
  %v1935 = vpack.c.b16 %v1547, %v1543
  %v1936 = vpack.c.b16 %v1548, %v1544
  %v1937 = vpack.c.b16 %v1549, %v1545
  %v1938 = vpack.c.b16 %v1550, %v1546
  %v1939 = vpack.c.b16 %v1555, %v1551
  %v1940 = vpack.c.b16 %v1556, %v1552
  %v1941 = vpack.c.b16 %v1557, %v1553
  %v1942 = vpack.c.b16 %v1558, %v1554
  %v1943 = vpack.c.b16 %v1563, %v1559
  %v1944 = vpack.c.b16 %v1564, %v1560
  %v1945 = vpack.c.b16 %v1565, %v1561
  %v1946 = vpack.c.b16 %v1566, %v1562
  %v1947 = vpack.c.b16 %v1571, %v1567
  %v1948 = vpack.c.b16 %v1572, %v1568
  %v1949 = vpack.c.b16 %v1573, %v1569
  %v1950 = vpack.c.b16 %v1574, %v1570
  %v1951 = vpack.c.b16 %v1579, %v1575
  %v1952 = vpack.c.b16 %v1580, %v1576
  %v1953 = vpack.c.b16 %v1581, %v1577
  %v1954 = vpack.c.b16 %v1582, %v1578
  %v1955 = vpack.c.b16 %v1587, %v1583
  %v1956 = vpack.c.b16 %v1588, %v1584
  %v1957 = vpack.c.b16 %v1589, %v1585
  %v1958 = vpack.c.b16 %v1590, %v1586
  %v1959 = vpack.c.b16 %v1595, %v1591
  %v1960 = vpack.c.b16 %v1596, %v1592
  %v1961 = vpack.c.b16 %v1597, %v1593
  %v1962 = vpack.c.b16 %v1598, %v1594
  %v1963 = vpack.c.b16 %v1603, %v1599
  %v1964 = vpack.c.b16 %v1604, %v1600
  %v1965 = vpack.c.b16 %v1605, %v1601
  %v1966 = vpack.c.b16 %v1606, %v1602
  %v1967 = vpack.c.b16 %v1611, %v1607
  %v1968 = vpack.c.b16 %v1612, %v1608
  %v1969 = vpack.c.b16 %v1613, %v1609
  %v1970 = vpack.c.b16 %v1614, %v1610
  %v1971 = vpack.c.b16 %v1619, %v1615
  %v1972 = vpack.c.b16 %v1620, %v1616
  %v1973 = vpack.c.b16 %v1621, %v1617
  %v1974 = vpack.c.b16 %v1622, %v1618
  %v1975 = vpack.c.b16 %v1627, %v1623
  %v1976 = vpack.c.b16 %v1628, %v1624
  %v1977 = vpack.c.b16 %v1629, %v1625
  %v1978 = vpack.c.b16 %v1630, %v1626
  %v1979 = vpack.c.b16 %v1635, %v1631
  %v1980 = vpack.c.b16 %v1636, %v1632
  %v1981 = vpack.c.b16 %v1637, %v1633
  %v1982 = vpack.c.b16 %v1638, %v1634
  %v1983 = vpack.c.b16 %v1643, %v1639
  %v1984 = vpack.c.b16 %v1644, %v1640
  %v1985 = vpack.c.b16 %v1645, %v1641
  %v1986 = vpack.c.b16 %v1646, %v1642
  %v1987 = vpack.c.b16 %v1651, %v1647
  %v1988 = vpack.c.b16 %v1652, %v1648
  %v1989 = vpack.c.b16 %v1653, %v1649
  %v1990 = vpack.c.b16 %v1654, %v1650
  %v1991 = vpack.c.b16 %v1659, %v1655
  %v1992 = vpack.c.b16 %v1660, %v1656
  %v1993 = vpack.c.b16 %v1661, %v1657
  %v1994 = vpack.c.b16 %v1662, %v1658
  %v1995 = vpack.c.b16 %v1667, %v1663
  %v1996 = vpack.c.b16 %v1668, %v1664
  %v1997 = vpack.c.b16 %v1669, %v1665
  %v1998 = vpack.c.b16 %v1670, %v1666
  %v1999 = vpack.c.b16 %v1675, %v1671
  %v2000 = vpack.c.b16 %v1676, %v1672
  %v2001 = vpack.c.b16 %v1677, %v1673
  %v2002 = vpack.c.b16 %v1678, %v1674
  %v2003 = vpack.c.b16 %v1683, %v1679
  %v2004 = vpack.c.b16 %v1684, %v1680
  %v2005 = vpack.c.b16 %v1685, %v1681
  %v2006 = vpack.c.b16 %v1686, %v1682
  %v2007 = vpack.c.b16 %v1691, %v1687
  %v2008 = vpack.c.b16 %v1692, %v1688
  %v2009 = vpack.c.b16 %v1693, %v1689
  %v2010 = vpack.c.b16 %v1694, %v1690
  %v2011 = vpack.c.b16 %v1699, %v1695
  %v2012 = vpack.c.b16 %v1700, %v1696
  %v2013 = vpack.c.b16 %v1701, %v1697
  %v2014 = vpack.c.b16 %v1702, %v1698
  %v2015 = vpack.c.b16 %v1707, %v1703
  %v2016 = vpack.c.b16 %v1708, %v1704
  %v2017 = vpack.c.b16 %v1709, %v1705
  %v2018 = vpack.c.b16 %v1710, %v1706
  %v2019 = vpack.c.b16 %v1715, %v1711
  %v2020 = vpack.c.b16 %v1716, %v1712
  %v2021 = vpack.c.b16 %v1717, %v1713
  %v2022 = vpack.c.b16 %v1718, %v1714
  %v2023 = vpack.c.b16 %v1723, %v1719
  %v2024 = vpack.c.b16 %v1724, %v1720
  %v2025 = vpack.c.b16 %v1725, %v1721
  %v2026 = vpack.c.b16 %v1726, %v1722
  %v2027 = vpack.c.b16 %v1731, %v1727
  %v2028 = vpack.c.b16 %v1732, %v1728
  %v2029 = vpack.c.b16 %v1733, %v1729
  %v2030 = vpack.c.b16 %v1734, %v1730
  %v2031 = vpack.c.b16 %v1739, %v1735
  %v2032 = vpack.c.b16 %v1740, %v1736
  %v2033 = vpack.c.b16 %v1741, %v1737
  %v2034 = vpack.c.b16 %v1742, %v1738
  %v2035 = vpack.c.b16 %v1747, %v1743
  %v2036 = vpack.c.b16 %v1748, %v1744
  %v2037 = vpack.c.b16 %v1749, %v1745
  %v2038 = vpack.c.b16 %v1750, %v1746
  %2327 = vmatpush.bf16.msra.mxu0 %v1779
  %2328 = vmatpush.bf16.msra.mxu0 %v1775
  %2329 = vmatpush.bf16.msra.mxu0 %v1771
  %2330 = vmatpush.bf16.msra.mxu0 %v1767
  %2331 = vmatpush.bf16.msra.mxu0 %v1763
  %2332 = vmatpush.bf16.msra.mxu0 %v1759
  %2333 = vmatpush.bf16.msra.mxu0 %v1755
  %2334 = vmatpush.bf16.msra.mxu0 %v1751
  %2335 = vmatmul.bf16.gmra.mxu0 %v743
  %v2336 = vpop.f32.mrf.mxu0
  %v2337 = vadd.f32 0.0, %v2336
  %v2338 = vpop.f32.mrf.mxu0
  %v2339 = vadd.f32 0.0, %v2338
  %2340 = vmatmul.bf16.gmra.mxu0 %v752
  %v2341 = vpop.f32.mrf.mxu0
  %v2342 = vadd.f32 0.0, %v2341
  %v2343 = vpop.f32.mrf.mxu0
  %v2344 = vadd.f32 0.0, %v2343
  %2345 = vmatmul.bf16.gmra.mxu0 %v761
  %v2346 = vpop.f32.mrf.mxu0
  %v2347 = vadd.f32 0.0, %v2346
  %v2348 = vpop.f32.mrf.mxu0
  %v2349 = vadd.f32 0.0, %v2348
  %2350 = vmatmul.bf16.gmra.mxu0 %v770
  %v2351 = vpop.f32.mrf.mxu0
  %v2352 = vadd.f32 0.0, %v2351
  %v2353 = vpop.f32.mrf.mxu0
  %v2354 = vadd.f32 0.0, %v2353
  %2355 = vmatmul.bf16.gmra.mxu0 %v779
  %v2356 = vpop.f32.mrf.mxu0
  %v2357 = vadd.f32 0.0, %v2356
  %v2358 = vpop.f32.mrf.mxu0
  %v2359 = vadd.f32 0.0, %v2358
  %2360 = vmatmul.bf16.gmra.mxu0 %v788
  %v2361 = vpop.f32.mrf.mxu0
  %v2362 = vadd.f32 0.0, %v2361
  %v2363 = vpop.f32.mrf.mxu0
  %v2364 = vadd.f32 0.0, %v2363
  %2365 = vmatmul.bf16.gmra.mxu0 %v797
  %v2366 = vpop.f32.mrf.mxu0
  %v2367 = vadd.f32 0.0, %v2366
  %v2368 = vpop.f32.mrf.mxu0
  %v2369 = vadd.f32 0.0, %v2368
  %2370 = vmatmul.bf16.gmra.mxu0 %v806
  %v2371 = vpop.f32.mrf.mxu0
  %v2372 = vadd.f32 0.0, %v2371
  %v2373 = vpop.f32.mrf.mxu0
  %v2374 = vadd.f32 0.0, %v2373
  %2375 = vdwg.mxu0
  %2376 = vmatpush.bf16.msra.mxu0 %v1811
  %2377 = vmatpush.bf16.msra.mxu0 %v1807
  %2378 = vmatpush.bf16.msra.mxu0 %v1803
  %2379 = vmatpush.bf16.msra.mxu0 %v1799
  %2380 = vmatpush.bf16.msra.mxu0 %v1795
  %2381 = vmatpush.bf16.msra.mxu0 %v1791
  %2382 = vmatpush.bf16.msra.mxu0 %v1787
  %2383 = vmatpush.bf16.msra.mxu0 %v1783
  %2384 = vmatmul.bf16.gmra.mxu0 %v744
  %v2385 = vpop.f32.mrf.mxu0
  %v2386 = vadd.f32 %v2337, %v2385
  %v2387 = vpop.f32.mrf.mxu0
  %v2388 = vadd.f32 %v2339, %v2387
  %2389 = vmatmul.bf16.gmra.mxu0 %v753
  %v2390 = vpop.f32.mrf.mxu0
  %v2391 = vadd.f32 %v2342, %v2390
  %v2392 = vpop.f32.mrf.mxu0
  %v2393 = vadd.f32 %v2344, %v2392
  %2394 = vmatmul.bf16.gmra.mxu0 %v762
  %v2395 = vpop.f32.mrf.mxu0
  %v2396 = vadd.f32 %v2347, %v2395
  %v2397 = vpop.f32.mrf.mxu0
  %v2398 = vadd.f32 %v2349, %v2397
  %2399 = vmatmul.bf16.gmra.mxu0 %v771
  %v2400 = vpop.f32.mrf.mxu0
  %v2401 = vadd.f32 %v2352, %v2400
  %v2402 = vpop.f32.mrf.mxu0
  %v2403 = vadd.f32 %v2354, %v2402
  %2404 = vmatmul.bf16.gmra.mxu0 %v780
  %v2405 = vpop.f32.mrf.mxu0
  %v2406 = vadd.f32 %v2357, %v2405
  %v2407 = vpop.f32.mrf.mxu0
  %v2408 = vadd.f32 %v2359, %v2407
  %2409 = vmatmul.bf16.gmra.mxu0 %v789
  %v2410 = vpop.f32.mrf.mxu0
  %v2411 = vadd.f32 %v2362, %v2410
  %v2412 = vpop.f32.mrf.mxu0
  %v2413 = vadd.f32 %v2364, %v2412
  %2414 = vmatmul.bf16.gmra.mxu0 %v798
  %v2415 = vpop.f32.mrf.mxu0
  %v2416 = vadd.f32 %v2367, %v2415
  %v2417 = vpop.f32.mrf.mxu0
  %v2418 = vadd.f32 %v2369, %v2417
  %2419 = vmatmul.bf16.gmra.mxu0 %v807
  %v2420 = vpop.f32.mrf.mxu0
  %v2421 = vadd.f32 %v2372, %v2420
  %v2422 = vpop.f32.mrf.mxu0
  %v2423 = vadd.f32 %v2374, %v2422
  %2424 = vdwg.mxu0
  %2425 = vmatpush.bf16.msra.mxu0 %v1843
  %2426 = vmatpush.bf16.msra.mxu0 %v1839
  %2427 = vmatpush.bf16.msra.mxu0 %v1835
  %2428 = vmatpush.bf16.msra.mxu0 %v1831
  %2429 = vmatpush.bf16.msra.mxu0 %v1827
  %2430 = vmatpush.bf16.msra.mxu0 %v1823
  %2431 = vmatpush.bf16.msra.mxu0 %v1819
  %2432 = vmatpush.bf16.msra.mxu0 %v1815
  %2433 = vmatmul.bf16.gmra.mxu0 %v745
  %v2434 = vpop.f32.mrf.mxu0
  %v2435 = vadd.f32 %v2386, %v2434
  %v2436 = vpop.f32.mrf.mxu0
  %v2437 = vadd.f32 %v2388, %v2436
  %2438 = vmatmul.bf16.gmra.mxu0 %v754
  %v2439 = vpop.f32.mrf.mxu0
  %v2440 = vadd.f32 %v2391, %v2439
  %v2441 = vpop.f32.mrf.mxu0
  %v2442 = vadd.f32 %v2393, %v2441
  %2443 = vmatmul.bf16.gmra.mxu0 %v763
  %v2444 = vpop.f32.mrf.mxu0
  %v2445 = vadd.f32 %v2396, %v2444
  %v2446 = vpop.f32.mrf.mxu0
  %v2447 = vadd.f32 %v2398, %v2446
  %2448 = vmatmul.bf16.gmra.mxu0 %v772
  %v2449 = vpop.f32.mrf.mxu0
  %v2450 = vadd.f32 %v2401, %v2449
  %v2451 = vpop.f32.mrf.mxu0
  %v2452 = vadd.f32 %v2403, %v2451
  %2453 = vmatmul.bf16.gmra.mxu0 %v781
  %v2454 = vpop.f32.mrf.mxu0
  %v2455 = vadd.f32 %v2406, %v2454
  %v2456 = vpop.f32.mrf.mxu0
  %v2457 = vadd.f32 %v2408, %v2456
  %2458 = vmatmul.bf16.gmra.mxu0 %v790
  %v2459 = vpop.f32.mrf.mxu0
  %v2460 = vadd.f32 %v2411, %v2459
  %v2461 = vpop.f32.mrf.mxu0
  %v2462 = vadd.f32 %v2413, %v2461
  %2463 = vmatmul.bf16.gmra.mxu0 %v799
  %v2464 = vpop.f32.mrf.mxu0
  %v2465 = vadd.f32 %v2416, %v2464
  %v2466 = vpop.f32.mrf.mxu0
  %v2467 = vadd.f32 %v2418, %v2466
  %2468 = vmatmul.bf16.gmra.mxu0 %v808
  %v2469 = vpop.f32.mrf.mxu0
  %v2470 = vadd.f32 %v2421, %v2469
  %v2471 = vpop.f32.mrf.mxu0
  %v2472 = vadd.f32 %v2423, %v2471
  %2473 = vdwg.mxu0
  %2474 = vmatpush.bf16.msra.mxu0 %v1875
  %2475 = vmatpush.bf16.msra.mxu0 %v1871
  %2476 = vmatpush.bf16.msra.mxu0 %v1867
  %2477 = vmatpush.bf16.msra.mxu0 %v1863
  %2478 = vmatpush.bf16.msra.mxu0 %v1859
  %2479 = vmatpush.bf16.msra.mxu0 %v1855
  %2480 = vmatpush.bf16.msra.mxu0 %v1851
  %2481 = vmatpush.bf16.msra.mxu0 %v1847
  %2482 = vmatmul.bf16.gmra.mxu0 %v746
  %v2483 = vpop.f32.mrf.mxu0
  %v2484 = vadd.f32 %v2435, %v2483
  %v2485 = vpop.f32.mrf.mxu0
  %v2486 = vadd.f32 %v2437, %v2485
  %2487 = vmatmul.bf16.gmra.mxu0 %v755
  %v2488 = vpop.f32.mrf.mxu0
  %v2489 = vadd.f32 %v2440, %v2488
  %v2490 = vpop.f32.mrf.mxu0
  %v2491 = vadd.f32 %v2442, %v2490
  %2492 = vmatmul.bf16.gmra.mxu0 %v764
  %v2493 = vpop.f32.mrf.mxu0
  %v2494 = vadd.f32 %v2445, %v2493
  %v2495 = vpop.f32.mrf.mxu0
  %v2496 = vadd.f32 %v2447, %v2495
  %2497 = vmatmul.bf16.gmra.mxu0 %v773
  %v2498 = vpop.f32.mrf.mxu0
  %v2499 = vadd.f32 %v2450, %v2498
  %v2500 = vpop.f32.mrf.mxu0
  %v2501 = vadd.f32 %v2452, %v2500
  %2502 = vmatmul.bf16.gmra.mxu0 %v782
  %v2503 = vpop.f32.mrf.mxu0
  %v2504 = vadd.f32 %v2455, %v2503
  %v2505 = vpop.f32.mrf.mxu0
  %v2506 = vadd.f32 %v2457, %v2505
  %2507 = vmatmul.bf16.gmra.mxu0 %v791
  %v2508 = vpop.f32.mrf.mxu0
  %v2509 = vadd.f32 %v2460, %v2508
  %v2510 = vpop.f32.mrf.mxu0
  %v2511 = vadd.f32 %v2462, %v2510
  %2512 = vmatmul.bf16.gmra.mxu0 %v800
  %v2513 = vpop.f32.mrf.mxu0
  %v2514 = vadd.f32 %v2465, %v2513
  %v2515 = vpop.f32.mrf.mxu0
  %v2516 = vadd.f32 %v2467, %v2515
  %2517 = vmatmul.bf16.gmra.mxu0 %v809
  %v2518 = vpop.f32.mrf.mxu0
  %v2519 = vadd.f32 %v2470, %v2518
  %v2520 = vpop.f32.mrf.mxu0
  %v2521 = vadd.f32 %v2472, %v2520
  %2522 = vdwg.mxu0
  %2523 = vmatpush.bf16.msra.mxu0 %v1907
  %2524 = vmatpush.bf16.msra.mxu0 %v1903
  %2525 = vmatpush.bf16.msra.mxu0 %v1899
  %2526 = vmatpush.bf16.msra.mxu0 %v1895
  %2527 = vmatpush.bf16.msra.mxu0 %v1891
  %2528 = vmatpush.bf16.msra.mxu0 %v1887
  %2529 = vmatpush.bf16.msra.mxu0 %v1883
  %2530 = vmatpush.bf16.msra.mxu0 %v1879
  %2531 = vmatmul.bf16.gmra.mxu0 %v747
  %v2532 = vpop.f32.mrf.mxu0
  %v2533 = vadd.f32 %v2484, %v2532
  %v2534 = vpop.f32.mrf.mxu0
  %v2535 = vadd.f32 %v2486, %v2534
  %2536 = vmatmul.bf16.gmra.mxu0 %v756
  %v2537 = vpop.f32.mrf.mxu0
  %v2538 = vadd.f32 %v2489, %v2537
  %v2539 = vpop.f32.mrf.mxu0
  %v2540 = vadd.f32 %v2491, %v2539
  %2541 = vmatmul.bf16.gmra.mxu0 %v765
  %v2542 = vpop.f32.mrf.mxu0
  %v2543 = vadd.f32 %v2494, %v2542
  %v2544 = vpop.f32.mrf.mxu0
  %v2545 = vadd.f32 %v2496, %v2544
  %2546 = vmatmul.bf16.gmra.mxu0 %v774
  %v2547 = vpop.f32.mrf.mxu0
  %v2548 = vadd.f32 %v2499, %v2547
  %v2549 = vpop.f32.mrf.mxu0
  %v2550 = vadd.f32 %v2501, %v2549
  %2551 = vmatmul.bf16.gmra.mxu0 %v783
  %v2552 = vpop.f32.mrf.mxu0
  %v2553 = vadd.f32 %v2504, %v2552
  %v2554 = vpop.f32.mrf.mxu0
  %v2555 = vadd.f32 %v2506, %v2554
  %2556 = vmatmul.bf16.gmra.mxu0 %v792
  %v2557 = vpop.f32.mrf.mxu0
  %v2558 = vadd.f32 %v2509, %v2557
  %v2559 = vpop.f32.mrf.mxu0
  %v2560 = vadd.f32 %v2511, %v2559
  %2561 = vmatmul.bf16.gmra.mxu0 %v801
  %v2562 = vpop.f32.mrf.mxu0
  %v2563 = vadd.f32 %v2514, %v2562
  %v2564 = vpop.f32.mrf.mxu0
  %v2565 = vadd.f32 %v2516, %v2564
  %2566 = vmatmul.bf16.gmra.mxu0 %v810
  %v2567 = vpop.f32.mrf.mxu0
  %v2568 = vadd.f32 %v2519, %v2567
  %v2569 = vpop.f32.mrf.mxu0
  %v2570 = vadd.f32 %v2521, %v2569
  %2571 = vdwg.mxu0
  %2572 = vmatpush.bf16.msra.mxu0 %v1939
  %2573 = vmatpush.bf16.msra.mxu0 %v1935
  %2574 = vmatpush.bf16.msra.mxu0 %v1931
  %2575 = vmatpush.bf16.msra.mxu0 %v1927
  %2576 = vmatpush.bf16.msra.mxu0 %v1923
  %2577 = vmatpush.bf16.msra.mxu0 %v1919
  %2578 = vmatpush.bf16.msra.mxu0 %v1915
  %2579 = vmatpush.bf16.msra.mxu0 %v1911
  %2580 = vmatmul.bf16.gmra.mxu0 %v748
  %v2581 = vpop.f32.mrf.mxu0
  %v2582 = vadd.f32 %v2533, %v2581
  %v2583 = vpop.f32.mrf.mxu0
  %v2584 = vadd.f32 %v2535, %v2583
  %2585 = vmatmul.bf16.gmra.mxu0 %v757
  %v2586 = vpop.f32.mrf.mxu0
  %v2587 = vadd.f32 %v2538, %v2586
  %v2588 = vpop.f32.mrf.mxu0
  %v2589 = vadd.f32 %v2540, %v2588
  %2590 = vmatmul.bf16.gmra.mxu0 %v766
  %v2591 = vpop.f32.mrf.mxu0
  %v2592 = vadd.f32 %v2543, %v2591
  %v2593 = vpop.f32.mrf.mxu0
  %v2594 = vadd.f32 %v2545, %v2593
  %2595 = vmatmul.bf16.gmra.mxu0 %v775
  %v2596 = vpop.f32.mrf.mxu0
  %v2597 = vadd.f32 %v2548, %v2596
  %v2598 = vpop.f32.mrf.mxu0
  %v2599 = vadd.f32 %v2550, %v2598
  %2600 = vmatmul.bf16.gmra.mxu0 %v784
  %v2601 = vpop.f32.mrf.mxu0
  %v2602 = vadd.f32 %v2553, %v2601
  %v2603 = vpop.f32.mrf.mxu0
  %v2604 = vadd.f32 %v2555, %v2603
  %2605 = vmatmul.bf16.gmra.mxu0 %v793
  %v2606 = vpop.f32.mrf.mxu0
  %v2607 = vadd.f32 %v2558, %v2606
  %v2608 = vpop.f32.mrf.mxu0
  %v2609 = vadd.f32 %v2560, %v2608
  %2610 = vmatmul.bf16.gmra.mxu0 %v802
  %v2611 = vpop.f32.mrf.mxu0
  %v2612 = vadd.f32 %v2563, %v2611
  %v2613 = vpop.f32.mrf.mxu0
  %v2614 = vadd.f32 %v2565, %v2613
  %2615 = vmatmul.bf16.gmra.mxu0 %v811
  %v2616 = vpop.f32.mrf.mxu0
  %v2617 = vadd.f32 %v2568, %v2616
  %v2618 = vpop.f32.mrf.mxu0
  %v2619 = vadd.f32 %v2570, %v2618
  %2620 = vdwg.mxu0
  %2621 = vmatpush.bf16.msra.mxu0 %v1971
  %2622 = vmatpush.bf16.msra.mxu0 %v1967
  %2623 = vmatpush.bf16.msra.mxu0 %v1963
  %2624 = vmatpush.bf16.msra.mxu0 %v1959
  %2625 = vmatpush.bf16.msra.mxu0 %v1955
  %2626 = vmatpush.bf16.msra.mxu0 %v1951
  %2627 = vmatpush.bf16.msra.mxu0 %v1947
  %2628 = vmatpush.bf16.msra.mxu0 %v1943
  %2629 = vmatmul.bf16.gmra.mxu0 %v749
  %v2630 = vpop.f32.mrf.mxu0
  %v2631 = vadd.f32 %v2582, %v2630
  %v2632 = vpop.f32.mrf.mxu0
  %v2633 = vadd.f32 %v2584, %v2632
  %2634 = vmatmul.bf16.gmra.mxu0 %v758
  %v2635 = vpop.f32.mrf.mxu0
  %v2636 = vadd.f32 %v2587, %v2635
  %v2637 = vpop.f32.mrf.mxu0
  %v2638 = vadd.f32 %v2589, %v2637
  %2639 = vmatmul.bf16.gmra.mxu0 %v767
  %v2640 = vpop.f32.mrf.mxu0
  %v2641 = vadd.f32 %v2592, %v2640
  %v2642 = vpop.f32.mrf.mxu0
  %v2643 = vadd.f32 %v2594, %v2642
  %2644 = vmatmul.bf16.gmra.mxu0 %v776
  %v2645 = vpop.f32.mrf.mxu0
  %v2646 = vadd.f32 %v2597, %v2645
  %v2647 = vpop.f32.mrf.mxu0
  %v2648 = vadd.f32 %v2599, %v2647
  %2649 = vmatmul.bf16.gmra.mxu0 %v785
  %v2650 = vpop.f32.mrf.mxu0
  %v2651 = vadd.f32 %v2602, %v2650
  %v2652 = vpop.f32.mrf.mxu0
  %v2653 = vadd.f32 %v2604, %v2652
  %2654 = vmatmul.bf16.gmra.mxu0 %v794
  %v2655 = vpop.f32.mrf.mxu0
  %v2656 = vadd.f32 %v2607, %v2655
  %v2657 = vpop.f32.mrf.mxu0
  %v2658 = vadd.f32 %v2609, %v2657
  %2659 = vmatmul.bf16.gmra.mxu0 %v803
  %v2660 = vpop.f32.mrf.mxu0
  %v2661 = vadd.f32 %v2612, %v2660
  %v2662 = vpop.f32.mrf.mxu0
  %v2663 = vadd.f32 %v2614, %v2662
  %2664 = vmatmul.bf16.gmra.mxu0 %v812
  %v2665 = vpop.f32.mrf.mxu0
  %v2666 = vadd.f32 %v2617, %v2665
  %v2667 = vpop.f32.mrf.mxu0
  %v2668 = vadd.f32 %v2619, %v2667
  %2669 = vdwg.mxu0
  %2670 = vmatpush.bf16.msra.mxu0 %v2003
  %2671 = vmatpush.bf16.msra.mxu0 %v1999
  %2672 = vmatpush.bf16.msra.mxu0 %v1995
  %2673 = vmatpush.bf16.msra.mxu0 %v1991
  %2674 = vmatpush.bf16.msra.mxu0 %v1987
  %2675 = vmatpush.bf16.msra.mxu0 %v1983
  %2676 = vmatpush.bf16.msra.mxu0 %v1979
  %2677 = vmatpush.bf16.msra.mxu0 %v1975
  %2678 = vmatmul.bf16.gmra.mxu0 %v750
  %v2679 = vpop.f32.mrf.mxu0
  %v2680 = vadd.f32 %v2631, %v2679
  %v2681 = vpop.f32.mrf.mxu0
  %v2682 = vadd.f32 %v2633, %v2681
  %2683 = vmatmul.bf16.gmra.mxu0 %v759
  %v2684 = vpop.f32.mrf.mxu0
  %v2685 = vadd.f32 %v2636, %v2684
  %v2686 = vpop.f32.mrf.mxu0
  %v2687 = vadd.f32 %v2638, %v2686
  %2688 = vmatmul.bf16.gmra.mxu0 %v768
  %v2689 = vpop.f32.mrf.mxu0
  %v2690 = vadd.f32 %v2641, %v2689
  %v2691 = vpop.f32.mrf.mxu0
  %v2692 = vadd.f32 %v2643, %v2691
  %2693 = vmatmul.bf16.gmra.mxu0 %v777
  %v2694 = vpop.f32.mrf.mxu0
  %v2695 = vadd.f32 %v2646, %v2694
  %v2696 = vpop.f32.mrf.mxu0
  %v2697 = vadd.f32 %v2648, %v2696
  %2698 = vmatmul.bf16.gmra.mxu0 %v786
  %v2699 = vpop.f32.mrf.mxu0
  %v2700 = vadd.f32 %v2651, %v2699
  %v2701 = vpop.f32.mrf.mxu0
  %v2702 = vadd.f32 %v2653, %v2701
  %2703 = vmatmul.bf16.gmra.mxu0 %v795
  %v2704 = vpop.f32.mrf.mxu0
  %v2705 = vadd.f32 %v2656, %v2704
  %v2706 = vpop.f32.mrf.mxu0
  %v2707 = vadd.f32 %v2658, %v2706
  %2708 = vmatmul.bf16.gmra.mxu0 %v804
  %v2709 = vpop.f32.mrf.mxu0
  %v2710 = vadd.f32 %v2661, %v2709
  %v2711 = vpop.f32.mrf.mxu0
  %v2712 = vadd.f32 %v2663, %v2711
  %2713 = vmatmul.bf16.gmra.mxu0 %v813
  %v2714 = vpop.f32.mrf.mxu0
  %v2715 = vadd.f32 %v2666, %v2714
  %v2716 = vpop.f32.mrf.mxu0
  %v2717 = vadd.f32 %v2668, %v2716
  %2718 = vdwg.mxu0
  %2719 = vmatpush.bf16.msra.mxu0 %v2035
  %2720 = vmatpush.bf16.msra.mxu0 %v2031
  %2721 = vmatpush.bf16.msra.mxu0 %v2027
  %2722 = vmatpush.bf16.msra.mxu0 %v2023
  %2723 = vmatpush.bf16.msra.mxu0 %v2019
  %2724 = vmatpush.bf16.msra.mxu0 %v2015
  %2725 = vmatpush.bf16.msra.mxu0 %v2011
  %2726 = vmatpush.bf16.msra.mxu0 %v2007
  %2727 = vmatmul.bf16.gmra.mxu0 %v751
  %v2728 = vpop.f32.mrf.mxu0
  %v2729 = vadd.f32 %v2680, %v2728
  %v2730 = vpop.f32.mrf.mxu0
  %v2731 = vadd.f32 %v2682, %v2730
  %2732 = vmatmul.bf16.gmra.mxu0 %v760
  %v2733 = vpop.f32.mrf.mxu0
  %v2734 = vadd.f32 %v2685, %v2733
  %v2735 = vpop.f32.mrf.mxu0
  %v2736 = vadd.f32 %v2687, %v2735
  %2737 = vmatmul.bf16.gmra.mxu0 %v769
  %v2738 = vpop.f32.mrf.mxu0
  %v2739 = vadd.f32 %v2690, %v2738
  %v2740 = vpop.f32.mrf.mxu0
  %v2741 = vadd.f32 %v2692, %v2740
  %2742 = vmatmul.bf16.gmra.mxu0 %v778
  %v2743 = vpop.f32.mrf.mxu0
  %v2744 = vadd.f32 %v2695, %v2743
  %v2745 = vpop.f32.mrf.mxu0
  %v2746 = vadd.f32 %v2697, %v2745
  %2747 = vmatmul.bf16.gmra.mxu0 %v787
  %v2748 = vpop.f32.mrf.mxu0
  %v2749 = vadd.f32 %v2700, %v2748
  %v2750 = vpop.f32.mrf.mxu0
  %v2751 = vadd.f32 %v2702, %v2750
  %2752 = vmatmul.bf16.gmra.mxu0 %v796
  %v2753 = vpop.f32.mrf.mxu0
  %v2754 = vadd.f32 %v2705, %v2753
  %v2755 = vpop.f32.mrf.mxu0
  %v2756 = vadd.f32 %v2707, %v2755
  %2757 = vmatmul.bf16.gmra.mxu0 %v805
  %v2758 = vpop.f32.mrf.mxu0
  %v2759 = vadd.f32 %v2710, %v2758
  %v2760 = vpop.f32.mrf.mxu0
  %v2761 = vadd.f32 %v2712, %v2760
  %2762 = vmatmul.bf16.gmra.mxu0 %v814
  %v2763 = vpop.f32.mrf.mxu0
  %v2764 = vadd.f32 %v2715, %v2763
  %v2765 = vpop.f32.mrf.mxu0
  %v2766 = vadd.f32 %v2717, %v2765
  %2767 = vdwg.mxu0
  %2768 = vmatpush.bf16.msra.mxu0 %v1780
  %2769 = vmatpush.bf16.msra.mxu0 %v1776
  %2770 = vmatpush.bf16.msra.mxu0 %v1772
  %2771 = vmatpush.bf16.msra.mxu0 %v1768
  %2772 = vmatpush.bf16.msra.mxu0 %v1764
  %2773 = vmatpush.bf16.msra.mxu0 %v1760
  %2774 = vmatpush.bf16.msra.mxu0 %v1756
  %2775 = vmatpush.bf16.msra.mxu0 %v1752
  %2776 = vmatmul.bf16.gmra.mxu0 %v743
  %v2777 = vpop.f32.mrf.mxu0
  %v2778 = vadd.f32 0.0, %v2777
  %v2779 = vpop.f32.mrf.mxu0
  %v2780 = vadd.f32 0.0, %v2779
  %2781 = vmatmul.bf16.gmra.mxu0 %v752
  %v2782 = vpop.f32.mrf.mxu0
  %v2783 = vadd.f32 0.0, %v2782
  %v2784 = vpop.f32.mrf.mxu0
  %v2785 = vadd.f32 0.0, %v2784
  %2786 = vmatmul.bf16.gmra.mxu0 %v761
  %v2787 = vpop.f32.mrf.mxu0
  %v2788 = vadd.f32 0.0, %v2787
  %v2789 = vpop.f32.mrf.mxu0
  %v2790 = vadd.f32 0.0, %v2789
  %2791 = vmatmul.bf16.gmra.mxu0 %v770
  %v2792 = vpop.f32.mrf.mxu0
  %v2793 = vadd.f32 0.0, %v2792
  %v2794 = vpop.f32.mrf.mxu0
  %v2795 = vadd.f32 0.0, %v2794
  %2796 = vmatmul.bf16.gmra.mxu0 %v779
  %v2797 = vpop.f32.mrf.mxu0
  %v2798 = vadd.f32 0.0, %v2797
  %v2799 = vpop.f32.mrf.mxu0
  %v2800 = vadd.f32 0.0, %v2799
  %2801 = vmatmul.bf16.gmra.mxu0 %v788
  %v2802 = vpop.f32.mrf.mxu0
  %v2803 = vadd.f32 0.0, %v2802
  %v2804 = vpop.f32.mrf.mxu0
  %v2805 = vadd.f32 0.0, %v2804
  %2806 = vmatmul.bf16.gmra.mxu0 %v797
  %v2807 = vpop.f32.mrf.mxu0
  %v2808 = vadd.f32 0.0, %v2807
  %v2809 = vpop.f32.mrf.mxu0
  %v2810 = vadd.f32 0.0, %v2809
  %2811 = vmatmul.bf16.gmra.mxu0 %v806
  %v2812 = vpop.f32.mrf.mxu0
  %v2813 = vadd.f32 0.0, %v2812
  %v2814 = vpop.f32.mrf.mxu0
  %v2815 = vadd.f32 0.0, %v2814
  %2816 = vdwg.mxu0
  %2817 = vmatpush.bf16.msra.mxu0 %v1812
  %2818 = vmatpush.bf16.msra.mxu0 %v1808
  %2819 = vmatpush.bf16.msra.mxu0 %v1804
  %2820 = vmatpush.bf16.msra.mxu0 %v1800
  %2821 = vmatpush.bf16.msra.mxu0 %v1796
  %2822 = vmatpush.bf16.msra.mxu0 %v1792
  %2823 = vmatpush.bf16.msra.mxu0 %v1788
  %2824 = vmatpush.bf16.msra.mxu0 %v1784
  %2825 = vmatmul.bf16.gmra.mxu0 %v744
  %v2826 = vpop.f32.mrf.mxu0
  %v2827 = vadd.f32 %v2778, %v2826
  %v2828 = vpop.f32.mrf.mxu0
  %v2829 = vadd.f32 %v2780, %v2828
  %2830 = vmatmul.bf16.gmra.mxu0 %v753
  %v2831 = vpop.f32.mrf.mxu0
  %v2832 = vadd.f32 %v2783, %v2831
  %v2833 = vpop.f32.mrf.mxu0
  %v2834 = vadd.f32 %v2785, %v2833
  %2835 = vmatmul.bf16.gmra.mxu0 %v762
  %v2836 = vpop.f32.mrf.mxu0
  %v2837 = vadd.f32 %v2788, %v2836
  %v2838 = vpop.f32.mrf.mxu0
  %v2839 = vadd.f32 %v2790, %v2838
  %2840 = vmatmul.bf16.gmra.mxu0 %v771
  %v2841 = vpop.f32.mrf.mxu0
  %v2842 = vadd.f32 %v2793, %v2841
  %v2843 = vpop.f32.mrf.mxu0
  %v2844 = vadd.f32 %v2795, %v2843
  %2845 = vmatmul.bf16.gmra.mxu0 %v780
  %v2846 = vpop.f32.mrf.mxu0
  %v2847 = vadd.f32 %v2798, %v2846
  %v2848 = vpop.f32.mrf.mxu0
  %v2849 = vadd.f32 %v2800, %v2848
  %2850 = vmatmul.bf16.gmra.mxu0 %v789
  %v2851 = vpop.f32.mrf.mxu0
  %v2852 = vadd.f32 %v2803, %v2851
  %v2853 = vpop.f32.mrf.mxu0
  %v2854 = vadd.f32 %v2805, %v2853
  %2855 = vmatmul.bf16.gmra.mxu0 %v798
  %v2856 = vpop.f32.mrf.mxu0
  %v2857 = vadd.f32 %v2808, %v2856
  %v2858 = vpop.f32.mrf.mxu0
  %v2859 = vadd.f32 %v2810, %v2858
  %2860 = vmatmul.bf16.gmra.mxu0 %v807
  %v2861 = vpop.f32.mrf.mxu0
  %v2862 = vadd.f32 %v2813, %v2861
  %v2863 = vpop.f32.mrf.mxu0
  %v2864 = vadd.f32 %v2815, %v2863
  %2865 = vdwg.mxu0
  %2866 = vmatpush.bf16.msra.mxu0 %v1844
  %2867 = vmatpush.bf16.msra.mxu0 %v1840
  %2868 = vmatpush.bf16.msra.mxu0 %v1836
  %2869 = vmatpush.bf16.msra.mxu0 %v1832
  %2870 = vmatpush.bf16.msra.mxu0 %v1828
  %2871 = vmatpush.bf16.msra.mxu0 %v1824
  %2872 = vmatpush.bf16.msra.mxu0 %v1820
  %2873 = vmatpush.bf16.msra.mxu0 %v1816
  %2874 = vmatmul.bf16.gmra.mxu0 %v745
  %v2875 = vpop.f32.mrf.mxu0
  %v2876 = vadd.f32 %v2827, %v2875
  %v2877 = vpop.f32.mrf.mxu0
  %v2878 = vadd.f32 %v2829, %v2877
  %2879 = vmatmul.bf16.gmra.mxu0 %v754
  %v2880 = vpop.f32.mrf.mxu0
  %v2881 = vadd.f32 %v2832, %v2880
  %v2882 = vpop.f32.mrf.mxu0
  %v2883 = vadd.f32 %v2834, %v2882
  %2884 = vmatmul.bf16.gmra.mxu0 %v763
  %v2885 = vpop.f32.mrf.mxu0
  %v2886 = vadd.f32 %v2837, %v2885
  %v2887 = vpop.f32.mrf.mxu0
  %v2888 = vadd.f32 %v2839, %v2887
  %2889 = vmatmul.bf16.gmra.mxu0 %v772
  %v2890 = vpop.f32.mrf.mxu0
  %v2891 = vadd.f32 %v2842, %v2890
  %v2892 = vpop.f32.mrf.mxu0
  %v2893 = vadd.f32 %v2844, %v2892
  %2894 = vmatmul.bf16.gmra.mxu0 %v781
  %v2895 = vpop.f32.mrf.mxu0
  %v2896 = vadd.f32 %v2847, %v2895
  %v2897 = vpop.f32.mrf.mxu0
  %v2898 = vadd.f32 %v2849, %v2897
  %2899 = vmatmul.bf16.gmra.mxu0 %v790
  %v2900 = vpop.f32.mrf.mxu0
  %v2901 = vadd.f32 %v2852, %v2900
  %v2902 = vpop.f32.mrf.mxu0
  %v2903 = vadd.f32 %v2854, %v2902
  %2904 = vmatmul.bf16.gmra.mxu0 %v799
  %v2905 = vpop.f32.mrf.mxu0
  %v2906 = vadd.f32 %v2857, %v2905
  %v2907 = vpop.f32.mrf.mxu0
  %v2908 = vadd.f32 %v2859, %v2907
  %2909 = vmatmul.bf16.gmra.mxu0 %v808
  %v2910 = vpop.f32.mrf.mxu0
  %v2911 = vadd.f32 %v2862, %v2910
  %v2912 = vpop.f32.mrf.mxu0
  %v2913 = vadd.f32 %v2864, %v2912
  %2914 = vdwg.mxu0
  %2915 = vmatpush.bf16.msra.mxu0 %v1876
  %2916 = vmatpush.bf16.msra.mxu0 %v1872
  %2917 = vmatpush.bf16.msra.mxu0 %v1868
  %2918 = vmatpush.bf16.msra.mxu0 %v1864
  %2919 = vmatpush.bf16.msra.mxu0 %v1860
  %2920 = vmatpush.bf16.msra.mxu0 %v1856
  %2921 = vmatpush.bf16.msra.mxu0 %v1852
  %2922 = vmatpush.bf16.msra.mxu0 %v1848
  %2923 = vmatmul.bf16.gmra.mxu0 %v746
  %v2924 = vpop.f32.mrf.mxu0
  %v2925 = vadd.f32 %v2876, %v2924
  %v2926 = vpop.f32.mrf.mxu0
  %v2927 = vadd.f32 %v2878, %v2926
  %2928 = vmatmul.bf16.gmra.mxu0 %v755
  %v2929 = vpop.f32.mrf.mxu0
  %v2930 = vadd.f32 %v2881, %v2929
  %v2931 = vpop.f32.mrf.mxu0
  %v2932 = vadd.f32 %v2883, %v2931
  %2933 = vmatmul.bf16.gmra.mxu0 %v764
  %v2934 = vpop.f32.mrf.mxu0
  %v2935 = vadd.f32 %v2886, %v2934
  %v2936 = vpop.f32.mrf.mxu0
  %v2937 = vadd.f32 %v2888, %v2936
  %2938 = vmatmul.bf16.gmra.mxu0 %v773
  %v2939 = vpop.f32.mrf.mxu0
  %v2940 = vadd.f32 %v2891, %v2939
  %v2941 = vpop.f32.mrf.mxu0
  %v2942 = vadd.f32 %v2893, %v2941
  %2943 = vmatmul.bf16.gmra.mxu0 %v782
  %v2944 = vpop.f32.mrf.mxu0
  %v2945 = vadd.f32 %v2896, %v2944
  %v2946 = vpop.f32.mrf.mxu0
  %v2947 = vadd.f32 %v2898, %v2946
  %2948 = vmatmul.bf16.gmra.mxu0 %v791
  %v2949 = vpop.f32.mrf.mxu0
  %v2950 = vadd.f32 %v2901, %v2949
  %v2951 = vpop.f32.mrf.mxu0
  %v2952 = vadd.f32 %v2903, %v2951
  %2953 = vmatmul.bf16.gmra.mxu0 %v800
  %v2954 = vpop.f32.mrf.mxu0
  %v2955 = vadd.f32 %v2906, %v2954
  %v2956 = vpop.f32.mrf.mxu0
  %v2957 = vadd.f32 %v2908, %v2956
  %2958 = vmatmul.bf16.gmra.mxu0 %v809
  %v2959 = vpop.f32.mrf.mxu0
  %v2960 = vadd.f32 %v2911, %v2959
  %v2961 = vpop.f32.mrf.mxu0
  %v2962 = vadd.f32 %v2913, %v2961
  %2963 = vdwg.mxu0
  %2964 = vmatpush.bf16.msra.mxu0 %v1908
  %2965 = vmatpush.bf16.msra.mxu0 %v1904
  %2966 = vmatpush.bf16.msra.mxu0 %v1900
  %2967 = vmatpush.bf16.msra.mxu0 %v1896
  %2968 = vmatpush.bf16.msra.mxu0 %v1892
  %2969 = vmatpush.bf16.msra.mxu0 %v1888
  %2970 = vmatpush.bf16.msra.mxu0 %v1884
  %2971 = vmatpush.bf16.msra.mxu0 %v1880
  %2972 = vmatmul.bf16.gmra.mxu0 %v747
  %v2973 = vpop.f32.mrf.mxu0
  %v2974 = vadd.f32 %v2925, %v2973
  %v2975 = vpop.f32.mrf.mxu0
  %v2976 = vadd.f32 %v2927, %v2975
  %2977 = vmatmul.bf16.gmra.mxu0 %v756
  %v2978 = vpop.f32.mrf.mxu0
  %v2979 = vadd.f32 %v2930, %v2978
  %v2980 = vpop.f32.mrf.mxu0
  %v2981 = vadd.f32 %v2932, %v2980
  %2982 = vmatmul.bf16.gmra.mxu0 %v765
  %v2983 = vpop.f32.mrf.mxu0
  %v2984 = vadd.f32 %v2935, %v2983
  %v2985 = vpop.f32.mrf.mxu0
  %v2986 = vadd.f32 %v2937, %v2985
  %2987 = vmatmul.bf16.gmra.mxu0 %v774
  %v2988 = vpop.f32.mrf.mxu0
  %v2989 = vadd.f32 %v2940, %v2988
  %v2990 = vpop.f32.mrf.mxu0
  %v2991 = vadd.f32 %v2942, %v2990
  %2992 = vmatmul.bf16.gmra.mxu0 %v783
  %v2993 = vpop.f32.mrf.mxu0
  %v2994 = vadd.f32 %v2945, %v2993
  %v2995 = vpop.f32.mrf.mxu0
  %v2996 = vadd.f32 %v2947, %v2995
  %2997 = vmatmul.bf16.gmra.mxu0 %v792
  %v2998 = vpop.f32.mrf.mxu0
  %v2999 = vadd.f32 %v2950, %v2998
  %v3000 = vpop.f32.mrf.mxu0
  %v3001 = vadd.f32 %v2952, %v3000
  %3002 = vmatmul.bf16.gmra.mxu0 %v801
  %v3003 = vpop.f32.mrf.mxu0
  %v3004 = vadd.f32 %v2955, %v3003
  %v3005 = vpop.f32.mrf.mxu0
  %v3006 = vadd.f32 %v2957, %v3005
  %3007 = vmatmul.bf16.gmra.mxu0 %v810
  %v3008 = vpop.f32.mrf.mxu0
  %v3009 = vadd.f32 %v2960, %v3008
  %v3010 = vpop.f32.mrf.mxu0
  %v3011 = vadd.f32 %v2962, %v3010
  %3012 = vdwg.mxu0
  %3013 = vmatpush.bf16.msra.mxu0 %v1940
  %3014 = vmatpush.bf16.msra.mxu0 %v1936
  %3015 = vmatpush.bf16.msra.mxu0 %v1932
  %3016 = vmatpush.bf16.msra.mxu0 %v1928
  %3017 = vmatpush.bf16.msra.mxu0 %v1924
  %3018 = vmatpush.bf16.msra.mxu0 %v1920
  %3019 = vmatpush.bf16.msra.mxu0 %v1916
  %3020 = vmatpush.bf16.msra.mxu0 %v1912
  %3021 = vmatmul.bf16.gmra.mxu0 %v748
  %v3022 = vpop.f32.mrf.mxu0
  %v3023 = vadd.f32 %v2974, %v3022
  %v3024 = vpop.f32.mrf.mxu0
  %v3025 = vadd.f32 %v2976, %v3024
  %3026 = vmatmul.bf16.gmra.mxu0 %v757
  %v3027 = vpop.f32.mrf.mxu0
  %v3028 = vadd.f32 %v2979, %v3027
  %v3029 = vpop.f32.mrf.mxu0
  %v3030 = vadd.f32 %v2981, %v3029
  %3031 = vmatmul.bf16.gmra.mxu0 %v766
  %v3032 = vpop.f32.mrf.mxu0
  %v3033 = vadd.f32 %v2984, %v3032
  %v3034 = vpop.f32.mrf.mxu0
  %v3035 = vadd.f32 %v2986, %v3034
  %3036 = vmatmul.bf16.gmra.mxu0 %v775
  %v3037 = vpop.f32.mrf.mxu0
  %v3038 = vadd.f32 %v2989, %v3037
  %v3039 = vpop.f32.mrf.mxu0
  %v3040 = vadd.f32 %v2991, %v3039
  %3041 = vmatmul.bf16.gmra.mxu0 %v784
  %v3042 = vpop.f32.mrf.mxu0
  %v3043 = vadd.f32 %v2994, %v3042
  %v3044 = vpop.f32.mrf.mxu0
  %v3045 = vadd.f32 %v2996, %v3044
  %3046 = vmatmul.bf16.gmra.mxu0 %v793
  %v3047 = vpop.f32.mrf.mxu0
  %v3048 = vadd.f32 %v2999, %v3047
  %v3049 = vpop.f32.mrf.mxu0
  %v3050 = vadd.f32 %v3001, %v3049
  %3051 = vmatmul.bf16.gmra.mxu0 %v802
  %v3052 = vpop.f32.mrf.mxu0
  %v3053 = vadd.f32 %v3004, %v3052
  %v3054 = vpop.f32.mrf.mxu0
  %v3055 = vadd.f32 %v3006, %v3054
  %3056 = vmatmul.bf16.gmra.mxu0 %v811
  %v3057 = vpop.f32.mrf.mxu0
  %v3058 = vadd.f32 %v3009, %v3057
  %v3059 = vpop.f32.mrf.mxu0
  %v3060 = vadd.f32 %v3011, %v3059
  %3061 = vdwg.mxu0
  %3062 = vmatpush.bf16.msra.mxu0 %v1972
  %3063 = vmatpush.bf16.msra.mxu0 %v1968
  %3064 = vmatpush.bf16.msra.mxu0 %v1964
  %3065 = vmatpush.bf16.msra.mxu0 %v1960
  %3066 = vmatpush.bf16.msra.mxu0 %v1956
  %3067 = vmatpush.bf16.msra.mxu0 %v1952
  %3068 = vmatpush.bf16.msra.mxu0 %v1948
  %3069 = vmatpush.bf16.msra.mxu0 %v1944
  %3070 = vmatmul.bf16.gmra.mxu0 %v749
  %v3071 = vpop.f32.mrf.mxu0
  %v3072 = vadd.f32 %v3023, %v3071
  %v3073 = vpop.f32.mrf.mxu0
  %v3074 = vadd.f32 %v3025, %v3073
  %3075 = vmatmul.bf16.gmra.mxu0 %v758
  %v3076 = vpop.f32.mrf.mxu0
  %v3077 = vadd.f32 %v3028, %v3076
  %v3078 = vpop.f32.mrf.mxu0
  %v3079 = vadd.f32 %v3030, %v3078
  %3080 = vmatmul.bf16.gmra.mxu0 %v767
  %v3081 = vpop.f32.mrf.mxu0
  %v3082 = vadd.f32 %v3033, %v3081
  %v3083 = vpop.f32.mrf.mxu0
  %v3084 = vadd.f32 %v3035, %v3083
  %3085 = vmatmul.bf16.gmra.mxu0 %v776
  %v3086 = vpop.f32.mrf.mxu0
  %v3087 = vadd.f32 %v3038, %v3086
  %v3088 = vpop.f32.mrf.mxu0
  %v3089 = vadd.f32 %v3040, %v3088
  %3090 = vmatmul.bf16.gmra.mxu0 %v785
  %v3091 = vpop.f32.mrf.mxu0
  %v3092 = vadd.f32 %v3043, %v3091
  %v3093 = vpop.f32.mrf.mxu0
  %v3094 = vadd.f32 %v3045, %v3093
  %3095 = vmatmul.bf16.gmra.mxu0 %v794
  %v3096 = vpop.f32.mrf.mxu0
  %v3097 = vadd.f32 %v3048, %v3096
  %v3098 = vpop.f32.mrf.mxu0
  %v3099 = vadd.f32 %v3050, %v3098
  %3100 = vmatmul.bf16.gmra.mxu0 %v803
  %v3101 = vpop.f32.mrf.mxu0
  %v3102 = vadd.f32 %v3053, %v3101
  %v3103 = vpop.f32.mrf.mxu0
  %v3104 = vadd.f32 %v3055, %v3103
  %3105 = vmatmul.bf16.gmra.mxu0 %v812
  %v3106 = vpop.f32.mrf.mxu0
  %v3107 = vadd.f32 %v3058, %v3106
  %v3108 = vpop.f32.mrf.mxu0
  %v3109 = vadd.f32 %v3060, %v3108
  %3110 = vdwg.mxu0
  %3111 = vmatpush.bf16.msra.mxu0 %v2004
  %3112 = vmatpush.bf16.msra.mxu0 %v2000
  %3113 = vmatpush.bf16.msra.mxu0 %v1996
  %3114 = vmatpush.bf16.msra.mxu0 %v1992
  %3115 = vmatpush.bf16.msra.mxu0 %v1988
  %3116 = vmatpush.bf16.msra.mxu0 %v1984
  %3117 = vmatpush.bf16.msra.mxu0 %v1980
  %3118 = vmatpush.bf16.msra.mxu0 %v1976
  %3119 = vmatmul.bf16.gmra.mxu0 %v750
  %v3120 = vpop.f32.mrf.mxu0
  %v3121 = vadd.f32 %v3072, %v3120
  %v3122 = vpop.f32.mrf.mxu0
  %v3123 = vadd.f32 %v3074, %v3122
  %3124 = vmatmul.bf16.gmra.mxu0 %v759
  %v3125 = vpop.f32.mrf.mxu0
  %v3126 = vadd.f32 %v3077, %v3125
  %v3127 = vpop.f32.mrf.mxu0
  %v3128 = vadd.f32 %v3079, %v3127
  %3129 = vmatmul.bf16.gmra.mxu0 %v768
  %v3130 = vpop.f32.mrf.mxu0
  %v3131 = vadd.f32 %v3082, %v3130
  %v3132 = vpop.f32.mrf.mxu0
  %v3133 = vadd.f32 %v3084, %v3132
  %3134 = vmatmul.bf16.gmra.mxu0 %v777
  %v3135 = vpop.f32.mrf.mxu0
  %v3136 = vadd.f32 %v3087, %v3135
  %v3137 = vpop.f32.mrf.mxu0
  %v3138 = vadd.f32 %v3089, %v3137
  %3139 = vmatmul.bf16.gmra.mxu0 %v786
  %v3140 = vpop.f32.mrf.mxu0
  %v3141 = vadd.f32 %v3092, %v3140
  %v3142 = vpop.f32.mrf.mxu0
  %v3143 = vadd.f32 %v3094, %v3142
  %3144 = vmatmul.bf16.gmra.mxu0 %v795
  %v3145 = vpop.f32.mrf.mxu0
  %v3146 = vadd.f32 %v3097, %v3145
  %v3147 = vpop.f32.mrf.mxu0
  %v3148 = vadd.f32 %v3099, %v3147
  %3149 = vmatmul.bf16.gmra.mxu0 %v804
  %v3150 = vpop.f32.mrf.mxu0
  %v3151 = vadd.f32 %v3102, %v3150
  %v3152 = vpop.f32.mrf.mxu0
  %v3153 = vadd.f32 %v3104, %v3152
  %3154 = vmatmul.bf16.gmra.mxu0 %v813
  %v3155 = vpop.f32.mrf.mxu0
  %v3156 = vadd.f32 %v3107, %v3155
  %v3157 = vpop.f32.mrf.mxu0
  %v3158 = vadd.f32 %v3109, %v3157
  %3159 = vdwg.mxu0
  %3160 = vmatpush.bf16.msra.mxu0 %v2036
  %3161 = vmatpush.bf16.msra.mxu0 %v2032
  %3162 = vmatpush.bf16.msra.mxu0 %v2028
  %3163 = vmatpush.bf16.msra.mxu0 %v2024
  %3164 = vmatpush.bf16.msra.mxu0 %v2020
  %3165 = vmatpush.bf16.msra.mxu0 %v2016
  %3166 = vmatpush.bf16.msra.mxu0 %v2012
  %3167 = vmatpush.bf16.msra.mxu0 %v2008
  %3168 = vmatmul.bf16.gmra.mxu0 %v751
  %v3169 = vpop.f32.mrf.mxu0
  %v3170 = vadd.f32 %v3121, %v3169
  %v3171 = vpop.f32.mrf.mxu0
  %v3172 = vadd.f32 %v3123, %v3171
  %3173 = vmatmul.bf16.gmra.mxu0 %v760
  %v3174 = vpop.f32.mrf.mxu0
  %v3175 = vadd.f32 %v3126, %v3174
  %v3176 = vpop.f32.mrf.mxu0
  %v3177 = vadd.f32 %v3128, %v3176
  %3178 = vmatmul.bf16.gmra.mxu0 %v769
  %v3179 = vpop.f32.mrf.mxu0
  %v3180 = vadd.f32 %v3131, %v3179
  %v3181 = vpop.f32.mrf.mxu0
  %v3182 = vadd.f32 %v3133, %v3181
  %3183 = vmatmul.bf16.gmra.mxu0 %v778
  %v3184 = vpop.f32.mrf.mxu0
  %v3185 = vadd.f32 %v3136, %v3184
  %v3186 = vpop.f32.mrf.mxu0
  %v3187 = vadd.f32 %v3138, %v3186
  %3188 = vmatmul.bf16.gmra.mxu0 %v787
  %v3189 = vpop.f32.mrf.mxu0
  %v3190 = vadd.f32 %v3141, %v3189
  %v3191 = vpop.f32.mrf.mxu0
  %v3192 = vadd.f32 %v3143, %v3191
  %3193 = vmatmul.bf16.gmra.mxu0 %v796
  %v3194 = vpop.f32.mrf.mxu0
  %v3195 = vadd.f32 %v3146, %v3194
  %v3196 = vpop.f32.mrf.mxu0
  %v3197 = vadd.f32 %v3148, %v3196
  %3198 = vmatmul.bf16.gmra.mxu0 %v805
  %v3199 = vpop.f32.mrf.mxu0
  %v3200 = vadd.f32 %v3151, %v3199
  %v3201 = vpop.f32.mrf.mxu0
  %v3202 = vadd.f32 %v3153, %v3201
  %3203 = vmatmul.bf16.gmra.mxu0 %v814
  %v3204 = vpop.f32.mrf.mxu0
  %v3205 = vadd.f32 %v3156, %v3204
  %v3206 = vpop.f32.mrf.mxu0
  %v3207 = vadd.f32 %v3158, %v3206
  %3208 = vdwg.mxu0
  %3209 = vmatpush.bf16.msra.mxu0 %v1781
  %3210 = vmatpush.bf16.msra.mxu0 %v1777
  %3211 = vmatpush.bf16.msra.mxu0 %v1773
  %3212 = vmatpush.bf16.msra.mxu0 %v1769
  %3213 = vmatpush.bf16.msra.mxu0 %v1765
  %3214 = vmatpush.bf16.msra.mxu0 %v1761
  %3215 = vmatpush.bf16.msra.mxu0 %v1757
  %3216 = vmatpush.bf16.msra.mxu0 %v1753
  %3217 = vmatmul.bf16.gmra.mxu0 %v743
  %v3218 = vpop.f32.mrf.mxu0
  %v3219 = vadd.f32 0.0, %v3218
  %v3220 = vpop.f32.mrf.mxu0
  %v3221 = vadd.f32 0.0, %v3220
  %3222 = vmatmul.bf16.gmra.mxu0 %v752
  %v3223 = vpop.f32.mrf.mxu0
  %v3224 = vadd.f32 0.0, %v3223
  %v3225 = vpop.f32.mrf.mxu0
  %v3226 = vadd.f32 0.0, %v3225
  %3227 = vmatmul.bf16.gmra.mxu0 %v761
  %v3228 = vpop.f32.mrf.mxu0
  %v3229 = vadd.f32 0.0, %v3228
  %v3230 = vpop.f32.mrf.mxu0
  %v3231 = vadd.f32 0.0, %v3230
  %3232 = vmatmul.bf16.gmra.mxu0 %v770
  %v3233 = vpop.f32.mrf.mxu0
  %v3234 = vadd.f32 0.0, %v3233
  %v3235 = vpop.f32.mrf.mxu0
  %v3236 = vadd.f32 0.0, %v3235
  %3237 = vmatmul.bf16.gmra.mxu0 %v779
  %v3238 = vpop.f32.mrf.mxu0
  %v3239 = vadd.f32 0.0, %v3238
  %v3240 = vpop.f32.mrf.mxu0
  %v3241 = vadd.f32 0.0, %v3240
  %3242 = vmatmul.bf16.gmra.mxu0 %v788
  %v3243 = vpop.f32.mrf.mxu0
  %v3244 = vadd.f32 0.0, %v3243
  %v3245 = vpop.f32.mrf.mxu0
  %v3246 = vadd.f32 0.0, %v3245
  %3247 = vmatmul.bf16.gmra.mxu0 %v797
  %v3248 = vpop.f32.mrf.mxu0
  %v3249 = vadd.f32 0.0, %v3248
  %v3250 = vpop.f32.mrf.mxu0
  %v3251 = vadd.f32 0.0, %v3250
  %3252 = vmatmul.bf16.gmra.mxu0 %v806
  %v3253 = vpop.f32.mrf.mxu0
  %v3254 = vadd.f32 0.0, %v3253
  %v3255 = vpop.f32.mrf.mxu0
  %v3256 = vadd.f32 0.0, %v3255
  %3257 = vdwg.mxu0
  %3258 = vmatpush.bf16.msra.mxu0 %v1813
  %3259 = vmatpush.bf16.msra.mxu0 %v1809
  %3260 = vmatpush.bf16.msra.mxu0 %v1805
  %3261 = vmatpush.bf16.msra.mxu0 %v1801
  %3262 = vmatpush.bf16.msra.mxu0 %v1797
  %3263 = vmatpush.bf16.msra.mxu0 %v1793
  %3264 = vmatpush.bf16.msra.mxu0 %v1789
  %3265 = vmatpush.bf16.msra.mxu0 %v1785
  %3266 = vmatmul.bf16.gmra.mxu0 %v744
  %v3267 = vpop.f32.mrf.mxu0
  %v3268 = vadd.f32 %v3219, %v3267
  %v3269 = vpop.f32.mrf.mxu0
  %v3270 = vadd.f32 %v3221, %v3269
  %3271 = vmatmul.bf16.gmra.mxu0 %v753
  %v3272 = vpop.f32.mrf.mxu0
  %v3273 = vadd.f32 %v3224, %v3272
  %v3274 = vpop.f32.mrf.mxu0
  %v3275 = vadd.f32 %v3226, %v3274
  %3276 = vmatmul.bf16.gmra.mxu0 %v762
  %v3277 = vpop.f32.mrf.mxu0
  %v3278 = vadd.f32 %v3229, %v3277
  %v3279 = vpop.f32.mrf.mxu0
  %v3280 = vadd.f32 %v3231, %v3279
  %3281 = vmatmul.bf16.gmra.mxu0 %v771
  %v3282 = vpop.f32.mrf.mxu0
  %v3283 = vadd.f32 %v3234, %v3282
  %v3284 = vpop.f32.mrf.mxu0
  %v3285 = vadd.f32 %v3236, %v3284
  %3286 = vmatmul.bf16.gmra.mxu0 %v780
  %v3287 = vpop.f32.mrf.mxu0
  %v3288 = vadd.f32 %v3239, %v3287
  %v3289 = vpop.f32.mrf.mxu0
  %v3290 = vadd.f32 %v3241, %v3289
  %3291 = vmatmul.bf16.gmra.mxu0 %v789
  %v3292 = vpop.f32.mrf.mxu0
  %v3293 = vadd.f32 %v3244, %v3292
  %v3294 = vpop.f32.mrf.mxu0
  %v3295 = vadd.f32 %v3246, %v3294
  %3296 = vmatmul.bf16.gmra.mxu0 %v798
  %v3297 = vpop.f32.mrf.mxu0
  %v3298 = vadd.f32 %v3249, %v3297
  %v3299 = vpop.f32.mrf.mxu0
  %v3300 = vadd.f32 %v3251, %v3299
  %3301 = vmatmul.bf16.gmra.mxu0 %v807
  %v3302 = vpop.f32.mrf.mxu0
  %v3303 = vadd.f32 %v3254, %v3302
  %v3304 = vpop.f32.mrf.mxu0
  %v3305 = vadd.f32 %v3256, %v3304
  %3306 = vdwg.mxu0
  %3307 = vmatpush.bf16.msra.mxu0 %v1845
  %3308 = vmatpush.bf16.msra.mxu0 %v1841
  %3309 = vmatpush.bf16.msra.mxu0 %v1837
  %3310 = vmatpush.bf16.msra.mxu0 %v1833
  %3311 = vmatpush.bf16.msra.mxu0 %v1829
  %3312 = vmatpush.bf16.msra.mxu0 %v1825
  %3313 = vmatpush.bf16.msra.mxu0 %v1821
  %3314 = vmatpush.bf16.msra.mxu0 %v1817
  %3315 = vmatmul.bf16.gmra.mxu0 %v745
  %v3316 = vpop.f32.mrf.mxu0
  %v3317 = vadd.f32 %v3268, %v3316
  %v3318 = vpop.f32.mrf.mxu0
  %v3319 = vadd.f32 %v3270, %v3318
  %3320 = vmatmul.bf16.gmra.mxu0 %v754
  %v3321 = vpop.f32.mrf.mxu0
  %v3322 = vadd.f32 %v3273, %v3321
  %v3323 = vpop.f32.mrf.mxu0
  %v3324 = vadd.f32 %v3275, %v3323
  %3325 = vmatmul.bf16.gmra.mxu0 %v763
  %v3326 = vpop.f32.mrf.mxu0
  %v3327 = vadd.f32 %v3278, %v3326
  %v3328 = vpop.f32.mrf.mxu0
  %v3329 = vadd.f32 %v3280, %v3328
  %3330 = vmatmul.bf16.gmra.mxu0 %v772
  %v3331 = vpop.f32.mrf.mxu0
  %v3332 = vadd.f32 %v3283, %v3331
  %v3333 = vpop.f32.mrf.mxu0
  %v3334 = vadd.f32 %v3285, %v3333
  %3335 = vmatmul.bf16.gmra.mxu0 %v781
  %v3336 = vpop.f32.mrf.mxu0
  %v3337 = vadd.f32 %v3288, %v3336
  %v3338 = vpop.f32.mrf.mxu0
  %v3339 = vadd.f32 %v3290, %v3338
  %3340 = vmatmul.bf16.gmra.mxu0 %v790
  %v3341 = vpop.f32.mrf.mxu0
  %v3342 = vadd.f32 %v3293, %v3341
  %v3343 = vpop.f32.mrf.mxu0
  %v3344 = vadd.f32 %v3295, %v3343
  %3345 = vmatmul.bf16.gmra.mxu0 %v799
  %v3346 = vpop.f32.mrf.mxu0
  %v3347 = vadd.f32 %v3298, %v3346
  %v3348 = vpop.f32.mrf.mxu0
  %v3349 = vadd.f32 %v3300, %v3348
  %3350 = vmatmul.bf16.gmra.mxu0 %v808
  %v3351 = vpop.f32.mrf.mxu0
  %v3352 = vadd.f32 %v3303, %v3351
  %v3353 = vpop.f32.mrf.mxu0
  %v3354 = vadd.f32 %v3305, %v3353
  %3355 = vdwg.mxu0
  %3356 = vmatpush.bf16.msra.mxu0 %v1877
  %3357 = vmatpush.bf16.msra.mxu0 %v1873
  %3358 = vmatpush.bf16.msra.mxu0 %v1869
  %3359 = vmatpush.bf16.msra.mxu0 %v1865
  %3360 = vmatpush.bf16.msra.mxu0 %v1861
  %3361 = vmatpush.bf16.msra.mxu0 %v1857
  %3362 = vmatpush.bf16.msra.mxu0 %v1853
  %3363 = vmatpush.bf16.msra.mxu0 %v1849
  %3364 = vmatmul.bf16.gmra.mxu0 %v746
  %v3365 = vpop.f32.mrf.mxu0
  %v3366 = vadd.f32 %v3317, %v3365
  %v3367 = vpop.f32.mrf.mxu0
  %v3368 = vadd.f32 %v3319, %v3367
  %3369 = vmatmul.bf16.gmra.mxu0 %v755
  %v3370 = vpop.f32.mrf.mxu0
  %v3371 = vadd.f32 %v3322, %v3370
  %v3372 = vpop.f32.mrf.mxu0
  %v3373 = vadd.f32 %v3324, %v3372
  %3374 = vmatmul.bf16.gmra.mxu0 %v764
  %v3375 = vpop.f32.mrf.mxu0
  %v3376 = vadd.f32 %v3327, %v3375
  %v3377 = vpop.f32.mrf.mxu0
  %v3378 = vadd.f32 %v3329, %v3377
  %3379 = vmatmul.bf16.gmra.mxu0 %v773
  %v3380 = vpop.f32.mrf.mxu0
  %v3381 = vadd.f32 %v3332, %v3380
  %v3382 = vpop.f32.mrf.mxu0
  %v3383 = vadd.f32 %v3334, %v3382
  %3384 = vmatmul.bf16.gmra.mxu0 %v782
  %v3385 = vpop.f32.mrf.mxu0
  %v3386 = vadd.f32 %v3337, %v3385
  %v3387 = vpop.f32.mrf.mxu0
  %v3388 = vadd.f32 %v3339, %v3387
  %3389 = vmatmul.bf16.gmra.mxu0 %v791
  %v3390 = vpop.f32.mrf.mxu0
  %v3391 = vadd.f32 %v3342, %v3390
  %v3392 = vpop.f32.mrf.mxu0
  %v3393 = vadd.f32 %v3344, %v3392
  %3394 = vmatmul.bf16.gmra.mxu0 %v800
  %v3395 = vpop.f32.mrf.mxu0
  %v3396 = vadd.f32 %v3347, %v3395
  %v3397 = vpop.f32.mrf.mxu0
  %v3398 = vadd.f32 %v3349, %v3397
  %3399 = vmatmul.bf16.gmra.mxu0 %v809
  %v3400 = vpop.f32.mrf.mxu0
  %v3401 = vadd.f32 %v3352, %v3400
  %v3402 = vpop.f32.mrf.mxu0
  %v3403 = vadd.f32 %v3354, %v3402
  %3404 = vdwg.mxu0
  %3405 = vmatpush.bf16.msra.mxu0 %v1909
  %3406 = vmatpush.bf16.msra.mxu0 %v1905
  %3407 = vmatpush.bf16.msra.mxu0 %v1901
  %3408 = vmatpush.bf16.msra.mxu0 %v1897
  %3409 = vmatpush.bf16.msra.mxu0 %v1893
  %3410 = vmatpush.bf16.msra.mxu0 %v1889
  %3411 = vmatpush.bf16.msra.mxu0 %v1885
  %3412 = vmatpush.bf16.msra.mxu0 %v1881
  %3413 = vmatmul.bf16.gmra.mxu0 %v747
  %v3414 = vpop.f32.mrf.mxu0
  %v3415 = vadd.f32 %v3366, %v3414
  %v3416 = vpop.f32.mrf.mxu0
  %v3417 = vadd.f32 %v3368, %v3416
  %3418 = vmatmul.bf16.gmra.mxu0 %v756
  %v3419 = vpop.f32.mrf.mxu0
  %v3420 = vadd.f32 %v3371, %v3419
  %v3421 = vpop.f32.mrf.mxu0
  %v3422 = vadd.f32 %v3373, %v3421
  %3423 = vmatmul.bf16.gmra.mxu0 %v765
  %v3424 = vpop.f32.mrf.mxu0
  %v3425 = vadd.f32 %v3376, %v3424
  %v3426 = vpop.f32.mrf.mxu0
  %v3427 = vadd.f32 %v3378, %v3426
  %3428 = vmatmul.bf16.gmra.mxu0 %v774
  %v3429 = vpop.f32.mrf.mxu0
  %v3430 = vadd.f32 %v3381, %v3429
  %v3431 = vpop.f32.mrf.mxu0
  %v3432 = vadd.f32 %v3383, %v3431
  %3433 = vmatmul.bf16.gmra.mxu0 %v783
  %v3434 = vpop.f32.mrf.mxu0
  %v3435 = vadd.f32 %v3386, %v3434
  %v3436 = vpop.f32.mrf.mxu0
  %v3437 = vadd.f32 %v3388, %v3436
  %3438 = vmatmul.bf16.gmra.mxu0 %v792
  %v3439 = vpop.f32.mrf.mxu0
  %v3440 = vadd.f32 %v3391, %v3439
  %v3441 = vpop.f32.mrf.mxu0
  %v3442 = vadd.f32 %v3393, %v3441
  %3443 = vmatmul.bf16.gmra.mxu0 %v801
  %v3444 = vpop.f32.mrf.mxu0
  %v3445 = vadd.f32 %v3396, %v3444
  %v3446 = vpop.f32.mrf.mxu0
  %v3447 = vadd.f32 %v3398, %v3446
  %3448 = vmatmul.bf16.gmra.mxu0 %v810
  %v3449 = vpop.f32.mrf.mxu0
  %v3450 = vadd.f32 %v3401, %v3449
  %v3451 = vpop.f32.mrf.mxu0
  %v3452 = vadd.f32 %v3403, %v3451
  %3453 = vdwg.mxu0
  %3454 = vmatpush.bf16.msra.mxu0 %v1941
  %3455 = vmatpush.bf16.msra.mxu0 %v1937
  %3456 = vmatpush.bf16.msra.mxu0 %v1933
  %3457 = vmatpush.bf16.msra.mxu0 %v1929
  %3458 = vmatpush.bf16.msra.mxu0 %v1925
  %3459 = vmatpush.bf16.msra.mxu0 %v1921
  %3460 = vmatpush.bf16.msra.mxu0 %v1917
  %3461 = vmatpush.bf16.msra.mxu0 %v1913
  %3462 = vmatmul.bf16.gmra.mxu0 %v748
  %v3463 = vpop.f32.mrf.mxu0
  %v3464 = vadd.f32 %v3415, %v3463
  %v3465 = vpop.f32.mrf.mxu0
  %v3466 = vadd.f32 %v3417, %v3465
  %3467 = vmatmul.bf16.gmra.mxu0 %v757
  %v3468 = vpop.f32.mrf.mxu0
  %v3469 = vadd.f32 %v3420, %v3468
  %v3470 = vpop.f32.mrf.mxu0
  %v3471 = vadd.f32 %v3422, %v3470
  %3472 = vmatmul.bf16.gmra.mxu0 %v766
  %v3473 = vpop.f32.mrf.mxu0
  %v3474 = vadd.f32 %v3425, %v3473
  %v3475 = vpop.f32.mrf.mxu0
  %v3476 = vadd.f32 %v3427, %v3475
  %3477 = vmatmul.bf16.gmra.mxu0 %v775
  %v3478 = vpop.f32.mrf.mxu0
  %v3479 = vadd.f32 %v3430, %v3478
  %v3480 = vpop.f32.mrf.mxu0
  %v3481 = vadd.f32 %v3432, %v3480
  %3482 = vmatmul.bf16.gmra.mxu0 %v784
  %v3483 = vpop.f32.mrf.mxu0
  %v3484 = vadd.f32 %v3435, %v3483
  %v3485 = vpop.f32.mrf.mxu0
  %v3486 = vadd.f32 %v3437, %v3485
  %3487 = vmatmul.bf16.gmra.mxu0 %v793
  %v3488 = vpop.f32.mrf.mxu0
  %v3489 = vadd.f32 %v3440, %v3488
  %v3490 = vpop.f32.mrf.mxu0
  %v3491 = vadd.f32 %v3442, %v3490
  %3492 = vmatmul.bf16.gmra.mxu0 %v802
  %v3493 = vpop.f32.mrf.mxu0
  %v3494 = vadd.f32 %v3445, %v3493
  %v3495 = vpop.f32.mrf.mxu0
  %v3496 = vadd.f32 %v3447, %v3495
  %3497 = vmatmul.bf16.gmra.mxu0 %v811
  %v3498 = vpop.f32.mrf.mxu0
  %v3499 = vadd.f32 %v3450, %v3498
  %v3500 = vpop.f32.mrf.mxu0
  %v3501 = vadd.f32 %v3452, %v3500
  %3502 = vdwg.mxu0
  %3503 = vmatpush.bf16.msra.mxu0 %v1973
  %3504 = vmatpush.bf16.msra.mxu0 %v1969
  %3505 = vmatpush.bf16.msra.mxu0 %v1965
  %3506 = vmatpush.bf16.msra.mxu0 %v1961
  %3507 = vmatpush.bf16.msra.mxu0 %v1957
  %3508 = vmatpush.bf16.msra.mxu0 %v1953
  %3509 = vmatpush.bf16.msra.mxu0 %v1949
  %3510 = vmatpush.bf16.msra.mxu0 %v1945
  %3511 = vmatmul.bf16.gmra.mxu0 %v749
  %v3512 = vpop.f32.mrf.mxu0
  %v3513 = vadd.f32 %v3464, %v3512
  %v3514 = vpop.f32.mrf.mxu0
  %v3515 = vadd.f32 %v3466, %v3514
  %3516 = vmatmul.bf16.gmra.mxu0 %v758
  %v3517 = vpop.f32.mrf.mxu0
  %v3518 = vadd.f32 %v3469, %v3517
  %v3519 = vpop.f32.mrf.mxu0
  %v3520 = vadd.f32 %v3471, %v3519
  %3521 = vmatmul.bf16.gmra.mxu0 %v767
  %v3522 = vpop.f32.mrf.mxu0
  %v3523 = vadd.f32 %v3474, %v3522
  %v3524 = vpop.f32.mrf.mxu0
  %v3525 = vadd.f32 %v3476, %v3524
  %3526 = vmatmul.bf16.gmra.mxu0 %v776
  %v3527 = vpop.f32.mrf.mxu0
  %v3528 = vadd.f32 %v3479, %v3527
  %v3529 = vpop.f32.mrf.mxu0
  %v3530 = vadd.f32 %v3481, %v3529
  %3531 = vmatmul.bf16.gmra.mxu0 %v785
  %v3532 = vpop.f32.mrf.mxu0
  %v3533 = vadd.f32 %v3484, %v3532
  %v3534 = vpop.f32.mrf.mxu0
  %v3535 = vadd.f32 %v3486, %v3534
  %3536 = vmatmul.bf16.gmra.mxu0 %v794
  %v3537 = vpop.f32.mrf.mxu0
  %v3538 = vadd.f32 %v3489, %v3537
  %v3539 = vpop.f32.mrf.mxu0
  %v3540 = vadd.f32 %v3491, %v3539
  %3541 = vmatmul.bf16.gmra.mxu0 %v803
  %v3542 = vpop.f32.mrf.mxu0
  %v3543 = vadd.f32 %v3494, %v3542
  %v3544 = vpop.f32.mrf.mxu0
  %v3545 = vadd.f32 %v3496, %v3544
  %3546 = vmatmul.bf16.gmra.mxu0 %v812
  %v3547 = vpop.f32.mrf.mxu0
  %v3548 = vadd.f32 %v3499, %v3547
  %v3549 = vpop.f32.mrf.mxu0
  %v3550 = vadd.f32 %v3501, %v3549
  %3551 = vdwg.mxu0
  %3552 = vmatpush.bf16.msra.mxu0 %v2005
  %3553 = vmatpush.bf16.msra.mxu0 %v2001
  %3554 = vmatpush.bf16.msra.mxu0 %v1997
  %3555 = vmatpush.bf16.msra.mxu0 %v1993
  %3556 = vmatpush.bf16.msra.mxu0 %v1989
  %3557 = vmatpush.bf16.msra.mxu0 %v1985
  %3558 = vmatpush.bf16.msra.mxu0 %v1981
  %3559 = vmatpush.bf16.msra.mxu0 %v1977
  %3560 = vmatmul.bf16.gmra.mxu0 %v750
  %v3561 = vpop.f32.mrf.mxu0
  %v3562 = vadd.f32 %v3513, %v3561
  %v3563 = vpop.f32.mrf.mxu0
  %v3564 = vadd.f32 %v3515, %v3563
  %3565 = vmatmul.bf16.gmra.mxu0 %v759
  %v3566 = vpop.f32.mrf.mxu0
  %v3567 = vadd.f32 %v3518, %v3566
  %v3568 = vpop.f32.mrf.mxu0
  %v3569 = vadd.f32 %v3520, %v3568
  %3570 = vmatmul.bf16.gmra.mxu0 %v768
  %v3571 = vpop.f32.mrf.mxu0
  %v3572 = vadd.f32 %v3523, %v3571
  %v3573 = vpop.f32.mrf.mxu0
  %v3574 = vadd.f32 %v3525, %v3573
  %3575 = vmatmul.bf16.gmra.mxu0 %v777
  %v3576 = vpop.f32.mrf.mxu0
  %v3577 = vadd.f32 %v3528, %v3576
  %v3578 = vpop.f32.mrf.mxu0
  %v3579 = vadd.f32 %v3530, %v3578
  %3580 = vmatmul.bf16.gmra.mxu0 %v786
  %v3581 = vpop.f32.mrf.mxu0
  %v3582 = vadd.f32 %v3533, %v3581
  %v3583 = vpop.f32.mrf.mxu0
  %v3584 = vadd.f32 %v3535, %v3583
  %3585 = vmatmul.bf16.gmra.mxu0 %v795
  %v3586 = vpop.f32.mrf.mxu0
  %v3587 = vadd.f32 %v3538, %v3586
  %v3588 = vpop.f32.mrf.mxu0
  %v3589 = vadd.f32 %v3540, %v3588
  %3590 = vmatmul.bf16.gmra.mxu0 %v804
  %v3591 = vpop.f32.mrf.mxu0
  %v3592 = vadd.f32 %v3543, %v3591
  %v3593 = vpop.f32.mrf.mxu0
  %v3594 = vadd.f32 %v3545, %v3593
  %3595 = vmatmul.bf16.gmra.mxu0 %v813
  %v3596 = vpop.f32.mrf.mxu0
  %v3597 = vadd.f32 %v3548, %v3596
  %v3598 = vpop.f32.mrf.mxu0
  %v3599 = vadd.f32 %v3550, %v3598
  %3600 = vdwg.mxu0
  %3601 = vmatpush.bf16.msra.mxu0 %v2037
  %3602 = vmatpush.bf16.msra.mxu0 %v2033
  %3603 = vmatpush.bf16.msra.mxu0 %v2029
  %3604 = vmatpush.bf16.msra.mxu0 %v2025
  %3605 = vmatpush.bf16.msra.mxu0 %v2021
  %3606 = vmatpush.bf16.msra.mxu0 %v2017
  %3607 = vmatpush.bf16.msra.mxu0 %v2013
  %3608 = vmatpush.bf16.msra.mxu0 %v2009
  %3609 = vmatmul.bf16.gmra.mxu0 %v751
  %v3610 = vpop.f32.mrf.mxu0
  %v3611 = vadd.f32 %v3562, %v3610
  %v3612 = vpop.f32.mrf.mxu0
  %v3613 = vadd.f32 %v3564, %v3612
  %3614 = vmatmul.bf16.gmra.mxu0 %v760
  %v3615 = vpop.f32.mrf.mxu0
  %v3616 = vadd.f32 %v3567, %v3615
  %v3617 = vpop.f32.mrf.mxu0
  %v3618 = vadd.f32 %v3569, %v3617
  %3619 = vmatmul.bf16.gmra.mxu0 %v769
  %v3620 = vpop.f32.mrf.mxu0
  %v3621 = vadd.f32 %v3572, %v3620
  %v3622 = vpop.f32.mrf.mxu0
  %v3623 = vadd.f32 %v3574, %v3622
  %3624 = vmatmul.bf16.gmra.mxu0 %v778
  %v3625 = vpop.f32.mrf.mxu0
  %v3626 = vadd.f32 %v3577, %v3625
  %v3627 = vpop.f32.mrf.mxu0
  %v3628 = vadd.f32 %v3579, %v3627
  %3629 = vmatmul.bf16.gmra.mxu0 %v787
  %v3630 = vpop.f32.mrf.mxu0
  %v3631 = vadd.f32 %v3582, %v3630
  %v3632 = vpop.f32.mrf.mxu0
  %v3633 = vadd.f32 %v3584, %v3632
  %3634 = vmatmul.bf16.gmra.mxu0 %v796
  %v3635 = vpop.f32.mrf.mxu0
  %v3636 = vadd.f32 %v3587, %v3635
  %v3637 = vpop.f32.mrf.mxu0
  %v3638 = vadd.f32 %v3589, %v3637
  %3639 = vmatmul.bf16.gmra.mxu0 %v805
  %v3640 = vpop.f32.mrf.mxu0
  %v3641 = vadd.f32 %v3592, %v3640
  %v3642 = vpop.f32.mrf.mxu0
  %v3643 = vadd.f32 %v3594, %v3642
  %3644 = vmatmul.bf16.gmra.mxu0 %v814
  %v3645 = vpop.f32.mrf.mxu0
  %v3646 = vadd.f32 %v3597, %v3645
  %v3647 = vpop.f32.mrf.mxu0
  %v3648 = vadd.f32 %v3599, %v3647
  %3649 = vdwg.mxu0
  %3650 = vmatpush.bf16.msra.mxu0 %v1782
  %3651 = vmatpush.bf16.msra.mxu0 %v1778
  %3652 = vmatpush.bf16.msra.mxu0 %v1774
  %3653 = vmatpush.bf16.msra.mxu0 %v1770
  %3654 = vmatpush.bf16.msra.mxu0 %v1766
  %3655 = vmatpush.bf16.msra.mxu0 %v1762
  %3656 = vmatpush.bf16.msra.mxu0 %v1758
  %3657 = vmatpush.bf16.msra.mxu0 %v1754
  %3658 = vmatmul.bf16.gmra.mxu0 %v743
  %v3659 = vpop.f32.mrf.mxu0
  %v3660 = vadd.f32 0.0, %v3659
  %v3661 = vpop.f32.mrf.mxu0
  %v3662 = vadd.f32 0.0, %v3661
  %3663 = vmatmul.bf16.gmra.mxu0 %v752
  %v3664 = vpop.f32.mrf.mxu0
  %v3665 = vadd.f32 0.0, %v3664
  %v3666 = vpop.f32.mrf.mxu0
  %v3667 = vadd.f32 0.0, %v3666
  %3668 = vmatmul.bf16.gmra.mxu0 %v761
  %v3669 = vpop.f32.mrf.mxu0
  %v3670 = vadd.f32 0.0, %v3669
  %v3671 = vpop.f32.mrf.mxu0
  %v3672 = vadd.f32 0.0, %v3671
  %3673 = vmatmul.bf16.gmra.mxu0 %v770
  %v3674 = vpop.f32.mrf.mxu0
  %v3675 = vadd.f32 0.0, %v3674
  %v3676 = vpop.f32.mrf.mxu0
  %v3677 = vadd.f32 0.0, %v3676
  %3678 = vmatmul.bf16.gmra.mxu0 %v779
  %v3679 = vpop.f32.mrf.mxu0
  %v3680 = vadd.f32 0.0, %v3679
  %v3681 = vpop.f32.mrf.mxu0
  %v3682 = vadd.f32 0.0, %v3681
  %3683 = vmatmul.bf16.gmra.mxu0 %v788
  %v3684 = vpop.f32.mrf.mxu0
  %v3685 = vadd.f32 0.0, %v3684
  %v3686 = vpop.f32.mrf.mxu0
  %v3687 = vadd.f32 0.0, %v3686
  %3688 = vmatmul.bf16.gmra.mxu0 %v797
  %v3689 = vpop.f32.mrf.mxu0
  %v3690 = vadd.f32 0.0, %v3689
  %v3691 = vpop.f32.mrf.mxu0
  %v3692 = vadd.f32 0.0, %v3691
  %3693 = vmatmul.bf16.gmra.mxu0 %v806
  %v3694 = vpop.f32.mrf.mxu0
  %v3695 = vadd.f32 0.0, %v3694
  %v3696 = vpop.f32.mrf.mxu0
  %v3697 = vadd.f32 0.0, %v3696
  %3698 = vdwg.mxu0
  %3699 = vmatpush.bf16.msra.mxu0 %v1814
  %3700 = vmatpush.bf16.msra.mxu0 %v1810
  %3701 = vmatpush.bf16.msra.mxu0 %v1806
  %3702 = vmatpush.bf16.msra.mxu0 %v1802
  %3703 = vmatpush.bf16.msra.mxu0 %v1798
  %3704 = vmatpush.bf16.msra.mxu0 %v1794
  %3705 = vmatpush.bf16.msra.mxu0 %v1790
  %3706 = vmatpush.bf16.msra.mxu0 %v1786
  %3707 = vmatmul.bf16.gmra.mxu0 %v744
  %v3708 = vpop.f32.mrf.mxu0
  %v3709 = vadd.f32 %v3660, %v3708
  %v3710 = vpop.f32.mrf.mxu0
  %v3711 = vadd.f32 %v3662, %v3710
  %3712 = vmatmul.bf16.gmra.mxu0 %v753
  %v3713 = vpop.f32.mrf.mxu0
  %v3714 = vadd.f32 %v3665, %v3713
  %v3715 = vpop.f32.mrf.mxu0
  %v3716 = vadd.f32 %v3667, %v3715
  %3717 = vmatmul.bf16.gmra.mxu0 %v762
  %v3718 = vpop.f32.mrf.mxu0
  %v3719 = vadd.f32 %v3670, %v3718
  %v3720 = vpop.f32.mrf.mxu0
  %v3721 = vadd.f32 %v3672, %v3720
  %3722 = vmatmul.bf16.gmra.mxu0 %v771
  %v3723 = vpop.f32.mrf.mxu0
  %v3724 = vadd.f32 %v3675, %v3723
  %v3725 = vpop.f32.mrf.mxu0
  %v3726 = vadd.f32 %v3677, %v3725
  %3727 = vmatmul.bf16.gmra.mxu0 %v780
  %v3728 = vpop.f32.mrf.mxu0
  %v3729 = vadd.f32 %v3680, %v3728
  %v3730 = vpop.f32.mrf.mxu0
  %v3731 = vadd.f32 %v3682, %v3730
  %3732 = vmatmul.bf16.gmra.mxu0 %v789
  %v3733 = vpop.f32.mrf.mxu0
  %v3734 = vadd.f32 %v3685, %v3733
  %v3735 = vpop.f32.mrf.mxu0
  %v3736 = vadd.f32 %v3687, %v3735
  %3737 = vmatmul.bf16.gmra.mxu0 %v798
  %v3738 = vpop.f32.mrf.mxu0
  %v3739 = vadd.f32 %v3690, %v3738
  %v3740 = vpop.f32.mrf.mxu0
  %v3741 = vadd.f32 %v3692, %v3740
  %3742 = vmatmul.bf16.gmra.mxu0 %v807
  %v3743 = vpop.f32.mrf.mxu0
  %v3744 = vadd.f32 %v3695, %v3743
  %v3745 = vpop.f32.mrf.mxu0
  %v3746 = vadd.f32 %v3697, %v3745
  %3747 = vdwg.mxu0
  %3748 = vmatpush.bf16.msra.mxu0 %v1846
  %3749 = vmatpush.bf16.msra.mxu0 %v1842
  %3750 = vmatpush.bf16.msra.mxu0 %v1838
  %3751 = vmatpush.bf16.msra.mxu0 %v1834
  %3752 = vmatpush.bf16.msra.mxu0 %v1830
  %3753 = vmatpush.bf16.msra.mxu0 %v1826
  %3754 = vmatpush.bf16.msra.mxu0 %v1822
  %3755 = vmatpush.bf16.msra.mxu0 %v1818
  %3756 = vmatmul.bf16.gmra.mxu0 %v745
  %v3757 = vpop.f32.mrf.mxu0
  %v3758 = vadd.f32 %v3709, %v3757
  %v3759 = vpop.f32.mrf.mxu0
  %v3760 = vadd.f32 %v3711, %v3759
  %3761 = vmatmul.bf16.gmra.mxu0 %v754
  %v3762 = vpop.f32.mrf.mxu0
  %v3763 = vadd.f32 %v3714, %v3762
  %v3764 = vpop.f32.mrf.mxu0
  %v3765 = vadd.f32 %v3716, %v3764
  %3766 = vmatmul.bf16.gmra.mxu0 %v763
  %v3767 = vpop.f32.mrf.mxu0
  %v3768 = vadd.f32 %v3719, %v3767
  %v3769 = vpop.f32.mrf.mxu0
  %v3770 = vadd.f32 %v3721, %v3769
  %3771 = vmatmul.bf16.gmra.mxu0 %v772
  %v3772 = vpop.f32.mrf.mxu0
  %v3773 = vadd.f32 %v3724, %v3772
  %v3774 = vpop.f32.mrf.mxu0
  %v3775 = vadd.f32 %v3726, %v3774
  %3776 = vmatmul.bf16.gmra.mxu0 %v781
  %v3777 = vpop.f32.mrf.mxu0
  %v3778 = vadd.f32 %v3729, %v3777
  %v3779 = vpop.f32.mrf.mxu0
  %v3780 = vadd.f32 %v3731, %v3779
  %3781 = vmatmul.bf16.gmra.mxu0 %v790
  %v3782 = vpop.f32.mrf.mxu0
  %v3783 = vadd.f32 %v3734, %v3782
  %v3784 = vpop.f32.mrf.mxu0
  %v3785 = vadd.f32 %v3736, %v3784
  %3786 = vmatmul.bf16.gmra.mxu0 %v799
  %v3787 = vpop.f32.mrf.mxu0
  %v3788 = vadd.f32 %v3739, %v3787
  %v3789 = vpop.f32.mrf.mxu0
  %v3790 = vadd.f32 %v3741, %v3789
  %3791 = vmatmul.bf16.gmra.mxu0 %v808
  %v3792 = vpop.f32.mrf.mxu0
  %v3793 = vadd.f32 %v3744, %v3792
  %v3794 = vpop.f32.mrf.mxu0
  %v3795 = vadd.f32 %v3746, %v3794
  %3796 = vdwg.mxu0
  %3797 = vmatpush.bf16.msra.mxu0 %v1878
  %3798 = vmatpush.bf16.msra.mxu0 %v1874
  %3799 = vmatpush.bf16.msra.mxu0 %v1870
  %3800 = vmatpush.bf16.msra.mxu0 %v1866
  %3801 = vmatpush.bf16.msra.mxu0 %v1862
  %3802 = vmatpush.bf16.msra.mxu0 %v1858
  %3803 = vmatpush.bf16.msra.mxu0 %v1854
  %3804 = vmatpush.bf16.msra.mxu0 %v1850
  %3805 = vmatmul.bf16.gmra.mxu0 %v746
  %v3806 = vpop.f32.mrf.mxu0
  %v3807 = vadd.f32 %v3758, %v3806
  %v3808 = vpop.f32.mrf.mxu0
  %v3809 = vadd.f32 %v3760, %v3808
  %3810 = vmatmul.bf16.gmra.mxu0 %v755
  %v3811 = vpop.f32.mrf.mxu0
  %v3812 = vadd.f32 %v3763, %v3811
  %v3813 = vpop.f32.mrf.mxu0
  %v3814 = vadd.f32 %v3765, %v3813
  %3815 = vmatmul.bf16.gmra.mxu0 %v764
  %v3816 = vpop.f32.mrf.mxu0
  %v3817 = vadd.f32 %v3768, %v3816
  %v3818 = vpop.f32.mrf.mxu0
  %v3819 = vadd.f32 %v3770, %v3818
  %3820 = vmatmul.bf16.gmra.mxu0 %v773
  %v3821 = vpop.f32.mrf.mxu0
  %v3822 = vadd.f32 %v3773, %v3821
  %v3823 = vpop.f32.mrf.mxu0
  %v3824 = vadd.f32 %v3775, %v3823
  %3825 = vmatmul.bf16.gmra.mxu0 %v782
  %v3826 = vpop.f32.mrf.mxu0
  %v3827 = vadd.f32 %v3778, %v3826
  %v3828 = vpop.f32.mrf.mxu0
  %v3829 = vadd.f32 %v3780, %v3828
  %3830 = vmatmul.bf16.gmra.mxu0 %v791
  %v3831 = vpop.f32.mrf.mxu0
  %v3832 = vadd.f32 %v3783, %v3831
  %v3833 = vpop.f32.mrf.mxu0
  %v3834 = vadd.f32 %v3785, %v3833
  %3835 = vmatmul.bf16.gmra.mxu0 %v800
  %v3836 = vpop.f32.mrf.mxu0
  %v3837 = vadd.f32 %v3788, %v3836
  %v3838 = vpop.f32.mrf.mxu0
  %v3839 = vadd.f32 %v3790, %v3838
  %3840 = vmatmul.bf16.gmra.mxu0 %v809
  %v3841 = vpop.f32.mrf.mxu0
  %v3842 = vadd.f32 %v3793, %v3841
  %v3843 = vpop.f32.mrf.mxu0
  %v3844 = vadd.f32 %v3795, %v3843
  %3845 = vdwg.mxu0
  %3846 = vmatpush.bf16.msra.mxu0 %v1910
  %3847 = vmatpush.bf16.msra.mxu0 %v1906
  %3848 = vmatpush.bf16.msra.mxu0 %v1902
  %3849 = vmatpush.bf16.msra.mxu0 %v1898
  %3850 = vmatpush.bf16.msra.mxu0 %v1894
  %3851 = vmatpush.bf16.msra.mxu0 %v1890
  %3852 = vmatpush.bf16.msra.mxu0 %v1886
  %3853 = vmatpush.bf16.msra.mxu0 %v1882
  %3854 = vmatmul.bf16.gmra.mxu0 %v747
  %v3855 = vpop.f32.mrf.mxu0
  %v3856 = vadd.f32 %v3807, %v3855
  %v3857 = vpop.f32.mrf.mxu0
  %v3858 = vadd.f32 %v3809, %v3857
  %3859 = vmatmul.bf16.gmra.mxu0 %v756
  %v3860 = vpop.f32.mrf.mxu0
  %v3861 = vadd.f32 %v3812, %v3860
  %v3862 = vpop.f32.mrf.mxu0
  %v3863 = vadd.f32 %v3814, %v3862
  %3864 = vmatmul.bf16.gmra.mxu0 %v765
  %v3865 = vpop.f32.mrf.mxu0
  %v3866 = vadd.f32 %v3817, %v3865
  %v3867 = vpop.f32.mrf.mxu0
  %v3868 = vadd.f32 %v3819, %v3867
  %3869 = vmatmul.bf16.gmra.mxu0 %v774
  %v3870 = vpop.f32.mrf.mxu0
  %v3871 = vadd.f32 %v3822, %v3870
  %v3872 = vpop.f32.mrf.mxu0
  %v3873 = vadd.f32 %v3824, %v3872
  %3874 = vmatmul.bf16.gmra.mxu0 %v783
  %v3875 = vpop.f32.mrf.mxu0
  %v3876 = vadd.f32 %v3827, %v3875
  %v3877 = vpop.f32.mrf.mxu0
  %v3878 = vadd.f32 %v3829, %v3877
  %3879 = vmatmul.bf16.gmra.mxu0 %v792
  %v3880 = vpop.f32.mrf.mxu0
  %v3881 = vadd.f32 %v3832, %v3880
  %v3882 = vpop.f32.mrf.mxu0
  %v3883 = vadd.f32 %v3834, %v3882
  %3884 = vmatmul.bf16.gmra.mxu0 %v801
  %v3885 = vpop.f32.mrf.mxu0
  %v3886 = vadd.f32 %v3837, %v3885
  %v3887 = vpop.f32.mrf.mxu0
  %v3888 = vadd.f32 %v3839, %v3887
  %3889 = vmatmul.bf16.gmra.mxu0 %v810
  %v3890 = vpop.f32.mrf.mxu0
  %v3891 = vadd.f32 %v3842, %v3890
  %v3892 = vpop.f32.mrf.mxu0
  %v3893 = vadd.f32 %v3844, %v3892
  %3894 = vdwg.mxu0
  %3895 = vmatpush.bf16.msra.mxu0 %v1942
  %3896 = vmatpush.bf16.msra.mxu0 %v1938
  %3897 = vmatpush.bf16.msra.mxu0 %v1934
  %3898 = vmatpush.bf16.msra.mxu0 %v1930
  %3899 = vmatpush.bf16.msra.mxu0 %v1926
  %3900 = vmatpush.bf16.msra.mxu0 %v1922
  %3901 = vmatpush.bf16.msra.mxu0 %v1918
  %3902 = vmatpush.bf16.msra.mxu0 %v1914
  %3903 = vmatmul.bf16.gmra.mxu0 %v748
  %v3904 = vpop.f32.mrf.mxu0
  %v3905 = vadd.f32 %v3856, %v3904
  %v3906 = vpop.f32.mrf.mxu0
  %v3907 = vadd.f32 %v3858, %v3906
  %3908 = vmatmul.bf16.gmra.mxu0 %v757
  %v3909 = vpop.f32.mrf.mxu0
  %v3910 = vadd.f32 %v3861, %v3909
  %v3911 = vpop.f32.mrf.mxu0
  %v3912 = vadd.f32 %v3863, %v3911
  %3913 = vmatmul.bf16.gmra.mxu0 %v766
  %v3914 = vpop.f32.mrf.mxu0
  %v3915 = vadd.f32 %v3866, %v3914
  %v3916 = vpop.f32.mrf.mxu0
  %v3917 = vadd.f32 %v3868, %v3916
  %3918 = vmatmul.bf16.gmra.mxu0 %v775
  %v3919 = vpop.f32.mrf.mxu0
  %v3920 = vadd.f32 %v3871, %v3919
  %v3921 = vpop.f32.mrf.mxu0
  %v3922 = vadd.f32 %v3873, %v3921
  %3923 = vmatmul.bf16.gmra.mxu0 %v784
  %v3924 = vpop.f32.mrf.mxu0
  %v3925 = vadd.f32 %v3876, %v3924
  %v3926 = vpop.f32.mrf.mxu0
  %v3927 = vadd.f32 %v3878, %v3926
  %3928 = vmatmul.bf16.gmra.mxu0 %v793
  %v3929 = vpop.f32.mrf.mxu0
  %v3930 = vadd.f32 %v3881, %v3929
  %v3931 = vpop.f32.mrf.mxu0
  %v3932 = vadd.f32 %v3883, %v3931
  %3933 = vmatmul.bf16.gmra.mxu0 %v802
  %v3934 = vpop.f32.mrf.mxu0
  %v3935 = vadd.f32 %v3886, %v3934
  %v3936 = vpop.f32.mrf.mxu0
  %v3937 = vadd.f32 %v3888, %v3936
  %3938 = vmatmul.bf16.gmra.mxu0 %v811
  %v3939 = vpop.f32.mrf.mxu0
  %v3940 = vadd.f32 %v3891, %v3939
  %v3941 = vpop.f32.mrf.mxu0
  %v3942 = vadd.f32 %v3893, %v3941
  %3943 = vdwg.mxu0
  %3944 = vmatpush.bf16.msra.mxu0 %v1974
  %3945 = vmatpush.bf16.msra.mxu0 %v1970
  %3946 = vmatpush.bf16.msra.mxu0 %v1966
  %3947 = vmatpush.bf16.msra.mxu0 %v1962
  %3948 = vmatpush.bf16.msra.mxu0 %v1958
  %3949 = vmatpush.bf16.msra.mxu0 %v1954
  %3950 = vmatpush.bf16.msra.mxu0 %v1950
  %3951 = vmatpush.bf16.msra.mxu0 %v1946
  %3952 = vmatmul.bf16.gmra.mxu0 %v749
  %v3953 = vpop.f32.mrf.mxu0
  %v3954 = vadd.f32 %v3905, %v3953
  %v3955 = vpop.f32.mrf.mxu0
  %v3956 = vadd.f32 %v3907, %v3955
  %3957 = vmatmul.bf16.gmra.mxu0 %v758
  %v3958 = vpop.f32.mrf.mxu0
  %v3959 = vadd.f32 %v3910, %v3958
  %v3960 = vpop.f32.mrf.mxu0
  %v3961 = vadd.f32 %v3912, %v3960
  %3962 = vmatmul.bf16.gmra.mxu0 %v767
  %v3963 = vpop.f32.mrf.mxu0
  %v3964 = vadd.f32 %v3915, %v3963
  %v3965 = vpop.f32.mrf.mxu0
  %v3966 = vadd.f32 %v3917, %v3965
  %3967 = vmatmul.bf16.gmra.mxu0 %v776
  %v3968 = vpop.f32.mrf.mxu0
  %v3969 = vadd.f32 %v3920, %v3968
  %v3970 = vpop.f32.mrf.mxu0
  %v3971 = vadd.f32 %v3922, %v3970
  %3972 = vmatmul.bf16.gmra.mxu0 %v785
  %v3973 = vpop.f32.mrf.mxu0
  %v3974 = vadd.f32 %v3925, %v3973
  %v3975 = vpop.f32.mrf.mxu0
  %v3976 = vadd.f32 %v3927, %v3975
  %3977 = vmatmul.bf16.gmra.mxu0 %v794
  %v3978 = vpop.f32.mrf.mxu0
  %v3979 = vadd.f32 %v3930, %v3978
  %v3980 = vpop.f32.mrf.mxu0
  %v3981 = vadd.f32 %v3932, %v3980
  %3982 = vmatmul.bf16.gmra.mxu0 %v803
  %v3983 = vpop.f32.mrf.mxu0
  %v3984 = vadd.f32 %v3935, %v3983
  %v3985 = vpop.f32.mrf.mxu0
  %v3986 = vadd.f32 %v3937, %v3985
  %3987 = vmatmul.bf16.gmra.mxu0 %v812
  %v3988 = vpop.f32.mrf.mxu0
  %v3989 = vadd.f32 %v3940, %v3988
  %v3990 = vpop.f32.mrf.mxu0
  %v3991 = vadd.f32 %v3942, %v3990
  %3992 = vdwg.mxu0
  %3993 = vmatpush.bf16.msra.mxu0 %v2006
  %3994 = vmatpush.bf16.msra.mxu0 %v2002
  %3995 = vmatpush.bf16.msra.mxu0 %v1998
  %3996 = vmatpush.bf16.msra.mxu0 %v1994
  %3997 = vmatpush.bf16.msra.mxu0 %v1990
  %3998 = vmatpush.bf16.msra.mxu0 %v1986
  %3999 = vmatpush.bf16.msra.mxu0 %v1982
  %4000 = vmatpush.bf16.msra.mxu0 %v1978
  %4001 = vmatmul.bf16.gmra.mxu0 %v750
  %v4002 = vpop.f32.mrf.mxu0
  %v4003 = vadd.f32 %v3954, %v4002
  %v4004 = vpop.f32.mrf.mxu0
  %v4005 = vadd.f32 %v3956, %v4004
  %4006 = vmatmul.bf16.gmra.mxu0 %v759
  %v4007 = vpop.f32.mrf.mxu0
  %v4008 = vadd.f32 %v3959, %v4007
  %v4009 = vpop.f32.mrf.mxu0
  %v4010 = vadd.f32 %v3961, %v4009
  %4011 = vmatmul.bf16.gmra.mxu0 %v768
  %v4012 = vpop.f32.mrf.mxu0
  %v4013 = vadd.f32 %v3964, %v4012
  %v4014 = vpop.f32.mrf.mxu0
  %v4015 = vadd.f32 %v3966, %v4014
  %4016 = vmatmul.bf16.gmra.mxu0 %v777
  %v4017 = vpop.f32.mrf.mxu0
  %v4018 = vadd.f32 %v3969, %v4017
  %v4019 = vpop.f32.mrf.mxu0
  %v4020 = vadd.f32 %v3971, %v4019
  %4021 = vmatmul.bf16.gmra.mxu0 %v786
  %v4022 = vpop.f32.mrf.mxu0
  %v4023 = vadd.f32 %v3974, %v4022
  %v4024 = vpop.f32.mrf.mxu0
  %v4025 = vadd.f32 %v3976, %v4024
  %4026 = vmatmul.bf16.gmra.mxu0 %v795
  %v4027 = vpop.f32.mrf.mxu0
  %v4028 = vadd.f32 %v3979, %v4027
  %v4029 = vpop.f32.mrf.mxu0
  %v4030 = vadd.f32 %v3981, %v4029
  %4031 = vmatmul.bf16.gmra.mxu0 %v804
  %v4032 = vpop.f32.mrf.mxu0
  %v4033 = vadd.f32 %v3984, %v4032
  %v4034 = vpop.f32.mrf.mxu0
  %v4035 = vadd.f32 %v3986, %v4034
  %4036 = vmatmul.bf16.gmra.mxu0 %v813
  %v4037 = vpop.f32.mrf.mxu0
  %v4038 = vadd.f32 %v3989, %v4037
  %v4039 = vpop.f32.mrf.mxu0
  %v4040 = vadd.f32 %v3991, %v4039
  %4041 = vdwg.mxu0
  %4042 = vmatpush.bf16.msra.mxu0 %v2038
  %4043 = vmatpush.bf16.msra.mxu0 %v2034
  %4044 = vmatpush.bf16.msra.mxu0 %v2030
  %4045 = vmatpush.bf16.msra.mxu0 %v2026
  %4046 = vmatpush.bf16.msra.mxu0 %v2022
  %4047 = vmatpush.bf16.msra.mxu0 %v2018
  %4048 = vmatpush.bf16.msra.mxu0 %v2014
  %4049 = vmatpush.bf16.msra.mxu0 %v2010
  %4050 = vmatmul.bf16.gmra.mxu0 %v751
  %v4051 = vpop.f32.mrf.mxu0
  %v4052 = vadd.f32 %v4003, %v4051
  %v4053 = vpop.f32.mrf.mxu0
  %v4054 = vadd.f32 %v4005, %v4053
  %4055 = vmatmul.bf16.gmra.mxu0 %v760
  %v4056 = vpop.f32.mrf.mxu0
  %v4057 = vadd.f32 %v4008, %v4056
  %v4058 = vpop.f32.mrf.mxu0
  %v4059 = vadd.f32 %v4010, %v4058
  %4060 = vmatmul.bf16.gmra.mxu0 %v769
  %v4061 = vpop.f32.mrf.mxu0
  %v4062 = vadd.f32 %v4013, %v4061
  %v4063 = vpop.f32.mrf.mxu0
  %v4064 = vadd.f32 %v4015, %v4063
  %4065 = vmatmul.bf16.gmra.mxu0 %v778
  %v4066 = vpop.f32.mrf.mxu0
  %v4067 = vadd.f32 %v4018, %v4066
  %v4068 = vpop.f32.mrf.mxu0
  %v4069 = vadd.f32 %v4020, %v4068
  %4070 = vmatmul.bf16.gmra.mxu0 %v787
  %v4071 = vpop.f32.mrf.mxu0
  %v4072 = vadd.f32 %v4023, %v4071
  %v4073 = vpop.f32.mrf.mxu0
  %v4074 = vadd.f32 %v4025, %v4073
  %4075 = vmatmul.bf16.gmra.mxu0 %v796
  %v4076 = vpop.f32.mrf.mxu0
  %v4077 = vadd.f32 %v4028, %v4076
  %v4078 = vpop.f32.mrf.mxu0
  %v4079 = vadd.f32 %v4030, %v4078
  %4080 = vmatmul.bf16.gmra.mxu0 %v805
  %v4081 = vpop.f32.mrf.mxu0
  %v4082 = vadd.f32 %v4033, %v4081
  %v4083 = vpop.f32.mrf.mxu0
  %v4084 = vadd.f32 %v4035, %v4083
  %4085 = vmatmul.bf16.gmra.mxu0 %v814
  %v4086 = vpop.f32.mrf.mxu0
  %v4087 = vadd.f32 %v4038, %v4086
  %v4088 = vpop.f32.mrf.mxu0
  %v4089 = vadd.f32 %v4040, %v4088
  %4090 = vdwg.mxu0
  %v4091 = vadd.f32 %v87, %v2729
  %v4092 = vadd.f32 %v88, %v3170
  %v4093 = vadd.f32 %v89, %v3611
  %v4094 = vadd.f32 %v90, %v4052
  %v4095 = vadd.f32 %v91, %v2731
  %v4096 = vadd.f32 %v92, %v3172
  %v4097 = vadd.f32 %v93, %v3613
  %v4098 = vadd.f32 %v94, %v4054
  %v4099 = vadd.f32 %v95, %v2734
  %v4100 = vadd.f32 %v96, %v3175
  %v4101 = vadd.f32 %v97, %v3616
  %v4102 = vadd.f32 %v98, %v4057
  %v4103 = vadd.f32 %v99, %v2736
  %v4104 = vadd.f32 %v100, %v3177
  %v4105 = vadd.f32 %v101, %v3618
  %v4106 = vadd.f32 %v102, %v4059
  %v4107 = vadd.f32 %v103, %v2739
  %v4108 = vadd.f32 %v104, %v3180
  %v4109 = vadd.f32 %v105, %v3621
  %v4110 = vadd.f32 %v106, %v4062
  %v4111 = vadd.f32 %v107, %v2741
  %v4112 = vadd.f32 %v108, %v3182
  %v4113 = vadd.f32 %v109, %v3623
  %v4114 = vadd.f32 %v110, %v4064
  %v4115 = vadd.f32 %v111, %v2744
  %v4116 = vadd.f32 %v112, %v3185
  %v4117 = vadd.f32 %v113, %v3626
  %v4118 = vadd.f32 %v114, %v4067
  %v4119 = vadd.f32 %v115, %v2746
  %v4120 = vadd.f32 %v116, %v3187
  %v4121 = vadd.f32 %v117, %v3628
  %v4122 = vadd.f32 %v118, %v4069
  %v4123 = vadd.f32 %v119, %v2749
  %v4124 = vadd.f32 %v120, %v3190
  %v4125 = vadd.f32 %v121, %v3631
  %v4126 = vadd.f32 %v122, %v4072
  %v4127 = vadd.f32 %v123, %v2751
  %v4128 = vadd.f32 %v124, %v3192
  %v4129 = vadd.f32 %v125, %v3633
  %v4130 = vadd.f32 %v126, %v4074
  %v4131 = vadd.f32 %v127, %v2754
  %v4132 = vadd.f32 %v128, %v3195
  %v4133 = vadd.f32 %v129, %v3636
  %v4134 = vadd.f32 %v130, %v4077
  %v4135 = vadd.f32 %v131, %v2756
  %v4136 = vadd.f32 %v132, %v3197
  %v4137 = vadd.f32 %v133, %v3638
  %v4138 = vadd.f32 %v134, %v4079
  %v4139 = vadd.f32 %v135, %v2759
  %v4140 = vadd.f32 %v136, %v3200
  %v4141 = vadd.f32 %v137, %v3641
  %v4142 = vadd.f32 %v138, %v4082
  %v4143 = vadd.f32 %v139, %v2761
  %v4144 = vadd.f32 %v140, %v3202
  %v4145 = vadd.f32 %v141, %v3643
  %v4146 = vadd.f32 %v142, %v4084
  %v4147 = vadd.f32 %v143, %v2764
  %v4148 = vadd.f32 %v144, %v3205
  %v4149 = vadd.f32 %v145, %v3646
  %v4150 = vadd.f32 %v146, %v4087
  %v4151 = vadd.f32 %v147, %v2766
  %v4152 = vadd.f32 %v148, %v3207
  %v4153 = vadd.f32 %v149, %v3648
  %v4154 = vadd.f32 %v150, %v4089
  %4155 = vst [vmem:[#allocation2] sm:$0xff] %v4091
  %4156 = vst [vmem:[#allocation2 + $0x8] sm:$0xff] %v4092
  %4157 = vst [vmem:[#allocation2 + $0x10] sm:$0xff] %v4093
  %4158 = vst [vmem:[#allocation2 + $0x18] sm:$0xff] %v4094
  %4159 = vst [vmem:[#allocation2 + $0x20] sm:$0xff] %v4095
  %4160 = vst [vmem:[#allocation2 + $0x28] sm:$0xff] %v4096
  %4161 = vst [vmem:[#allocation2 + $0x30] sm:$0xff] %v4097
  %4162 = vst [vmem:[#allocation2 + $0x38] sm:$0xff] %v4098
  %4163 = vst [vmem:[#allocation2 + $0x40] sm:$0xff] %v4099
  %4164 = vst [vmem:[#allocation2 + $0x48] sm:$0xff] %v4100
  %4165 = vst [vmem:[#allocation2 + $0x50] sm:$0xff] %v4101
  %4166 = vst [vmem:[#allocation2 + $0x58] sm:$0xff] %v4102
  %4167 = vst [vmem:[#allocation2 + $0x60] sm:$0xff] %v4103
  %4168 = vst [vmem:[#allocation2 + $0x68] sm:$0xff] %v4104
  %4169 = vst [vmem:[#allocation2 + $0x70] sm:$0xff] %v4105
  %4170 = vst [vmem:[#allocation2 + $0x78] sm:$0xff] %v4106
  %4171 = vst [vmem:[#allocation2 + $0x80] sm:$0xff] %v4107
  %4172 = vst [vmem:[#allocation2 + $0x88] sm:$0xff] %v4108
  %4173 = vst [vmem:[#allocation2 + $0x90] sm:$0xff] %v4109
  %4174 = vst [vmem:[#allocation2 + $0x98] sm:$0xff] %v4110
  %4175 = vst [vmem:[#allocation2 + $0xa0] sm:$0xff] %v4111
  %4176 = vst [vmem:[#allocation2 + $0xa8] sm:$0xff] %v4112
  %4177 = vst [vmem:[#allocation2 + $0xb0] sm:$0xff] %v4113
  %4178 = vst [vmem:[#allocation2 + $0xb8] sm:$0xff] %v4114
  %4179 = vst [vmem:[#allocation2 + $0xc0] sm:$0xff] %v4115
  %4180 = vst [vmem:[#allocation2 + $0xc8] sm:$0xff] %v4116
  %4181 = vst [vmem:[#allocation2 + $0xd0] sm:$0xff] %v4117
  %4182 = vst [vmem:[#allocation2 + $0xd8] sm:$0xff] %v4118
  %4183 = vst [vmem:[#allocation2 + $0xe0] sm:$0xff] %v4119
  %4184 = vst [vmem:[#allocation2 + $0xe8] sm:$0xff] %v4120
  %4185 = vst [vmem:[#allocation2 + $0xf0] sm:$0xff] %v4121
  %4186 = vst [vmem:[#allocation2 + $0xf8] sm:$0xff] %v4122
  %4187 = vst [vmem:[#allocation2 + $0x100] sm:$0xff] %v4123
  %4188 = vst [vmem:[#allocation2 + $0x108] sm:$0xff] %v4124
  %4189 = vst [vmem:[#allocation2 + $0x110] sm:$0xff] %v4125
  %4190 = vst [vmem:[#allocation2 + $0x118] sm:$0xff] %v4126
  %4191 = vst [vmem:[#allocation2 + $0x120] sm:$0xff] %v4127
  %4192 = vst [vmem:[#allocation2 + $0x128] sm:$0xff] %v4128
  %4193 = vst [vmem:[#allocation2 + $0x130] sm:$0xff] %v4129
  %4194 = vst [vmem:[#allocation2 + $0x138] sm:$0xff] %v4130
  %4195 = vst [vmem:[#allocation2 + $0x140] sm:$0xff] %v4131
  %4196 = vst [vmem:[#allocation2 + $0x148] sm:$0xff] %v4132
  %4197 = vst [vmem:[#allocation2 + $0x150] sm:$0xff] %v4133
  %4198 = vst [vmem:[#allocation2 + $0x158] sm:$0xff] %v4134
  %4199 = vst [vmem:[#allocation2 + $0x160] sm:$0xff] %v4135
  %4200 = vst [vmem:[#allocation2 + $0x168] sm:$0xff] %v4136
  %4201 = vst [vmem:[#allocation2 + $0x170] sm:$0xff] %v4137
  %4202 = vst [vmem:[#allocation2 + $0x178] sm:$0xff] %v4138
  %4203 = vst [vmem:[#allocation2 + $0x180] sm:$0xff] %v4139
  %4204 = vst [vmem:[#allocation2 + $0x188] sm:$0xff] %v4140
  %4205 = vst [vmem:[#allocation2 + $0x190] sm:$0xff] %v4141
  %4206 = vst [vmem:[#allocation2 + $0x198] sm:$0xff] %v4142
  %4207 = vst [vmem:[#allocation2 + $0x1a0] sm:$0xff] %v4143
  %4208 = vst [vmem:[#allocation2 + $0x1a8] sm:$0xff] %v4144
  %4209 = vst [vmem:[#allocation2 + $0x1b0] sm:$0xff] %v4145
  %4210 = vst [vmem:[#allocation2 + $0x1b8] sm:$0xff] %v4146
  %4211 = vst [vmem:[#allocation2 + $0x1c0] sm:$0xff] %v4147
  %4212 = vst [vmem:[#allocation2 + $0x1c8] sm:$0xff] %v4148
  %4213 = vst [vmem:[#allocation2 + $0x1d0] sm:$0xff] %v4149
  %4214 = vst [vmem:[#allocation2 + $0x1d8] sm:$0xff] %v4150
  %4215 = vst [vmem:[#allocation2 + $0x1e0] sm:$0xff] %v4151
  %4216 = vst [vmem:[#allocation2 + $0x1e8] sm:$0xff] %v4152
  %4217 = vst [vmem:[#allocation2 + $0x1f0] sm:$0xff] %v4153
  %4218 = vst [vmem:[#allocation2 + $0x1f8] sm:$0xff] %v4154
  // Predicated region
  $region18: #{unet_innermost_forward.4} parent=0 // pred_check
    %p4219 = pneg %p13
  $region19: #{unet_innermost_forward.4} parent=0 // pred_check_branch
    %4221 = sbr.rel (%p4219) target = $region21
  $region20: #{unet_innermost_forward.4} parent=0 // pred_region
    %v4222 = vld [vmem:[#allocation2] sm:$0xff]
    %v4223 = vld [vmem:[#allocation2 + $0x8] sm:$0xff]
    %v4224 = vld [vmem:[#allocation2 + $0x10] sm:$0xff]
    %v4225 = vld [vmem:[#allocation2 + $0x18] sm:$0xff]
    %v4226 = vld [vmem:[#allocation2 + $0x20] sm:$0xff]
    %v4227 = vld [vmem:[#allocation2 + $0x28] sm:$0xff]
    %v4228 = vld [vmem:[#allocation2 + $0x30] sm:$0xff]
    %v4229 = vld [vmem:[#allocation2 + $0x38] sm:$0xff]
    %v4230 = vld [vmem:[#allocation2 + $0x40] sm:$0xff]
    %v4231 = vld [vmem:[#allocation2 + $0x48] sm:$0xff]
    %v4232 = vld [vmem:[#allocation2 + $0x50] sm:$0xff]
    %v4233 = vld [vmem:[#allocation2 + $0x58] sm:$0xff]
    %v4234 = vld [vmem:[#allocation2 + $0x60] sm:$0xff]
    %v4235 = vld [vmem:[#allocation2 + $0x68] sm:$0xff]
    %v4236 = vld [vmem:[#allocation2 + $0x70] sm:$0xff]
    %v4237 = vld [vmem:[#allocation2 + $0x78] sm:$0xff]
    %v4238 = vld [vmem:[#allocation2 + $0x80] sm:$0xff]
    %v4239 = vld [vmem:[#allocation2 + $0x88] sm:$0xff]
    %v4240 = vld [vmem:[#allocation2 + $0x90] sm:$0xff]
    %v4241 = vld [vmem:[#allocation2 + $0x98] sm:$0xff]
    %v4242 = vld [vmem:[#allocation2 + $0xa0] sm:$0xff]
    %v4243 = vld [vmem:[#allocation2 + $0xa8] sm:$0xff]
    %v4244 = vld [vmem:[#allocation2 + $0xb0] sm:$0xff]
    %v4245 = vld [vmem:[#allocation2 + $0xb8] sm:$0xff]
    %v4246 = vld [vmem:[#allocation2 + $0xc0] sm:$0xff]
    %v4247 = vld [vmem:[#allocation2 + $0xc8] sm:$0xff]
    %v4248 = vld [vmem:[#allocation2 + $0xd0] sm:$0xff]
    %v4249 = vld [vmem:[#allocation2 + $0xd8] sm:$0xff]
    %v4250 = vld [vmem:[#allocation2 + $0xe0] sm:$0xff]
    %v4251 = vld [vmem:[#allocation2 + $0xe8] sm:$0xff]
    %v4252 = vld [vmem:[#allocation2 + $0xf0] sm:$0xff]
    %v4253 = vld [vmem:[#allocation2 + $0xf8] sm:$0xff]
    %v4254 = vld [vmem:[#allocation2 + $0x100] sm:$0xff]
    %v4255 = vld [vmem:[#allocation2 + $0x108] sm:$0xff]
    %v4256 = vld [vmem:[#allocation2 + $0x110] sm:$0xff]
    %v4257 = vld [vmem:[#allocation2 + $0x118] sm:$0xff]
    %v4258 = vld [vmem:[#allocation2 + $0x120] sm:$0xff]
    %v4259 = vld [vmem:[#allocation2 + $0x128] sm:$0xff]
    %v4260 = vld [vmem:[#allocation2 + $0x130] sm:$0xff]
    %v4261 = vld [vmem:[#allocation2 + $0x138] sm:$0xff]
    %v4262 = vld [vmem:[#allocation2 + $0x140] sm:$0xff]
    %v4263 = vld [vmem:[#allocation2 + $0x148] sm:$0xff]
    %v4264 = vld [vmem:[#allocation2 + $0x150] sm:$0xff]
    %v4265 = vld [vmem:[#allocation2 + $0x158] sm:$0xff]
    %v4266 = vld [vmem:[#allocation2 + $0x160] sm:$0xff]
    %v4267 = vld [vmem:[#allocation2 + $0x168] sm:$0xff]
    %v4268 = vld [vmem:[#allocation2 + $0x170] sm:$0xff]
    %v4269 = vld [vmem:[#allocation2 + $0x178] sm:$0xff]
    %v4270 = vld [vmem:[#allocation2 + $0x180] sm:$0xff]
    %v4271 = vld [vmem:[#allocation2 + $0x188] sm:$0xff]
    %v4272 = vld [vmem:[#allocation2 + $0x190] sm:$0xff]
    %v4273 = vld [vmem:[#allocation2 + $0x198] sm:$0xff]
    %v4274 = vld [vmem:[#allocation2 + $0x1a0] sm:$0xff]
    %v4275 = vld [vmem:[#allocation2 + $0x1a8] sm:$0xff]
    %v4276 = vld [vmem:[#allocation2 + $0x1b0] sm:$0xff]
    %v4277 = vld [vmem:[#allocation2 + $0x1b8] sm:$0xff]
    %v4278 = vld [vmem:[#allocation2 + $0x1c0] sm:$0xff]
    %v4279 = vld [vmem:[#allocation2 + $0x1c8] sm:$0xff]
    %v4280 = vld [vmem:[#allocation2 + $0x1d0] sm:$0xff]
    %v4281 = vld [vmem:[#allocation2 + $0x1d8] sm:$0xff]
    %v4282 = vld [vmem:[#allocation2 + $0x1e0] sm:$0xff]
    %v4283 = vld [vmem:[#allocation2 + $0x1e8] sm:$0xff]
    %v4284 = vld [vmem:[#allocation2 + $0x1f0] sm:$0xff]
    %v4285 = vld [vmem:[#allocation2 + $0x1f8] sm:$0xff]
    %4286 = vst [vmem:[%s2] sm:$0xff] %v4222
    %4287 = vst [vmem:[%s2 + $0x8] sm:$0xff] %v4223
    %4288 = vst [vmem:[%s2 + $0x10] sm:$0xff] %v4224
    %4289 = vst [vmem:[%s2 + $0x18] sm:$0xff] %v4225
    %4290 = vst [vmem:[%s2 + $0x20] sm:$0xff] %v4226
    %4291 = vst [vmem:[%s2 + $0x28] sm:$0xff] %v4227
    %4292 = vst [vmem:[%s2 + $0x30] sm:$0xff] %v4228
    %4293 = vst [vmem:[%s2 + $0x38] sm:$0xff] %v4229
    %4294 = vst [vmem:[%s2 + $0x40] sm:$0xff] %v4230
    %4295 = vst [vmem:[%s2 + $0x48] sm:$0xff] %v4231
    %4296 = vst [vmem:[%s2 + $0x50] sm:$0xff] %v4232
    %4297 = vst [vmem:[%s2 + $0x58] sm:$0xff] %v4233
    %4298 = vst [vmem:[%s2 + $0x60] sm:$0xff] %v4234
    %4299 = vst [vmem:[%s2 + $0x68] sm:$0xff] %v4235
    %4300 = vst [vmem:[%s2 + $0x70] sm:$0xff] %v4236
    %4301 = vst [vmem:[%s2 + $0x78] sm:$0xff] %v4237
    %4302 = vst [vmem:[%s2 + $0x80] sm:$0xff] %v4238
    %4303 = vst [vmem:[%s2 + $0x88] sm:$0xff] %v4239
    %4304 = vst [vmem:[%s2 + $0x90] sm:$0xff] %v4240
    %4305 = vst [vmem:[%s2 + $0x98] sm:$0xff] %v4241
    %4306 = vst [vmem:[%s2 + $0xa0] sm:$0xff] %v4242
    %4307 = vst [vmem:[%s2 + $0xa8] sm:$0xff] %v4243
    %4308 = vst [vmem:[%s2 + $0xb0] sm:$0xff] %v4244
    %4309 = vst [vmem:[%s2 + $0xb8] sm:$0xff] %v4245
    %4310 = vst [vmem:[%s2 + $0xc0] sm:$0xff] %v4246
    %4311 = vst [vmem:[%s2 + $0xc8] sm:$0xff] %v4247
    %4312 = vst [vmem:[%s2 + $0xd0] sm:$0xff] %v4248
    %4313 = vst [vmem:[%s2 + $0xd8] sm:$0xff] %v4249
    %4314 = vst [vmem:[%s2 + $0xe0] sm:$0xff] %v4250
    %4315 = vst [vmem:[%s2 + $0xe8] sm:$0xff] %v4251
    %4316 = vst [vmem:[%s2 + $0xf0] sm:$0xff] %v4252
    %4317 = vst [vmem:[%s2 + $0xf8] sm:$0xff] %v4253
    %4318 = vst [vmem:[%s2 + $0x100] sm:$0xff] %v4254
    %4319 = vst [vmem:[%s2 + $0x108] sm:$0xff] %v4255
    %4320 = vst [vmem:[%s2 + $0x110] sm:$0xff] %v4256
    %4321 = vst [vmem:[%s2 + $0x118] sm:$0xff] %v4257
    %4322 = vst [vmem:[%s2 + $0x120] sm:$0xff] %v4258
    %4323 = vst [vmem:[%s2 + $0x128] sm:$0xff] %v4259
    %4324 = vst [vmem:[%s2 + $0x130] sm:$0xff] %v4260
    %4325 = vst [vmem:[%s2 + $0x138] sm:$0xff] %v4261
    %4326 = vst [vmem:[%s2 + $0x140] sm:$0xff] %v4262
    %4327 = vst [vmem:[%s2 + $0x148] sm:$0xff] %v4263
    %4328 = vst [vmem:[%s2 + $0x150] sm:$0xff] %v4264
    %4329 = vst [vmem:[%s2 + $0x158] sm:$0xff] %v4265
    %4330 = vst [vmem:[%s2 + $0x160] sm:$0xff] %v4266
    %4331 = vst [vmem:[%s2 + $0x168] sm:$0xff] %v4267
    %4332 = vst [vmem:[%s2 + $0x170] sm:$0xff] %v4268
    %4333 = vst [vmem:[%s2 + $0x178] sm:$0xff] %v4269
    %4334 = vst [vmem:[%s2 + $0x180] sm:$0xff] %v4270
    %4335 = vst [vmem:[%s2 + $0x188] sm:$0xff] %v4271
    %4336 = vst [vmem:[%s2 + $0x190] sm:$0xff] %v4272
    %4337 = vst [vmem:[%s2 + $0x198] sm:$0xff] %v4273
    %4338 = vst [vmem:[%s2 + $0x1a0] sm:$0xff] %v4274
    %4339 = vst [vmem:[%s2 + $0x1a8] sm:$0xff] %v4275
    %4340 = vst [vmem:[%s2 + $0x1b0] sm:$0xff] %v4276
    %4341 = vst [vmem:[%s2 + $0x1b8] sm:$0xff] %v4277
    %4342 = vst [vmem:[%s2 + $0x1c0] sm:$0xff] %v4278
    %4343 = vst [vmem:[%s2 + $0x1c8] sm:$0xff] %v4279
    %4344 = vst [vmem:[%s2 + $0x1d0] sm:$0xff] %v4280
    %4345 = vst [vmem:[%s2 + $0x1d8] sm:$0xff] %v4281
    %4346 = vst [vmem:[%s2 + $0x1e0] sm:$0xff] %v4282
    %4347 = vst [vmem:[%s2 + $0x1e8] sm:$0xff] %v4283
    %4348 = vst [vmem:[%s2 + $0x1f0] sm:$0xff] %v4284
    %4349 = vst [vmem:[%s2 + $0x1f8] sm:$0xff] %v4285
    %v4350 = vld [vmem:[#allocation3] sm:$0xff]
    %v4351 = vadd.f32 %v4222, %v4226
    %v4352 = vadd.f32 %v4351, %v4230
    %v4353 = vadd.f32 %v4352, %v4234
    %v4354 = vadd.f32 %v4353, %v4238
    %v4355 = vadd.f32 %v4354, %v4242
    %v4356 = vadd.f32 %v4355, %v4246
    %v4357 = vadd.f32 %v4356, %v4250
    %v4358 = vadd.f32 %v4357, %v4254
    %v4359 = vadd.f32 %v4358, %v4258
    %v4360 = vadd.f32 %v4359, %v4262
    %v4361 = vadd.f32 %v4360, %v4266
    %v4362 = vadd.f32 %v4361, %v4270
    %v4363 = vadd.f32 %v4362, %v4274
    %v4364 = vadd.f32 %v4363, %v4278
    %v4365 = vadd.f32 %v4364, %v4282
    %v4366 = vrot.slane %v4365, 4
    %v4367 = vadd.f32 %v4365, %v4366
    %v4368 = vrot.slane %v4367, 2
    %v4369 = vadd.f32 %v4367, %v4368
    %v4370 = vrot.slane %v4369, 1
    %v4371 = vadd.f32 %v4369, %v4370
    %v4372 = vadd.f32 %v4223, %v4227
    %v4373 = vadd.f32 %v4372, %v4231
    %v4374 = vadd.f32 %v4373, %v4235
    %v4375 = vadd.f32 %v4374, %v4239
    %v4376 = vadd.f32 %v4375, %v4243
    %v4377 = vadd.f32 %v4376, %v4247
    %v4378 = vadd.f32 %v4377, %v4251
    %v4379 = vadd.f32 %v4378, %v4255
    %v4380 = vadd.f32 %v4379, %v4259
    %v4381 = vadd.f32 %v4380, %v4263
    %v4382 = vadd.f32 %v4381, %v4267
    %v4383 = vadd.f32 %v4382, %v4271
    %v4384 = vadd.f32 %v4383, %v4275
    %v4385 = vadd.f32 %v4384, %v4279
    %v4386 = vadd.f32 %v4385, %v4283
    %v4387 = vrot.slane %v4386, 4
    %v4388 = vadd.f32 %v4386, %v4387
    %v4389 = vrot.slane %v4388, 2
    %v4390 = vadd.f32 %v4388, %v4389
    %v4391 = vrot.slane %v4390, 1
    %v4392 = vadd.f32 %v4390, %v4391
    %v4393 = vadd.f32 %v4224, %v4228
    %v4394 = vadd.f32 %v4393, %v4232
    %v4395 = vadd.f32 %v4394, %v4236
    %v4396 = vadd.f32 %v4395, %v4240
    %v4397 = vadd.f32 %v4396, %v4244
    %v4398 = vadd.f32 %v4397, %v4248
    %v4399 = vadd.f32 %v4398, %v4252
    %v4400 = vadd.f32 %v4399, %v4256
    %v4401 = vadd.f32 %v4400, %v4260
    %v4402 = vadd.f32 %v4401, %v4264
    %v4403 = vadd.f32 %v4402, %v4268
    %v4404 = vadd.f32 %v4403, %v4272
    %v4405 = vadd.f32 %v4404, %v4276
    %v4406 = vadd.f32 %v4405, %v4280
    %v4407 = vadd.f32 %v4406, %v4284
    %v4408 = vrot.slane %v4407, 4
    %v4409 = vadd.f32 %v4407, %v4408
    %v4410 = vrot.slane %v4409, 2
    %v4411 = vadd.f32 %v4409, %v4410
    %v4412 = vrot.slane %v4411, 1
    %v4413 = vadd.f32 %v4411, %v4412
    %v4414 = vadd.f32 %v4225, %v4229
    %v4415 = vadd.f32 %v4414, %v4233
    %v4416 = vadd.f32 %v4415, %v4237
    %v4417 = vadd.f32 %v4416, %v4241
    %v4418 = vadd.f32 %v4417, %v4245
    %v4419 = vadd.f32 %v4418, %v4249
    %v4420 = vadd.f32 %v4419, %v4253
    %v4421 = vadd.f32 %v4420, %v4257
    %v4422 = vadd.f32 %v4421, %v4261
    %v4423 = vadd.f32 %v4422, %v4265
    %v4424 = vadd.f32 %v4423, %v4269
    %v4425 = vadd.f32 %v4424, %v4273
    %v4426 = vadd.f32 %v4425, %v4277
    %v4427 = vadd.f32 %v4426, %v4281
    %v4428 = vadd.f32 %v4427, %v4285
    %v4429 = vrot.slane %v4428, 4
    %v4430 = vadd.f32 %v4428, %v4429
    %v4431 = vrot.slane %v4430, 2
    %v4432 = vadd.f32 %v4430, %v4431
    %v4433 = vrot.slane %v4432, 1
    %v4434 = vadd.f32 %v4432, %v4433
    %v4435 = vmul.f32 %v4222, %v4222
    %v4436 = vmul.f32 %v4223, %v4223
    %v4437 = vmul.f32 %v4224, %v4224
    %v4438 = vmul.f32 %v4225, %v4225
    %v4439 = vmul.f32 %v4226, %v4226
    %v4440 = vmul.f32 %v4227, %v4227
    %v4441 = vmul.f32 %v4228, %v4228
    %v4442 = vmul.f32 %v4229, %v4229
    %v4443 = vmul.f32 %v4230, %v4230
    %v4444 = vmul.f32 %v4231, %v4231
    %v4445 = vmul.f32 %v4232, %v4232
    %v4446 = vmul.f32 %v4233, %v4233
    %v4447 = vmul.f32 %v4234, %v4234
    %v4448 = vmul.f32 %v4235, %v4235
    %v4449 = vmul.f32 %v4236, %v4236
    %v4450 = vmul.f32 %v4237, %v4237
    %v4451 = vmul.f32 %v4238, %v4238
    %v4452 = vmul.f32 %v4239, %v4239
    %v4453 = vmul.f32 %v4240, %v4240
    %v4454 = vmul.f32 %v4241, %v4241
    %v4455 = vmul.f32 %v4242, %v4242
    %v4456 = vmul.f32 %v4243, %v4243
    %v4457 = vmul.f32 %v4244, %v4244
    %v4458 = vmul.f32 %v4245, %v4245
    %v4459 = vmul.f32 %v4246, %v4246
    %v4460 = vmul.f32 %v4247, %v4247
    %v4461 = vmul.f32 %v4248, %v4248
    %v4462 = vmul.f32 %v4249, %v4249
    %v4463 = vmul.f32 %v4250, %v4250
    %v4464 = vmul.f32 %v4251, %v4251
    %v4465 = vmul.f32 %v4252, %v4252
    %v4466 = vmul.f32 %v4253, %v4253
    %v4467 = vmul.f32 %v4254, %v4254
    %v4468 = vmul.f32 %v4255, %v4255
    %v4469 = vmul.f32 %v4256, %v4256
    %v4470 = vmul.f32 %v4257, %v4257
    %v4471 = vmul.f32 %v4258, %v4258
    %v4472 = vmul.f32 %v4259, %v4259
    %v4473 = vmul.f32 %v4260, %v4260
    %v4474 = vmul.f32 %v4261, %v4261
    %v4475 = vmul.f32 %v4262, %v4262
    %v4476 = vmul.f32 %v4263, %v4263
    %v4477 = vmul.f32 %v4264, %v4264
    %v4478 = vmul.f32 %v4265, %v4265
    %v4479 = vmul.f32 %v4266, %v4266
    %v4480 = vmul.f32 %v4267, %v4267
    %v4481 = vmul.f32 %v4268, %v4268
    %v4482 = vmul.f32 %v4269, %v4269
    %v4483 = vmul.f32 %v4270, %v4270
    %v4484 = vmul.f32 %v4271, %v4271
    %v4485 = vmul.f32 %v4272, %v4272
    %v4486 = vmul.f32 %v4273, %v4273
    %v4487 = vmul.f32 %v4274, %v4274
    %v4488 = vmul.f32 %v4275, %v4275
    %v4489 = vmul.f32 %v4276, %v4276
    %v4490 = vmul.f32 %v4277, %v4277
    %v4491 = vmul.f32 %v4278, %v4278
    %v4492 = vmul.f32 %v4279, %v4279
    %v4493 = vmul.f32 %v4280, %v4280
    %v4494 = vmul.f32 %v4281, %v4281
    %v4495 = vmul.f32 %v4282, %v4282
    %v4496 = vmul.f32 %v4283, %v4283
    %v4497 = vmul.f32 %v4284, %v4284
    %v4498 = vmul.f32 %v4285, %v4285
    %v4499 = vadd.f32 %v4435, %v4439
    %v4500 = vadd.f32 %v4499, %v4443
    %v4501 = vadd.f32 %v4500, %v4447
    %v4502 = vadd.f32 %v4501, %v4451
    %v4503 = vadd.f32 %v4502, %v4455
    %v4504 = vadd.f32 %v4503, %v4459
    %v4505 = vadd.f32 %v4504, %v4463
    %v4506 = vadd.f32 %v4505, %v4467
    %v4507 = vadd.f32 %v4506, %v4471
    %v4508 = vadd.f32 %v4507, %v4475
    %v4509 = vadd.f32 %v4508, %v4479
    %v4510 = vadd.f32 %v4509, %v4483
    %v4511 = vadd.f32 %v4510, %v4487
    %v4512 = vadd.f32 %v4511, %v4491
    %v4513 = vadd.f32 %v4512, %v4495
    %v4514 = vrot.slane %v4513, 4
    %v4515 = vadd.f32 %v4513, %v4514
    %v4516 = vrot.slane %v4515, 2
    %v4517 = vadd.f32 %v4515, %v4516
    %v4518 = vrot.slane %v4517, 1
    %v4519 = vadd.f32 %v4517, %v4518
    %v4520 = vadd.f32 %v4436, %v4440
    %v4521 = vadd.f32 %v4520, %v4444
    %v4522 = vadd.f32 %v4521, %v4448
    %v4523 = vadd.f32 %v4522, %v4452
    %v4524 = vadd.f32 %v4523, %v4456
    %v4525 = vadd.f32 %v4524, %v4460
    %v4526 = vadd.f32 %v4525, %v4464
    %v4527 = vadd.f32 %v4526, %v4468
    %v4528 = vadd.f32 %v4527, %v4472
    %v4529 = vadd.f32 %v4528, %v4476
    %v4530 = vadd.f32 %v4529, %v4480
    %v4531 = vadd.f32 %v4530, %v4484
    %v4532 = vadd.f32 %v4531, %v4488
    %v4533 = vadd.f32 %v4532, %v4492
    %v4534 = vadd.f32 %v4533, %v4496
    %v4535 = vrot.slane %v4534, 4
    %v4536 = vadd.f32 %v4534, %v4535
    %v4537 = vrot.slane %v4536, 2
    %v4538 = vadd.f32 %v4536, %v4537
    %v4539 = vrot.slane %v4538, 1
    %v4540 = vadd.f32 %v4538, %v4539
    %v4541 = vadd.f32 %v4437, %v4441
    %v4542 = vadd.f32 %v4541, %v4445
    %v4543 = vadd.f32 %v4542, %v4449
    %v4544 = vadd.f32 %v4543, %v4453
    %v4545 = vadd.f32 %v4544, %v4457
    %v4546 = vadd.f32 %v4545, %v4461
    %v4547 = vadd.f32 %v4546, %v4465
    %v4548 = vadd.f32 %v4547, %v4469
    %v4549 = vadd.f32 %v4548, %v4473
    %v4550 = vadd.f32 %v4549, %v4477
    %v4551 = vadd.f32 %v4550, %v4481
    %v4552 = vadd.f32 %v4551, %v4485
    %v4553 = vadd.f32 %v4552, %v4489
    %v4554 = vadd.f32 %v4553, %v4493
    %v4555 = vadd.f32 %v4554, %v4497
    %v4556 = vrot.slane %v4555, 4
    %v4557 = vadd.f32 %v4555, %v4556
    %v4558 = vrot.slane %v4557, 2
    %v4559 = vadd.f32 %v4557, %v4558
    %v4560 = vrot.slane %v4559, 1
    %v4561 = vadd.f32 %v4559, %v4560
    %v4562 = vadd.f32 %v4438, %v4442
    %v4563 = vadd.f32 %v4562, %v4446
    %v4564 = vadd.f32 %v4563, %v4450
    %v4565 = vadd.f32 %v4564, %v4454
    %v4566 = vadd.f32 %v4565, %v4458
    %v4567 = vadd.f32 %v4566, %v4462
    %v4568 = vadd.f32 %v4567, %v4466
    %v4569 = vadd.f32 %v4568, %v4470
    %v4570 = vadd.f32 %v4569, %v4474
    %v4571 = vadd.f32 %v4570, %v4478
    %v4572 = vadd.f32 %v4571, %v4482
    %v4573 = vadd.f32 %v4572, %v4486
    %v4574 = vadd.f32 %v4573, %v4490
    %v4575 = vadd.f32 %v4574, %v4494
    %v4576 = vadd.f32 %v4575, %v4498
    %v4577 = vrot.slane %v4576, 4
    %v4578 = vadd.f32 %v4576, %v4577
    %v4579 = vrot.slane %v4578, 2
    %v4580 = vadd.f32 %v4578, %v4579
    %v4581 = vrot.slane %v4580, 1
    %v4582 = vadd.f32 %v4580, %v4581
    %vm4583 = vcmask 1040384
    %v4584 = vsel %vm4583, %v4371, %v4519
    %v4585 = vsel %vm4583, %v4392, %v4540
    %v4586 = vsel %vm4583, %v4413, %v4561
    %v4587 = vsel %vm4583, %v4434, %v4582
    %v4592 = vrot.slane %v4585, 6
    %v4593 = vrot.slane %v4586, 4
    %v4594 = vrot.slane %v4587, 2
    %vm4595 = vcmask 1041408
    %v4596 = vsel %vm4595, %v4584, %v4592
    %vm4597 = vcmask 1045508
    %v4598 = vsel %vm4597, %v4593, %v4594
    %vm4599 = vcmask 1043456
    %v4600 = vsel %vm4599, %v4596, %v4598
    %v4602 = vadd.f32 %v4350, %v4600
    %4603 = vst [vmem:[#allocation3] sm:$0xff] %v4602
    %v4604 = vld [vmem:[#allocation3] sm:$0xff]
    %4605 = vst [vmem:[%s3] sm:$0xff] %v4604
  $region21: #{unet_innermost_forward.4} parent=0 // pred_fallthru
    _
  // Predicated region
  $region22: #{unet_innermost_forward.4} parent=0 // pred_check
    _
  $region23: #{unet_innermost_forward.4} parent=0 // pred_check_branch
    %4607 = sbr.rel (0) target = $region25
  $region24: #{unet_innermost_forward.4} parent=0 // pred_region
    _
  $region25: #{unet_innermost_forward.4} parent=0 // pred_fallthru
    _
  // Predicated region
  $region26: #{unet_innermost_forward.4} parent=0 // pred_check
    _
  $region27: #{unet_innermost_forward.4} parent=0 // pred_check_branch
    %4609 = sbr.rel (0) target = $region29
  $region28: #{unet_innermost_forward.4} parent=0 // pred_region
    _
  $region29: #{unet_innermost_forward.4} parent=0 // pred_fallthru
    _
  // Predicated region
  $region30: #{unet_innermost_forward.4} parent=0 // pred_check
    _
  $region31: #{unet_innermost_forward.4} parent=0 // pred_check_branch
    %4611 = sbr.rel (0) target = $region33
  $region32: #{unet_innermost_forward.4} parent=0 // pred_region
    _
  $region33: #{unet_innermost_forward.4} parent=0 // pred_fallthru
    _
  // Predicated region
  $region34: #{unet_innermost_forward.4} parent=0 // pred_check
    _
  $region35: #{unet_innermost_forward.4} parent=0 // pred_check_branch
    %4613 = sbr.rel (0) target = $region37
  $region36: #{unet_innermost_forward.4} parent=0 // pred_region
    _
  $region37: #{unet_innermost_forward.4} parent=0 // pred_fallthru
    _

</llo_original>
